<compile_context>
chip_gen: v5e
topology: v5e:2x2
jax: 0.10.0
libtpu: 0.0.40
codegen_flags: <defaults>
</compile_context>

<pallas_src>
import functools

import jax
import jax.numpy as jnp
from jax.experimental import pallas as pl
from jax.experimental.pallas import tpu as pltpu


def _round_up(x, m):
    return ((x + m - 1) // m) * m


# ----------------------------------------------------------------------------
# Fused 3x3 conv kernel (im2col done in-kernel via 9 shifted dots):
#   acc = sum_k W_k @ strip[:, off_k : off_k+TM]   (+ W2 @ X2)   f32 accumulate
#   y   = act(acc + bias)                          (BN folded into W / W2)
#   out = y (+ post)
# Layout is channel-first with pixels flattened over (H, W+2) so every 3x3
# tap is a pure lane shift; loads and stores are 128-lane dense.
# ----------------------------------------------------------------------------
def _fused_conv3x3_kernel(*refs, offsets, act, has_x2, has_post):
    i = 0
    xc_ref = refs[i]; i += 1       # (Cin, TM)      bf16  current pixel tile
    xh_ref = refs[i]; i += 1       # (Cin, Bh)      bf16  halo (start of next tile)
    w_ref = refs[i]; i += 1        # (9, Cout, Cin) bf16  (BN scale folded)
    b_ref = refs[i]; i += 1        # (Cout, 1)      f32   folded BN bias
    if has_x2:
        x2_ref = refs[i]; i += 1   # (C2, TM)       bf16  fused 1x1 conv input
        w2_ref = refs[i]; i += 1   # (Cout, C2)     bf16
    if has_post:
        p_ref = refs[i]; i += 1    # (Cout, TM)     bf16  residual
    o_ref = refs[i]                # (Cout, TM)

    tm = o_ref.shape[-1]
    strip = jnp.concatenate([xc_ref[...], xh_ref[...]], axis=-1)  # (Cin, TM+Bh)

    acc = jnp.zeros(o_ref.shape, jnp.float32)
    for k, off in enumerate(offsets):          # 9 taps of the 3x3 conv
        acc = acc + jnp.dot(w_ref[k], strip[:, off:off + tm],
                            preferred_element_type=jnp.float32)
    if has_x2:
        acc = acc + jnp.dot(w2_ref[...], x2_ref[...],
                            preferred_element_type=jnp.float32)
    y = acc + b_ref[...]
    if act == "relu":
        y = jnp.maximum(y, 0.0)
    elif act == "sigmoid":
        y = jax.nn.sigmoid(y)
    if has_post:
        y = y + p_ref[...].astype(jnp.float32)
    o_ref[...] = y.astype(o_ref.dtype)


def conv3x3_bn_act(x, w, bias, *, x2=None, w2=None, post=None, act="none",
                   out_dtype=jnp.bfloat16, tm_max=8192):
    """Fused 3x3 conv (stride 1, reflect pad 1) + folded BN + act (+1x1, +res).

    x    : (N, Cin, H, W)
    w    : (Cout, 3, 3, Cin)   BN scale pre-folded
    bias : (Cout,)             folded BN bias
    x2/w2: optional fused 1x1 conv added before bias/act (x2:(N,C2,H,W), w2:(Cout,C2))
    post : (N, Cout, H, W)     residual added after the activation
    Returns (N, Cout, H, W) in out_dtype.
    """
    N, C, H, W = x.shape
    Cout = w.shape[0]
    Wp = W + 2                       # width incl. reflect padding
    Mo = H * Wp                      # output pixels in padded-width layout
    Mi = (H + 2) * Wp                # padded-input pixels

    # Halo block: smallest 128-multiple (power-of-two multiple, so it divides
    # TM) covering the 2*Wp+2 extra columns a tile's last output row needs.
    Bh = 128 * pl.next_power_of_2(pl.cdiv(2 * Wp + 2, 128))
    # Large, 128-aligned pixel tile (2048-8192) to amortize per-step overhead.
    TM = min(max(Bh, (tm_max // Bh) * Bh), _round_up(Mo, Bh))
    # v7x: keep >= 2 parallel grid blocks so both TensorCores get work.
    while N * pl.cdiv(Mo, TM) < 2 and TM > Bh:
        TM -= Bh
    nt = pl.cdiv(Mo, TM)
    Lp = nt * TM + Bh                # flat input length incl. last tile's halo

    # Single reflect-pad + flatten of the raw input (bf16 MXU operand).
    xp = jnp.pad(x.astype(jnp.bfloat16), ((0, 0), (0, 0), (1, 1), (1, 1)),
                 mode="reflect")
    xf = jnp.pad(xp.reshape(N, C, Mi), ((0, 0), (0, 0), (0, Lp - Mi)))

    w9 = jnp.transpose(w.reshape(Cout, 9, C), (1, 0, 2)).astype(jnp.bfloat16)
    b2 = bias.reshape(Cout, 1).astype(jnp.float32)
    offsets = tuple(dy * Wp + dx for dy in range(3) for dx in range(3))
    rblk = TM // Bh

    args = [xf, xf, w9, b2]
    in_specs = [
        pl.BlockSpec((None, C, TM), lambda n, t: (n, 0, t)),
        # Halo = first Bh columns of the *next* tile (same array, finer blocks).
        pl.BlockSpec((None, C, Bh), lambda n, t: (n, 0, (t + 1) * rblk)),
        pl.BlockSpec((9, Cout, C), lambda n, t: (0, 0, 0)),
        pl.BlockSpec((Cout, 1), lambda n, t: (0, 0)),
    ]
    out_bytes = jnp.dtype(out_dtype).itemsize
    flops = 2 * N * nt * TM * 9 * C * Cout
    bytes_accessed = (N * nt * (TM + Bh) * C * 2 + w9.size * 2 + b2.size * 4
                      + N * nt * TM * Cout * out_bytes)

    has_x2 = x2 is not None
    if has_x2:
        C2 = x2.shape[1]
        x2f = jnp.pad(x2.astype(jnp.bfloat16), ((0, 0), (0, 0), (0, 0), (0, 2)))
        x2f = jnp.pad(x2f.reshape(N, C2, Mo), ((0, 0), (0, 0), (0, nt * TM - Mo)))
        args += [x2f, w2.astype(jnp.bfloat16)]
        in_specs += [pl.BlockSpec((None, C2, TM), lambda n, t: (n, 0, t)),
                     pl.BlockSpec((Cout, C2), lambda n, t: (0, 0))]
        flops += 2 * N * nt * TM * C2 * Cout
        bytes_accessed += x2f.size * 2 + w2.size * 2

    has_post = post is not None
    if has_post:
        pf = jnp.pad(post.astype(jnp.bfloat16), ((0, 0), (0, 0), (0, 0), (0, 2)))
        pf = jnp.pad(pf.reshape(N, Cout, Mo), ((0, 0), (0, 0), (0, nt * TM - Mo)))
        args.append(pf)
        in_specs.append(pl.BlockSpec((None, Cout, TM), lambda n, t: (n, 0, t)))
        bytes_accessed += pf.size * 2

    kern = functools.partial(_fused_conv3x3_kernel, offsets=offsets, act=act,
                             has_x2=has_x2, has_post=has_post)
    out = pl.pallas_call(
        kern,
        out_shape=jax.ShapeDtypeStruct((N, Cout, nt * TM), out_dtype),
        grid=(N, nt),
        in_specs=in_specs,
        out_specs=pl.BlockSpec((None, Cout, TM), lambda n, t: (n, 0, t)),
        compiler_params=pltpu.CompilerParams(
            dimension_semantics=("parallel", "parallel")),
        cost_estimate=pl.CostEstimate(
            flops=int(flops),
            transcendentals=int(N * nt * TM * Cout) if act == "sigmoid" else 0,
            bytes_accessed=int(bytes_accessed)),
    )(*args)
    # Drop the padded-width junk columns and the tile-padding tail.
    return out[:, :, :Mo].reshape(N, Cout, H, Wp)[:, :, :, :W]


# ----------------------------------------------------------------------------
# 1x1 conv (+ folded BN + act) on a channel-first flat pixel stream.
# ----------------------------------------------------------------------------
def _conv1x1_kernel(x_ref, w_ref, b_ref, o_ref, *, act):
    y = jnp.dot(w_ref[...], x_ref[...], preferred_element_type=jnp.float32)
    y = y + b_ref[...]
    if act == "relu":
        y = jnp.maximum(y, 0.0)
    elif act == "sigmoid":
        y = jax.nn.sigmoid(y)
    o_ref[...] = y.astype(o_ref.dtype)


def conv1x1_bn_act(x, w, bias, *, act="none", out_dtype=jnp.bfloat16, tm_max=8192):
    """x: (N, Cin, M), w: (Cout, Cin), bias: (Cout,) -> (N, Cout, M)."""
    N, Cin, M = x.shape
    Cout = w.shape[0]
    TM = min(_round_up(tm_max, 128), _round_up(M, 128))
    while N * pl.cdiv(M, TM) < 2 and TM > 128:
        TM -= 128
    nt = pl.cdiv(M, TM)
    Mp = nt * TM
    xf = x.astype(jnp.bfloat16)
    if Mp != M:
        xf = jnp.pad(xf, ((0, 0), (0, 0), (0, Mp - M)))
    out = pl.pallas_call(
        functools.partial(_conv1x1_kernel, act=act),
        out_shape=jax.ShapeDtypeStruct((N, Cout, Mp), out_dtype),
        grid=(N, nt),
        in_specs=[pl.BlockSpec((None, Cin, TM), lambda n, t: (n, 0, t)),
                  pl.BlockSpec((Cout, Cin), lambda n, t: (0, 0)),
                  pl.BlockSpec((Cout, 1), lambda n, t: (0, 0))],
        out_specs=pl.BlockSpec((None, Cout, TM), lambda n, t: (n, 0, t)),
        compiler_params=pltpu.CompilerParams(
            dimension_semantics=("parallel", "parallel")),
        cost_estimate=pl.CostEstimate(
            flops=int(2 * N * Mp * Cin * Cout),
            transcendentals=int(N * Mp * Cout) if act == "sigmoid" else 0,
            bytes_accessed=int(xf.size * 2 + w.size * 2 + Cout * 4
                               + N * Cout * Mp * jnp.dtype(out_dtype).itemsize)),
    )(xf, w.astype(jnp.bfloat16), bias.reshape(Cout, 1).astype(jnp.float32))
    return out if Mp == M else out[:, :, :M]


# ----------------------------------------------------------------------------
# Parameters (eval-mode, BatchNorm scale folded into the conv weights)
# ----------------------------------------------------------------------------
def init_params(key, ngf=8):
    cg = int(ngf * 0.75)      # global channels
    cl = ngf - cg             # local channels
    half = cg // 2
    ks = jax.random.split(key, 16)

    def conv3_w(k, cout, cin):
        w = jax.random.normal(k, (cout, 3, 3, cin), jnp.float32)
        return w / jnp.sqrt(9.0 * cin)

    def conv1_w(k, cout, cin):
        return jax.random.normal(k, (cout, cin), jnp.float32) / jnp.sqrt(float(cin))

    def bn_fold(k, c, eps=1e-5):
        k1, k2, k3, k4 = jax.random.split(k, 4)
        gamma = 1.0 + 0.1 * jax.random.normal(k1, (c,), jnp.float32)
        beta = 0.1 * jax.random.normal(k2, (c,), jnp.float32)
        mean = 0.1 * jax.random.normal(k3, (c,), jnp.float32)
        var = 1.0 + 0.1 * jnp.abs(jax.random.normal(k4, (c,), jnp.float32))
        scale = gamma / jnp.sqrt(var + eps)
        return scale, beta - mean * scale

    p = {}
    # self.mask = FFC_BN_ACT(ngf, 1, gin=0.75, gout=0): convl2l+convg2l fused.
    s, b = bn_fold(ks[1], 1)
    p["mask_w"] = conv3_w(ks[0], 1, ngf) * s[:, None, None, None]
    p["mask_bias"] = b
    # self.minus = FFC_BN_ACT(ngf+1, ngf, gin=0, gout=0.75): l2l(->cl) | l2g(->cg).
    sl, bl = bn_fold(ks[3], cl)
    sg, bg = bn_fold(ks[4], cg)
    s = jnp.concatenate([sl, sg])
    p["minus_w"] = conv3_w(ks[2], ngf, ngf + 1) * s[:, None, None, None]
    p["minus_bias"] = jnp.concatenate([bl, bg])
    # self.add = FFC_BN_ACT(ngf, ngf, gin=0.75, gout=0.75)
    s, b = bn_fold(ks[6], cl)                        # local branch (l2l | g2l)
    p["add_l_w"] = conv3_w(ks[5], cl, ngf) * s[:, None, None, None]
    p["add_l_bias"] = b
    sg2, bg2 = bn_fold(ks[8], cg)                    # global branch BN
    p["add_g_w"] = conv3_w(ks[7], cg, cl) * sg2[:, None, None, None]  # convl2g
    p["add_g_bias"] = bg2
    # add.convg2g = SpectralTransform(cg, cg, stride=1, enable_lfu=False)
    s, b = bn_fold(ks[10], half)
    p["st1_w"] = conv1_w(ks[9], half, cg) * s[:, None]      # conv1 1x1 + BN
    p["st1_bias"] = b
    s, b = bn_fold(ks[12], 2 * half)
    p["fu_w"] = conv1_w(ks[11], 2 * half, 2 * half) * s[:, None]  # FourierUnit
    p["fu_bias"] = b
    # conv2 (1x1, no BN/act) — the outer add_g BN scale folds into it.
    p["st2_w"] = conv1_w(ks[13], cg, half) * sg2[:, None]
    return p, cl, cg, half


# ----------------------------------------------------------------------------
# SpectralTransform (enable_lfu=False) up to (excluding) conv2; conv2 is fused
# into the add_g Pallas call as its second contraction.
# ----------------------------------------------------------------------------
def spectral_pre_conv2(d_g, p, half):
    N, C, H, W = d_g.shape
    M = H * W
    x1 = conv1x1_bn_act(d_g.reshape(N, C, M), p["st1_w"], p["st1_bias"],
                        act="relu", out_dtype=jnp.bfloat16).reshape(N, half, H, W)
    # TODO(synk): rfft2/irfft2 have no Pallas TPU equivalent; done with jnp.fft.
    f = jnp.fft.rfft2(x1.astype(jnp.float32), axes=(2, 3), norm="ortho")
    Wf = f.shape[3]
    stacked = jnp.stack([jnp.real(f), jnp.imag(f)], axis=2)   # (N, half, 2, H, Wf)
    stacked = stacked.reshape(N, 2 * half, H * Wf)
    y = conv1x1_bn_act(stacked, p["fu_w"], p["fu_bias"], act="relu",
                       out_dtype=jnp.float32).reshape(N, half, 2, H, Wf)
    comp = jax.lax.complex(y[:, :, 0], y[:, :, 1])
    fu_out = jnp.fft.irfft2(comp, s=(H, W), axes=(2, 3), norm="ortho")
    return x1.astype(jnp.float32) + fu_out


# ----------------------------------------------------------------------------
# AttFFC.forward (eval mode).  x_l: (N, cl, H, W), x_g: (N, cg, H, W), NCHW.
# ----------------------------------------------------------------------------
def att_ffc_forward(x_l, x_g, p):
    N, cl, H, W = x_l.shape
    cg = x_g.shape[1]
    half = cg // 2

    # mask, _ = self.mask((x_l, x_g)) : sigmoid(BN(convl2l(x_l) + convg2l(x_g)))
    xc = jnp.concatenate([x_l, x_g], axis=1)
    mask = conv3x3_bn_act(xc, p["mask_w"], p["mask_bias"], act="sigmoid",
                          out_dtype=jnp.bfloat16)

    # minus_l, minus_g = self.minus(cat([x_l, x_g, mask], 1))
    xm = jnp.concatenate([xc.astype(jnp.bfloat16), mask], axis=1)
    minus = conv3x3_bn_act(xm, p["minus_w"], p["minus_bias"], act="relu",
                           out_dtype=jnp.bfloat16)
    d_l = x_l - minus[:, :cl].astype(jnp.float32)
    d_g = x_g - minus[:, cl:].astype(jnp.float32)

    # add_l, add_g = self.add((d_l, d_g)); output = (d_l + add_l, d_g + add_g)
    dc = jnp.concatenate([d_l, d_g], axis=1)
    out_l = conv3x3_bn_act(dc, p["add_l_w"], p["add_l_bias"],
                           post=d_l, act="relu", out_dtype=jnp.float32)

    z = spectral_pre_conv2(d_g, p, half)        # convg2g body (pre conv2)
    out_g = conv3x3_bn_act(d_l, p["add_g_w"], p["add_g_bias"],   # convl2g(d_l)
                           x2=z, w2=p["st2_w"],                  # fused conv2
                           post=d_g, act="relu", out_dtype=jnp.float32)
    return out_l, out_g


if __name__ == "__main__":
    ngf = 8
    N, H, W = 2, 16, 16
    key = jax.random.PRNGKey(0)
    kx, kg, kp = jax.random.split(key, 3)
    params, cl, cg, half = init_params(kp, ngf)

    # PyTorch-style NCHW inputs: x = (x_l, x_g)
    x_l = jax.random.normal(kx, (N, cl, H, W), jnp.float32)
    x_g = jax.random.normal(kg, (N, cg, H, W), jnp.float32)

    out_l, out_g = jax.jit(att_ffc_forward)(x_l, x_g, params)
    jax.block_until_ready((out_l, out_g))

    assert out_l.shape == (N, cl, H, W)
    assert out_g.shape == (N, cg, H, W)
    assert bool(jnp.all(jnp.isfinite(out_l))) and bool(jnp.all(jnp.isfinite(out_g)))
    print("KERNEL_OK")
</pallas_src>

<mosaic_0001>
module attributes {stable_mosaic.version = 11 : i64} {
  func.func @_fused_conv3x3_kernel(%arg0: i32, %arg1: i32, %arg2: memref<1x8x384xbf16, #tpu.memory_space<vmem>>, %arg3: memref<1x8x128xbf16, #tpu.memory_space<vmem>>, %arg4: memref<9x1x8xbf16, #tpu.memory_space<vmem>>, %arg5: memref<1x1xf32, #tpu.memory_space<vmem>>, %arg6: memref<1x1x384xbf16, #tpu.memory_space<vmem>>) attributes {dimension_semantics = [#tpu.dimension_semantics<parallel>, #tpu.dimension_semantics<parallel>], iteration_bounds = array<i64: 2, 1>, scalar_prefetch = 0 : i64, scratch_operands = 0 : i64, tpu.core_type = #tpu.core_type<tc>, window_params = [{transform_indices = @transform_0, window_bounds = array<i64: 1, 8, 384>}, {transform_indices = @transform_1, window_bounds = array<i64: 1, 8, 128>}, {pipeline_mode = #tpu.pipeline_mode<synchronous>, transform_indices = @transform_2, window_bounds = array<i64: 9, 1, 8>}, {pipeline_mode = #tpu.pipeline_mode<synchronous>, transform_indices = @transform_3, window_bounds = array<i64: 1, 1>}, {transform_indices = @transform_4, window_bounds = array<i64: 1, 1, 384>}]} {
    %c0 = arith.constant 0 : index
    %c0_0 = arith.constant 0 : index
    %c0_1 = arith.constant 0 : index
    %0 = vector.load %arg2[%c0, %c0_0, %c0_1] : memref<1x8x384xbf16, #tpu.memory_space<vmem>>, vector<1x8x384xbf16>
    %1 = vector.shape_cast %0 : vector<1x8x384xbf16> to vector<8x384xbf16>
    %c0_2 = arith.constant 0 : index
    %c0_3 = arith.constant 0 : index
    %c0_4 = arith.constant 0 : index
    %2 = vector.load %arg3[%c0_2, %c0_3, %c0_4] : memref<1x8x128xbf16, #tpu.memory_space<vmem>>, vector<1x8x128xbf16>
    %3 = vector.shape_cast %2 : vector<1x8x128xbf16> to vector<8x128xbf16>
    %4 = tpu.concatenate %1, %3 in 1 : vector<8x384xbf16>, vector<8x128xbf16> -> vector<8x512xbf16>
    %cst = arith.constant 0.000000e+00 : f32
    %5 = vector.broadcast %cst : f32 to vector<1x384xf32>
    %c0_5 = arith.constant 0 : index
    %c0_6 = arith.constant 0 : index
    %c0_7 = arith.constant 0 : index
    %6 = vector.load %arg4[%c0_5, %c0_6, %c0_7] : memref<9x1x8xbf16, #tpu.memory_space<vmem>>, vector<1x1x8xbf16>
    %7 = vector.shape_cast %6 : vector<1x1x8xbf16> to vector<1x8xbf16>
    %8 = vector.extract_strided_slice %4 {offsets = [0, 0], sizes = [8, 384], strides = [1, 1]} : vector<8x512xbf16> to vector<8x384xbf16>
    %cst_8 = arith.constant dense<0.000000e+00> : vector<1x384xf32>
    %9 = tpu.matmul %7, %8, %cst_8 {dimension_numbers = #tpu.dot_dimension_numbers<[1], [0], [0], [1], [0, 0, 1, 1], [], []>} : vector<1x8xbf16>, vector<8x384xbf16>, vector<1x384xf32> -> vector<1x384xf32>
    %10 = arith.addf %5, %9 : vector<1x384xf32>
    %c1 = arith.constant 1 : index
    %c0_9 = arith.constant 0 : index
    %c0_10 = arith.constant 0 : index
    %11 = vector.load %arg4[%c1, %c0_9, %c0_10] : memref<9x1x8xbf16, #tpu.memory_space<vmem>>, vector<1x1x8xbf16>
    %12 = vector.shape_cast %11 : vector<1x1x8xbf16> to vector<1x8xbf16>
    %13 = vector.extract_strided_slice %4 {offsets = [0, 1], sizes = [8, 384], strides = [1, 1]} : vector<8x512xbf16> to vector<8x384xbf16>
    %cst_11 = arith.constant dense<0.000000e+00> : vector<1x384xf32>
    %14 = tpu.matmul %12, %13, %cst_11 {dimension_numbers = #tpu.dot_dimension_numbers<[1], [0], [0], [1], [0, 0, 1, 1], [], []>} : vector<1x8xbf16>, vector<8x384xbf16>, vector<1x384xf32> -> vector<1x384xf32>
    %15 = arith.addf %10, %14 : vector<1x384xf32>
    %c2 = arith.constant 2 : index
    %c0_12 = arith.constant 0 : index
    %c0_13 = arith.constant 0 : index
    %16 = vector.load %arg4[%c2, %c0_12, %c0_13] : memref<9x1x8xbf16, #tpu.memory_space<vmem>>, vector<1x1x8xbf16>
    %17 = vector.shape_cast %16 : vector<1x1x8xbf16> to vector<1x8xbf16>
    %18 = vector.extract_strided_slice %4 {offsets = [0, 2], sizes = [8, 384], strides = [1, 1]} : vector<8x512xbf16> to vector<8x384xbf16>
    %cst_14 = arith.constant dense<0.000000e+00> : vector<1x384xf32>
    %19 = tpu.matmul %17, %18, %cst_14 {dimension_numbers = #tpu.dot_dimension_numbers<[1], [0], [0], [1], [0, 0, 1, 1], [], []>} : vector<1x8xbf16>, vector<8x384xbf16>, vector<1x384xf32> -> vector<1x384xf32>
    %20 = arith.addf %15, %19 : vector<1x384xf32>
    %c3 = arith.constant 3 : index
    %c0_15 = arith.constant 0 : index
    %c0_16 = arith.constant 0 : index
    %21 = vector.load %arg4[%c3, %c0_15, %c0_16] : memref<9x1x8xbf16, #tpu.memory_space<vmem>>, vector<1x1x8xbf16>
    %22 = vector.shape_cast %21 : vector<1x1x8xbf16> to vector<1x8xbf16>
    %23 = vector.extract_strided_slice %4 {offsets = [0, 18], sizes = [8, 384], strides = [1, 1]} : vector<8x512xbf16> to vector<8x384xbf16>
    %cst_17 = arith.constant dense<0.000000e+00> : vector<1x384xf32>
    %24 = tpu.matmul %22, %23, %cst_17 {dimension_numbers = #tpu.dot_dimension_numbers<[1], [0], [0], [1], [0, 0, 1, 1], [], []>} : vector<1x8xbf16>, vector<8x384xbf16>, vector<1x384xf32> -> vector<1x384xf32>
    %25 = arith.addf %20, %24 : vector<1x384xf32>
    %c4 = arith.constant 4 : index
    %c0_18 = arith.constant 0 : index
    %c0_19 = arith.constant 0 : index
    %26 = vector.load %arg4[%c4, %c0_18, %c0_19] : memref<9x1x8xbf16, #tpu.memory_space<vmem>>, vector<1x1x8xbf16>
    %27 = vector.shape_cast %26 : vector<1x1x8xbf16> to vector<1x8xbf16>
    %28 = vector.extract_strided_slice %4 {offsets = [0, 19], sizes = [8, 384], strides = [1, 1]} : vector<8x512xbf16> to vector<8x384xbf16>
    %cst_20 = arith.constant dense<0.000000e+00> : vector<1x384xf32>
    %29 = tpu.matmul %27, %28, %cst_20 {dimension_numbers = #tpu.dot_dimension_numbers<[1], [0], [0], [1], [0, 0, 1, 1], [], []>} : vector<1x8xbf16>, vector<8x384xbf16>, vector<1x384xf32> -> vector<1x384xf32>
    %30 = arith.addf %25, %29 : vector<1x384xf32>
    %c5 = arith.constant 5 : index
    %c0_21 = arith.constant 0 : index
    %c0_22 = arith.constant 0 : index
    %31 = vector.load %arg4[%c5, %c0_21, %c0_22] : memref<9x1x8xbf16, #tpu.memory_space<vmem>>, vector<1x1x8xbf16>
    %32 = vector.shape_cast %31 : vector<1x1x8xbf16> to vector<1x8xbf16>
    %33 = vector.extract_strided_slice %4 {offsets = [0, 20], sizes = [8, 384], strides = [1, 1]} : vector<8x512xbf16> to vector<8x384xbf16>
    %cst_23 = arith.constant dense<0.000000e+00> : vector<1x384xf32>
    %34 = tpu.matmul %32, %33, %cst_23 {dimension_numbers = #tpu.dot_dimension_numbers<[1], [0], [0], [1], [0, 0, 1, 1], [], []>} : vector<1x8xbf16>, vector<8x384xbf16>, vector<1x384xf32> -> vector<1x384xf32>
    %35 = arith.addf %30, %34 : vector<1x384xf32>
    %c6 = arith.constant 6 : index
    %c0_24 = arith.constant 0 : index
    %c0_25 = arith.constant 0 : index
    %36 = vector.load %arg4[%c6, %c0_24, %c0_25] : memref<9x1x8xbf16, #tpu.memory_space<vmem>>, vector<1x1x8xbf16>
    %37 = vector.shape_cast %36 : vector<1x1x8xbf16> to vector<1x8xbf16>
    %38 = vector.extract_strided_slice %4 {offsets = [0, 36], sizes = [8, 384], strides = [1, 1]} : vector<8x512xbf16> to vector<8x384xbf16>
    %cst_26 = arith.constant dense<0.000000e+00> : vector<1x384xf32>
    %39 = tpu.matmul %37, %38, %cst_26 {dimension_numbers = #tpu.dot_dimension_numbers<[1], [0], [0], [1], [0, 0, 1, 1], [], []>} : vector<1x8xbf16>, vector<8x384xbf16>, vector<1x384xf32> -> vector<1x384xf32>
    %40 = arith.addf %35, %39 : vector<1x384xf32>
    %c7 = arith.constant 7 : index
    %c0_27 = arith.constant 0 : index
    %c0_28 = arith.constant 0 : index
    %41 = vector.load %arg4[%c7, %c0_27, %c0_28] : memref<9x1x8xbf16, #tpu.memory_space<vmem>>, vector<1x1x8xbf16>
    %42 = vector.shape_cast %41 : vector<1x1x8xbf16> to vector<1x8xbf16>
    %43 = vector.extract_strided_slice %4 {offsets = [0, 37], sizes = [8, 384], strides = [1, 1]} : vector<8x512xbf16> to vector<8x384xbf16>
    %cst_29 = arith.constant dense<0.000000e+00> : vector<1x384xf32>
    %44 = tpu.matmul %42, %43, %cst_29 {dimension_numbers = #tpu.dot_dimension_numbers<[1], [0], [0], [1], [0, 0, 1, 1], [], []>} : vector<1x8xbf16>, vector<8x384xbf16>, vector<1x384xf32> -> vector<1x384xf32>
    %45 = arith.addf %40, %44 : vector<1x384xf32>
    %c8 = arith.constant 8 : index
    %c0_30 = arith.constant 0 : index
    %c0_31 = arith.constant 0 : index
    %46 = vector.load %arg4[%c8, %c0_30, %c0_31] : memref<9x1x8xbf16, #tpu.memory_space<vmem>>, vector<1x1x8xbf16>
    %47 = vector.shape_cast %46 : vector<1x1x8xbf16> to vector<1x8xbf16>
    %48 = vector.extract_strided_slice %4 {offsets = [0, 38], sizes = [8, 384], strides = [1, 1]} : vector<8x512xbf16> to vector<8x384xbf16>
    %cst_32 = arith.constant dense<0.000000e+00> : vector<1x384xf32>
    %49 = tpu.matmul %47, %48, %cst_32 {dimension_numbers = #tpu.dot_dimension_numbers<[1], [0], [0], [1], [0, 0, 1, 1], [], []>} : vector<1x8xbf16>, vector<8x384xbf16>, vector<1x384xf32> -> vector<1x384xf32>
    %50 = arith.addf %45, %49 : vector<1x384xf32>
    %c0_33 = arith.constant 0 : index
    %c0_34 = arith.constant 0 : index
    %51 = vector.load %arg5[%c0_33, %c0_34] : memref<1x1xf32, #tpu.memory_space<vmem>>, vector<1x1xf32>
    %52 = vector.broadcast %51 : vector<1x1xf32> to vector<1x384xf32>
    %53 = arith.addf %50, %52 : vector<1x384xf32>
    %54 = arith.negf %53 : vector<1x384xf32>
    %55 = math.exp %54 : vector<1x384xf32>
    %cst_35 = arith.constant 1.000000e+00 : f32
    %56 = vector.broadcast %cst_35 : f32 to vector<1x384xf32>
    %57 = arith.addf %56, %55 : vector<1x384xf32>
    %58 = arith.divf %56, %57 : vector<1x384xf32>
    %59 = arith.truncf %58 : vector<1x384xf32> to vector<1x384xbf16>
    %c0_36 = arith.constant 0 : index
    %c0_37 = arith.constant 0 : index
    %c0_38 = arith.constant 0 : index
    %60 = vector.load %arg6[%c0_36, %c0_37, %c0_38] : memref<1x1x384xbf16, #tpu.memory_space<vmem>>, vector<1x1x384xbf16>
    %61 = vector.shape_cast %60 : vector<1x1x384xbf16> to vector<1x384xbf16>
    %62 = vector.shape_cast %59 : vector<1x384xbf16> to vector<1x1x384xbf16>
    tpu.vector_store %arg6[%c0_36, %c0_37, %c0_38], %62 {strides = array<i32>} : memref<1x1x384xbf16, #tpu.memory_space<vmem>>, vector<1x1x384xbf16>,
    return
  }
  func.func @transform_0(%arg0: i32, %arg1: i32) -> (i32, i32, i32) {
    %c0_i32 = arith.constant 0 : i32
    %c0_i32_0 = arith.constant 0 : i32
    return %arg0, %c0_i32, %arg1 : i32, i32, i32
  }
  func.func @transform_1(%arg0: i32, %arg1: i32) -> (i32, i32, i32) {
    %c1_i32 = arith.constant 1 : i32
    %0 = arith.addi %arg1, %c1_i32 : i32
    %c3_i32 = arith.constant 3 : i32
    %1 = arith.muli %0, %c3_i32 : i32
    %c0_i32 = arith.constant 0 : i32
    %c0_i32_0 = arith.constant 0 : i32
    return %arg0, %c0_i32, %1 : i32, i32, i32
  }
  func.func @transform_2(%arg0: i32, %arg1: i32) -> (i32, i32, i32) {
    %c0_i32 = arith.constant 0 : i32
    %c0_i32_0 = arith.constant 0 : i32
    %c0_i32_1 = arith.constant 0 : i32
    %c0_i32_2 = arith.constant 0 : i32
    return %c0_i32, %c0_i32_0, %c0_i32_1 : i32, i32, i32
  }
  func.func @transform_3(%arg0: i32, %arg1: i32) -> (i32, i32) {
    %c0_i32 = arith.constant 0 : i32
    %c0_i32_0 = arith.constant 0 : i32
    %c0_i32_1 = arith.constant 0 : i32
    return %c0_i32, %c0_i32_0 : i32, i32
  }
  func.func @transform_4(%arg0: i32, %arg1: i32) -> (i32, i32, i32) {
    %c0_i32 = arith.constant 0 : i32
    %c0_i32_0 = arith.constant 0 : i32
    return %arg0, %c0_i32, %arg1 : i32, i32, i32
  }
}

module attributes {stable_mosaic.version = 11 : i64} {
  func.func @_fused_conv3x3_kernel(%arg0: i32, %arg1: i32, %arg2: memref<1x9x384xbf16, #tpu.memory_space<vmem>>, %arg3: memref<1x9x128xbf16, #tpu.memory_space<vmem>>, %arg4: memref<9x8x9xbf16, #tpu.memory_space<vmem>>, %arg5: memref<8x1xf32, #tpu.memory_space<vmem>>, %arg6: memref<1x8x384xbf16, #tpu.memory_space<vmem>>) attributes {dimension_semantics = [#tpu.dimension_semantics<parallel>, #tpu.dimension_semantics<parallel>], iteration_bounds = array<i64: 2, 1>, scalar_prefetch = 0 : i64, scratch_operands = 0 : i64, tpu.core_type = #tpu.core_type<tc>, window_params = [{transform_indices = @transform_0, window_bounds = array<i64: 1, 9, 384>}, {transform_indices = @transform_1, window_bounds = array<i64: 1, 9, 128>}, {pipeline_mode = #tpu.pipeline_mode<synchronous>, transform_indices = @transform_2, window_bounds = array<i64: 9, 8, 9>}, {pipeline_mode = #tpu.pipeline_mode<synchronous>, transform_indices = @transform_3, window_bounds = array<i64: 8, 1>}, {transform_indices = @transform_4, window_bounds = array<i64: 1, 8, 384>}]} {
    %c0 = arith.constant 0 : index
    %c0_0 = arith.constant 0 : index
    %c0_1 = arith.constant 0 : index
    %0 = vector.load %arg2[%c0, %c0_0, %c0_1] : memref<1x9x384xbf16, #tpu.memory_space<vmem>>, vector<1x9x384xbf16>
    %1 = vector.shape_cast %0 : vector<1x9x384xbf16> to vector<9x384xbf16>
    %c0_2 = arith.constant 0 : index
    %c0_3 = arith.constant 0 : index
    %c0_4 = arith.constant 0 : index
    %2 = vector.load %arg3[%c0_2, %c0_3, %c0_4] : memref<1x9x128xbf16, #tpu.memory_space<vmem>>, vector<1x9x128xbf16>
    %3 = vector.shape_cast %2 : vector<1x9x128xbf16> to vector<9x128xbf16>
    %4 = tpu.concatenate %1, %3 in 1 : vector<9x384xbf16>, vector<9x128xbf16> -> vector<9x512xbf16>
    %cst = arith.constant 0.000000e+00 : f32
    %5 = vector.broadcast %cst : f32 to vector<8x384xf32>
    %c0_5 = arith.constant 0 : index
    %c0_6 = arith.constant 0 : index
    %c0_7 = arith.constant 0 : index
    %6 = vector.load %arg4[%c0_5, %c0_6, %c0_7] : memref<9x8x9xbf16, #tpu.memory_space<vmem>>, vector<1x8x9xbf16>
    %7 = vector.shape_cast %6 : vector<1x8x9xbf16> to vector<8x9xbf16>
    %8 = vector.extract_strided_slice %4 {offsets = [0, 0], sizes = [9, 384], strides = [1, 1]} : vector<9x512xbf16> to vector<9x384xbf16>
    %cst_8 = arith.constant dense<0.000000e+00> : vector<8x384xf32>
    %9 = tpu.matmul %7, %8, %cst_8 {dimension_numbers = #tpu.dot_dimension_numbers<[1], [0], [0], [1], [0, 0, 1, 1], [], []>} : vector<8x9xbf16>, vector<9x384xbf16>, vector<8x384xf32> -> vector<8x384xf32>
    %10 = arith.addf %5, %9 : vector<8x384xf32>
    %c1 = arith.constant 1 : index
    %c0_9 = arith.constant 0 : index
    %c0_10 = arith.constant 0 : index
    %11 = vector.load %arg4[%c1, %c0_9, %c0_10] : memref<9x8x9xbf16, #tpu.memory_space<vmem>>, vector<1x8x9xbf16>
    %12 = vector.shape_cast %11 : vector<1x8x9xbf16> to vector<8x9xbf16>
    %13 = vector.extract_strided_slice %4 {offsets = [0, 1], sizes = [9, 384], strides = [1, 1]} : vector<9x512xbf16> to vector<9x384xbf16>
    %cst_11 = arith.constant dense<0.000000e+00> : vector<8x384xf32>
    %14 = tpu.matmul %12, %13, %cst_11 {dimension_numbers = #tpu.dot_dimension_numbers<[1], [0], [0], [1], [0, 0, 1, 1], [], []>} : vector<8x9xbf16>, vector<9x384xbf16>, vector<8x384xf32> -> vector<8x384xf32>
    %15 = arith.addf %10, %14 : vector<8x384xf32>
    %c2 = arith.constant 2 : index
    %c0_12 = arith.constant 0 : index
    %c0_13 = arith.constant 0 : index
    %16 = vector.load %arg4[%c2, %c0_12, %c0_13] : memref<9x8x9xbf16, #tpu.memory_space<vmem>>, vector<1x8x9xbf16>
    %17 = vector.shape_cast %16 : vector<1x8x9xbf16> to vector<8x9xbf16>
    %18 = vector.extract_strided_slice %4 {offsets = [0, 2], sizes = [9, 384], strides = [1, 1]} : vector<9x512xbf16> to vector<9x384xbf16>
    %cst_14 = arith.constant dense<0.000000e+00> : vector<8x384xf32>
    %19 = tpu.matmul %17, %18, %cst_14 {dimension_numbers = #tpu.dot_dimension_numbers<[1], [0], [0], [1], [0, 0, 1, 1], [], []>} : vector<8x9xbf16>, vector<9x384xbf16>, vector<8x384xf32> -> vector<8x384xf32>
    %20 = arith.addf %15, %19 : vector<8x384xf32>
    %c3 = arith.constant 3 : index
    %c0_15 = arith.constant 0 : index
    %c0_16 = arith.constant 0 : index
    %21 = vector.load %arg4[%c3, %c0_15, %c0_16] : memref<9x8x9xbf16, #tpu.memory_space<vmem>>, vector<1x8x9xbf16>
    %22 = vector.shape_cast %21 : vector<1x8x9xbf16> to vector<8x9xbf16>
    %23 = vector.extract_strided_slice %4 {offsets = [0, 18], sizes = [9, 384], strides = [1, 1]} : vector<9x512xbf16> to vector<9x384xbf16>
    %cst_17 = arith.constant dense<0.000000e+00> : vector<8x384xf32>
    %24 = tpu.matmul %22, %23, %cst_17 {dimension_numbers = #tpu.dot_dimension_numbers<[1], [0], [0], [1], [0, 0, 1, 1], [], []>} : vector<8x9xbf16>, vector<9x384xbf16>, vector<8x384xf32> -> vector<8x384xf32>
    %25 = arith.addf %20, %24 : vector<8x384xf32>
    %c4 = arith.constant 4 : index
    %c0_18 = arith.constant 0 : index
    %c0_19 = arith.constant 0 : index
    %26 = vector.load %arg4[%c4, %c0_18, %c0_19] : memref<9x8x9xbf16, #tpu.memory_space<vmem>>, vector<1x8x9xbf16>
    %27 = vector.shape_cast %26 : vector<1x8x9xbf16> to vector<8x9xbf16>
    %28 = vector.extract_strided_slice %4 {offsets = [0, 19], sizes = [9, 384], strides = [1, 1]} : vector<9x512xbf16> to vector<9x384xbf16>
    %cst_20 = arith.constant dense<0.000000e+00> : vector<8x384xf32>
    %29 = tpu.matmul %27, %28, %cst_20 {dimension_numbers = #tpu.dot_dimension_numbers<[1], [0], [0], [1], [0, 0, 1, 1], [], []>} : vector<8x9xbf16>, vector<9x384xbf16>, vector<8x384xf32> -> vector<8x384xf32>
    %30 = arith.addf %25, %29 : vector<8x384xf32>
    %c5 = arith.constant 5 : index
    %c0_21 = arith.constant 0 : index
    %c0_22 = arith.constant 0 : index
    %31 = vector.load %arg4[%c5, %c0_21, %c0_22] : memref<9x8x9xbf16, #tpu.memory_space<vmem>>, vector<1x8x9xbf16>
    %32 = vector.shape_cast %31 : vector<1x8x9xbf16> to vector<8x9xbf16>
    %33 = vector.extract_strided_slice %4 {offsets = [0, 20], sizes = [9, 384], strides = [1, 1]} : vector<9x512xbf16> to vector<9x384xbf16>
    %cst_23 = arith.constant dense<0.000000e+00> : vector<8x384xf32>
    %34 = tpu.matmul %32, %33, %cst_23 {dimension_numbers = #tpu.dot_dimension_numbers<[1], [0], [0], [1], [0, 0, 1, 1], [], []>} : vector<8x9xbf16>, vector<9x384xbf16>, vector<8x384xf32> -> vector<8x384xf32>
    %35 = arith.addf %30, %34 : vector<8x384xf32>
    %c6 = arith.constant 6 : index
    %c0_24 = arith.constant 0 : index
    %c0_25 = arith.constant 0 : index
    %36 = vector.load %arg4[%c6, %c0_24, %c0_25] : memref<9x8x9xbf16, #tpu.memory_space<vmem>>, vector<1x8x9xbf16>
    %37 = vector.shape_cast %36 : vector<1x8x9xbf16> to vector<8x9xbf16>
    %38 = vector.extract_strided_slice %4 {offsets = [0, 36], sizes = [9, 384], strides = [1, 1]} : vector<9x512xbf16> to vector<9x384xbf16>
    %cst_26 = arith.constant dense<0.000000e+00> : vector<8x384xf32>
    %39 = tpu.matmul %37, %38, %cst_26 {dimension_numbers = #tpu.dot_dimension_numbers<[1], [0], [0], [1], [0, 0, 1, 1], [], []>} : vector<8x9xbf16>, vector<9x384xbf16>, vector<8x384xf32> -> vector<8x384xf32>
    %40 = arith.addf %35, %39 : vector<8x384xf32>
    %c7 = arith.constant 7 : index
    %c0_27 = arith.constant 0 : index
    %c0_28 = arith.constant 0 : index
    %41 = vector.load %arg4[%c7, %c0_27, %c0_28] : memref<9x8x9xbf16, #tpu.memory_space<vmem>>, vector<1x8x9xbf16>
    %42 = vector.shape_cast %41 : vector<1x8x9xbf16> to vector<8x9xbf16>
    %43 = vector.extract_strided_slice %4 {offsets = [0, 37], sizes = [9, 384], strides = [1, 1]} : vector<9x512xbf16> to vector<9x384xbf16>
    %cst_29 = arith.constant dense<0.000000e+00> : vector<8x384xf32>
    %44 = tpu.matmul %42, %43, %cst_29 {dimension_numbers = #tpu.dot_dimension_numbers<[1], [0], [0], [1], [0, 0, 1, 1], [], []>} : vector<8x9xbf16>, vector<9x384xbf16>, vector<8x384xf32> -> vector<8x384xf32>
    %45 = arith.addf %40, %44 : vector<8x384xf32>
    %c8 = arith.constant 8 : index
    %c0_30 = arith.constant 0 : index
    %c0_31 = arith.constant 0 : index
    %46 = vector.load %arg4[%c8, %c0_30, %c0_31] : memref<9x8x9xbf16, #tpu.memory_space<vmem>>, vector<1x8x9xbf16>
    %47 = vector.shape_cast %46 : vector<1x8x9xbf16> to vector<8x9xbf16>
    %48 = vector.extract_strided_slice %4 {offsets = [0, 38], sizes = [9, 384], strides = [1, 1]} : vector<9x512xbf16> to vector<9x384xbf16>
    %cst_32 = arith.constant dense<0.000000e+00> : vector<8x384xf32>
    %49 = tpu.matmul %47, %48, %cst_32 {dimension_numbers = #tpu.dot_dimension_numbers<[1], [0], [0], [1], [0, 0, 1, 1], [], []>} : vector<8x9xbf16>, vector<9x384xbf16>, vector<8x384xf32> -> vector<8x384xf32>
    %50 = arith.addf %45, %49 : vector<8x384xf32>
    %c0_33 = arith.constant 0 : index
    %c0_34 = arith.constant 0 : index
    %51 = vector.load %arg5[%c0_33, %c0_34] : memref<8x1xf32, #tpu.memory_space<vmem>>, vector<8x1xf32>
    %52 = vector.broadcast %51 : vector<8x1xf32> to vector<8x384xf32>
    %53 = arith.addf %50, %52 : vector<8x384xf32>
    %cst_35 = arith.constant 0.000000e+00 : f32
    %54 = vector.broadcast %cst_35 : f32 to vector<8x384xf32>
    %55 = arith.maximumf %53, %54 : vector<8x384xf32>
    %56 = arith.truncf %55 : vector<8x384xf32> to vector<8x384xbf16>
    %c0_36 = arith.constant 0 : index
    %c0_37 = arith.constant 0 : index
    %c0_38 = arith.constant 0 : index
    %57 = vector.load %arg6[%c0_36, %c0_37, %c0_38] : memref<1x8x384xbf16, #tpu.memory_space<vmem>>, vector<1x8x384xbf16>
    %58 = vector.shape_cast %57 : vector<1x8x384xbf16> to vector<8x384xbf16>
    %59 = vector.shape_cast %56 : vector<8x384xbf16> to vector<1x8x384xbf16>
    tpu.vector_store %arg6[%c0_36, %c0_37, %c0_38], %59 {strides = array<i32>} : memref<1x8x384xbf16, #tpu.memory_space<vmem>>, vector<1x8x384xbf16>,
    return
  }
  func.func @transform_0(%arg0: i32, %arg1: i32) -> (i32, i32, i32) {
    %c0_i32 = arith.constant 0 : i32
    %c0_i32_0 = arith.constant 0 : i32
    return %arg0, %c0_i32, %arg1 : i32, i32, i32
  }
  func.func @transform_1(%arg0: i32, %arg1: i32) -> (i32, i32, i32) {
    %c1_i32 = arith.constant 1 : i32
    %0 = arith.addi %arg1, %c1_i32 : i32
    %c3_i32 = arith.constant 3 : i32
    %1 = arith.muli %0, %c3_i32 : i32
    %c0_i32 = arith.constant 0 : i32
    %c0_i32_0 = arith.constant 0 : i32
    return %arg0, %c0_i32, %1 : i32, i32, i32
  }
  func.func @transform_2(%arg0: i32, %arg1: i32) -> (i32, i32, i32) {
    %c0_i32 = arith.constant 0 : i32
    %c0_i32_0 = arith.constant 0 : i32
    %c0_i32_1 = arith.constant 0 : i32
    %c0_i32_2 = arith.constant 0 : i32
    return %c0_i32, %c0_i32_0, %c0_i32_1 : i32, i32, i32
  }
  func.func @transform_3(%arg0: i32, %arg1: i32) -> (i32, i32) {
    %c0_i32 = arith.constant 0 : i32
    %c0_i32_0 = arith.constant 0 : i32
    %c0_i32_1 = arith.constant 0 : i32
    return %c0_i32, %c0_i32_0 : i32, i32
  }
  func.func @transform_4(%arg0: i32, %arg1: i32) -> (i32, i32, i32) {
    %c0_i32 = arith.constant 0 : i32
    %c0_i32_0 = arith.constant 0 : i32
    return %arg0, %c0_i32, %arg1 : i32, i32, i32
  }
}

module attributes {stable_mosaic.version = 11 : i64} {
  func.func @_fused_conv3x3_kernel(%arg0: i32, %arg1: i32, %arg2: memref<1x8x384xbf16, #tpu.memory_space<vmem>>, %arg3: memref<1x8x128xbf16, #tpu.memory_space<vmem>>, %arg4: memref<9x2x8xbf16, #tpu.memory_space<vmem>>, %arg5: memref<2x1xf32, #tpu.memory_space<vmem>>, %arg6: memref<1x2x384xbf16, #tpu.memory_space<vmem>>, %arg7: memref<1x2x384xf32, #tpu.memory_space<vmem>>) attributes {dimension_semantics = [#tpu.dimension_semantics<parallel>, #tpu.dimension_semantics<parallel>], iteration_bounds = array<i64: 2, 1>, scalar_prefetch = 0 : i64, scratch_operands = 0 : i64, tpu.core_type = #tpu.core_type<tc>, window_params = [{transform_indices = @transform_0, window_bounds = array<i64: 1, 8, 384>}, {transform_indices = @transform_1, window_bounds = array<i64: 1, 8, 128>}, {pipeline_mode = #tpu.pipeline_mode<synchronous>, transform_indices = @transform_2, window_bounds = array<i64: 9, 2, 8>}, {pipeline_mode = #tpu.pipeline_mode<synchronous>, transform_indices = @transform_3, window_bounds = array<i64: 2, 1>}, {transform_indices = @transform_4, window_bounds = array<i64: 1, 2, 384>}, {transform_indices = @transform_5, window_bounds = array<i64: 1, 2, 384>}]} {
    %c0 = arith.constant 0 : index
    %c0_0 = arith.constant 0 : index
    %c0_1 = arith.constant 0 : index
    %0 = vector.load %arg2[%c0, %c0_0, %c0_1] : memref<1x8x384xbf16, #tpu.memory_space<vmem>>, vector<1x8x384xbf16>
    %1 = vector.shape_cast %0 : vector<1x8x384xbf16> to vector<8x384xbf16>
    %c0_2 = arith.constant 0 : index
    %c0_3 = arith.constant 0 : index
    %c0_4 = arith.constant 0 : index
    %2 = vector.load %arg3[%c0_2, %c0_3, %c0_4] : memref<1x8x128xbf16, #tpu.memory_space<vmem>>, vector<1x8x128xbf16>
    %3 = vector.shape_cast %2 : vector<1x8x128xbf16> to vector<8x128xbf16>
    %4 = tpu.concatenate %1, %3 in 1 : vector<8x384xbf16>, vector<8x128xbf16> -> vector<8x512xbf16>
    %cst = arith.constant 0.000000e+00 : f32
    %5 = vector.broadcast %cst : f32 to vector<2x384xf32>
    %c0_5 = arith.constant 0 : index
    %c0_6 = arith.constant 0 : index
    %c0_7 = arith.constant 0 : index
    %6 = vector.load %arg4[%c0_5, %c0_6, %c0_7] : memref<9x2x8xbf16, #tpu.memory_space<vmem>>, vector<1x2x8xbf16>
    %7 = vector.shape_cast %6 : vector<1x2x8xbf16> to vector<2x8xbf16>
    %8 = vector.extract_strided_slice %4 {offsets = [0, 0], sizes = [8, 384], strides = [1, 1]} : vector<8x512xbf16> to vector<8x384xbf16>
    %cst_8 = arith.constant dense<0.000000e+00> : vector<2x384xf32>
    %9 = tpu.matmul %7, %8, %cst_8 {dimension_numbers = #tpu.dot_dimension_numbers<[1], [0], [0], [1], [0, 0, 1, 1], [], []>} : vector<2x8xbf16>, vector<8x384xbf16>, vector<2x384xf32> -> vector<2x384xf32>
    %10 = arith.addf %5, %9 : vector<2x384xf32>
    %c1 = arith.constant 1 : index
    %c0_9 = arith.constant 0 : index
    %c0_10 = arith.constant 0 : index
    %11 = vector.load %arg4[%c1, %c0_9, %c0_10] : memref<9x2x8xbf16, #tpu.memory_space<vmem>>, vector<1x2x8xbf16>
    %12 = vector.shape_cast %11 : vector<1x2x8xbf16> to vector<2x8xbf16>
    %13 = vector.extract_strided_slice %4 {offsets = [0, 1], sizes = [8, 384], strides = [1, 1]} : vector<8x512xbf16> to vector<8x384xbf16>
    %cst_11 = arith.constant dense<0.000000e+00> : vector<2x384xf32>
    %14 = tpu.matmul %12, %13, %cst_11 {dimension_numbers = #tpu.dot_dimension_numbers<[1], [0], [0], [1], [0, 0, 1, 1], [], []>} : vector<2x8xbf16>, vector<8x384xbf16>, vector<2x384xf32> -> vector<2x384xf32>
    %15 = arith.addf %10, %14 : vector<2x384xf32>
    %c2 = arith.constant 2 : index
    %c0_12 = arith.constant 0 : index
    %c0_13 = arith.constant 0 : index
    %16 = vector.load %arg4[%c2, %c0_12, %c0_13] : memref<9x2x8xbf16, #tpu.memory_space<vmem>>, vector<1x2x8xbf16>
    %17 = vector.shape_cast %16 : vector<1x2x8xbf16> to vector<2x8xbf16>
    %18 = vector.extract_strided_slice %4 {offsets = [0, 2], sizes = [8, 384], strides = [1, 1]} : vector<8x512xbf16> to vector<8x384xbf16>
    %cst_14 = arith.constant dense<0.000000e+00> : vector<2x384xf32>
    %19 = tpu.matmul %17, %18, %cst_14 {dimension_numbers = #tpu.dot_dimension_numbers<[1], [0], [0], [1], [0, 0, 1, 1], [], []>} : vector<2x8xbf16>, vector<8x384xbf16>, vector<2x384xf32> -> vector<2x384xf32>
    %20 = arith.addf %15, %19 : vector<2x384xf32>
    %c3 = arith.constant 3 : index
    %c0_15 = arith.constant 0 : index
    %c0_16 = arith.constant 0 : index
    %21 = vector.load %arg4[%c3, %c0_15, %c0_16] : memref<9x2x8xbf16, #tpu.memory_space<vmem>>, vector<1x2x8xbf16>
    %22 = vector.shape_cast %21 : vector<1x2x8xbf16> to vector<2x8xbf16>
    %23 = vector.extract_strided_slice %4 {offsets = [0, 18], sizes = [8, 384], strides = [1, 1]} : vector<8x512xbf16> to vector<8x384xbf16>
    %cst_17 = arith.constant dense<0.000000e+00> : vector<2x384xf32>
    %24 = tpu.matmul %22, %23, %cst_17 {dimension_numbers = #tpu.dot_dimension_numbers<[1], [0], [0], [1], [0, 0, 1, 1], [], []>} : vector<2x8xbf16>, vector<8x384xbf16>, vector<2x384xf32> -> vector<2x384xf32>
    %25 = arith.addf %20, %24 : vector<2x384xf32>
    %c4 = arith.constant 4 : index
    %c0_18 = arith.constant 0 : index
    %c0_19 = arith.constant 0 : index
    %26 = vector.load %arg4[%c4, %c0_18, %c0_19] : memref<9x2x8xbf16, #tpu.memory_space<vmem>>, vector<1x2x8xbf16>
    %27 = vector.shape_cast %26 : vector<1x2x8xbf16> to vector<2x8xbf16>
    %28 = vector.extract_strided_slice %4 {offsets = [0, 19], sizes = [8, 384], strides = [1, 1]} : vector<8x512xbf16> to vector<8x384xbf16>
    %cst_20 = arith.constant dense<0.000000e+00> : vector<2x384xf32>
    %29 = tpu.matmul %27, %28, %cst_20 {dimension_numbers = #tpu.dot_dimension_numbers<[1], [0], [0], [1], [0, 0, 1, 1], [], []>} : vector<2x8xbf16>, vector<8x384xbf16>, vector<2x384xf32> -> vector<2x384xf32>
    %30 = arith.addf %25, %29 : vector<2x384xf32>
    %c5 = arith.constant 5 : index
    %c0_21 = arith.constant 0 : index
    %c0_22 = arith.constant 0 : index
    %31 = vector.load %arg4[%c5, %c0_21, %c0_22] : memref<9x2x8xbf16, #tpu.memory_space<vmem>>, vector<1x2x8xbf16>
    %32 = vector.shape_cast %31 : vector<1x2x8xbf16> to vector<2x8xbf16>
    %33 = vector.extract_strided_slice %4 {offsets = [0, 20], sizes = [8, 384], strides = [1, 1]} : vector<8x512xbf16> to vector<8x384xbf16>
    %cst_23 = arith.constant dense<0.000000e+00> : vector<2x384xf32>
    %34 = tpu.matmul %32, %33, %cst_23 {dimension_numbers = #tpu.dot_dimension_numbers<[1], [0], [0], [1], [0, 0, 1, 1], [], []>} : vector<2x8xbf16>, vector<8x384xbf16>, vector<2x384xf32> -> vector<2x384xf32>
    %35 = arith.addf %30, %34 : vector<2x384xf32>
    %c6 = arith.constant 6 : index
    %c0_24 = arith.constant 0 : index
    %c0_25 = arith.constant 0 : index
    %36 = vector.load %arg4[%c6, %c0_24, %c0_25] : memref<9x2x8xbf16, #tpu.memory_space<vmem>>, vector<1x2x8xbf16>
    %37 = vector.shape_cast %36 : vector<1x2x8xbf16> to vector<2x8xbf16>
    %38 = vector.extract_strided_slice %4 {offsets = [0, 36], sizes = [8, 384], strides = [1, 1]} : vector<8x512xbf16> to vector<8x384xbf16>
    %cst_26 = arith.constant dense<0.000000e+00> : vector<2x384xf32>
    %39 = tpu.matmul %37, %38, %cst_26 {dimension_numbers = #tpu.dot_dimension_numbers<[1], [0], [0], [1], [0, 0, 1, 1], [], []>} : vector<2x8xbf16>, vector<8x384xbf16>, vector<2x384xf32> -> vector<2x384xf32>
    %40 = arith.addf %35, %39 : vector<2x384xf32>
    %c7 = arith.constant 7 : index
    %c0_27 = arith.constant 0 : index
    %c0_28 = arith.constant 0 : index
    %41 = vector.load %arg4[%c7, %c0_27, %c0_28] : memref<9x2x8xbf16, #tpu.memory_space<vmem>>, vector<1x2x8xbf16>
    %42 = vector.shape_cast %41 : vector<1x2x8xbf16> to vector<2x8xbf16>
    %43 = vector.extract_strided_slice %4 {offsets = [0, 37], sizes = [8, 384], strides = [1, 1]} : vector<8x512xbf16> to vector<8x384xbf16>
    %cst_29 = arith.constant dense<0.000000e+00> : vector<2x384xf32>
    %44 = tpu.matmul %42, %43, %cst_29 {dimension_numbers = #tpu.dot_dimension_numbers<[1], [0], [0], [1], [0, 0, 1, 1], [], []>} : vector<2x8xbf16>, vector<8x384xbf16>, vector<2x384xf32> -> vector<2x384xf32>
    %45 = arith.addf %40, %44 : vector<2x384xf32>
    %c8 = arith.constant 8 : index
    %c0_30 = arith.constant 0 : index
    %c0_31 = arith.constant 0 : index
    %46 = vector.load %arg4[%c8, %c0_30, %c0_31] : memref<9x2x8xbf16, #tpu.memory_space<vmem>>, vector<1x2x8xbf16>
    %47 = vector.shape_cast %46 : vector<1x2x8xbf16> to vector<2x8xbf16>
    %48 = vector.extract_strided_slice %4 {offsets = [0, 38], sizes = [8, 384], strides = [1, 1]} : vector<8x512xbf16> to vector<8x384xbf16>
    %cst_32 = arith.constant dense<0.000000e+00> : vector<2x384xf32>
    %49 = tpu.matmul %47, %48, %cst_32 {dimension_numbers = #tpu.dot_dimension_numbers<[1], [0], [0], [1], [0, 0, 1, 1], [], []>} : vector<2x8xbf16>, vector<8x384xbf16>, vector<2x384xf32> -> vector<2x384xf32>
    %50 = arith.addf %45, %49 : vector<2x384xf32>
    %c0_33 = arith.constant 0 : index
    %c0_34 = arith.constant 0 : index
    %51 = vector.load %arg5[%c0_33, %c0_34] : memref<2x1xf32, #tpu.memory_space<vmem>>, vector<2x1xf32>
    %52 = vector.broadcast %51 : vector<2x1xf32> to vector<2x384xf32>
    %53 = arith.addf %50, %52 : vector<2x384xf32>
    %cst_35 = arith.constant 0.000000e+00 : f32
    %54 = vector.broadcast %cst_35 : f32 to vector<2x384xf32>
    %55 = arith.maximumf %53, %54 : vector<2x384xf32>
    %c0_36 = arith.constant 0 : index
    %c0_37 = arith.constant 0 : index
    %c0_38 = arith.constant 0 : index
    %56 = vector.load %arg6[%c0_36, %c0_37, %c0_38] : memref<1x2x384xbf16, #tpu.memory_space<vmem>>, vector<1x2x384xbf16>
    %57 = vector.shape_cast %56 : vector<1x2x384xbf16> to vector<2x384xbf16>
    %58 = arith.extf %57 : vector<2x384xbf16> to vector<2x384xf32>
    %59 = arith.addf %55, %58 : vector<2x384xf32>
    %c0_39 = arith.constant 0 : index
    %c0_40 = arith.constant 0 : index
    %c0_41 = arith.constant 0 : index
    %60 = vector.load %arg7[%c0_39, %c0_40, %c0_41] : memref<1x2x384xf32, #tpu.memory_space<vmem>>, vector<1x2x384xf32>
    %61 = vector.shape_cast %60 : vector<1x2x384xf32> to vector<2x384xf32>
    %62 = vector.shape_cast %59 : vector<2x384xf32> to vector<1x2x384xf32>
    tpu.vector_store %arg7[%c0_39, %c0_40, %c0_41], %62 {strides = array<i32>} : memref<1x2x384xf32, #tpu.memory_space<vmem>>, vector<1x2x384xf32>,
    return
  }
  func.func @transform_0(%arg0: i32, %arg1: i32) -> (i32, i32, i32) {
    %c0_i32 = arith.constant 0 : i32
    %c0_i32_0 = arith.constant 0 : i32
    return %arg0, %c0_i32, %arg1 : i32, i32, i32
  }
  func.func @transform_1(%arg0: i32, %arg1: i32) -> (i32, i32, i32) {
    %c1_i32 = arith.constant 1 : i32
    %0 = arith.addi %arg1, %c1_i32 : i32
    %c3_i32 = arith.constant 3 : i32
    %1 = arith.muli %0, %c3_i32 : i32
    %c0_i32 = arith.constant 0 : i32
    %c0_i32_0 = arith.constant 0 : i32
    return %arg0, %c0_i32, %1 : i32, i32, i32
  }
  func.func @transform_2(%arg0: i32, %arg1: i32) -> (i32, i32, i32) {
    %c0_i32 = arith.constant 0 : i32
    %c0_i32_0 = arith.constant 0 : i32
    %c0_i32_1 = arith.constant 0 : i32
    %c0_i32_2 = arith.constant 0 : i32
    return %c0_i32, %c0_i32_0, %c0_i32_1 : i32, i32, i32
  }
  func.func @transform_3(%arg0: i32, %arg1: i32) -> (i32, i32) {
    %c0_i32 = arith.constant 0 : i32
    %c0_i32_0 = arith.constant 0 : i32
    %c0_i32_1 = arith.constant 0 : i32
    return %c0_i32, %c0_i32_0 : i32, i32
  }
  func.func @transform_4(%arg0: i32, %arg1: i32) -> (i32, i32, i32) {
    %c0_i32 = arith.constant 0 : i32
    %c0_i32_0 = arith.constant 0 : i32
    return %arg0, %c0_i32, %arg1 : i32, i32, i32
  }
  func.func @transform_5(%arg0: i32, %arg1: i32) -> (i32, i32, i32) {
    %c0_i32 = arith.constant 0 : i32
    %c0_i32_0 = arith.constant 0 : i32
    return %arg0, %c0_i32, %arg1 : i32, i32, i32
  }
}

module attributes {stable_mosaic.version = 11 : i64} {
  func.func @_conv1x1_kernel(%arg0: i32, %arg1: i32, %arg2: memref<1x6x256xbf16, #tpu.memory_space<vmem>>, %arg3: memref<3x6xbf16, #tpu.memory_space<vmem>>, %arg4: memref<3x1xf32, #tpu.memory_space<vmem>>, %arg5: memref<1x3x256xbf16, #tpu.memory_space<vmem>>) attributes {dimension_semantics = [#tpu.dimension_semantics<parallel>, #tpu.dimension_semantics<parallel>], iteration_bounds = array<i64: 2, 1>, scalar_prefetch = 0 : i64, scratch_operands = 0 : i64, tpu.core_type = #tpu.core_type<tc>, window_params = [{transform_indices = @transform_0, window_bounds = array<i64: 1, 6, 256>}, {pipeline_mode = #tpu.pipeline_mode<synchronous>, transform_indices = @transform_1, window_bounds = array<i64: 3, 6>}, {pipeline_mode = #tpu.pipeline_mode<synchronous>, transform_indices = @transform_2, window_bounds = array<i64: 3, 1>}, {transform_indices = @transform_3, window_bounds = array<i64: 1, 3, 256>}]} {
    %c0 = arith.constant 0 : index
    %c0_0 = arith.constant 0 : index
    %0 = vector.load %arg3[%c0, %c0_0] : memref<3x6xbf16, #tpu.memory_space<vmem>>, vector<3x6xbf16>
    %c0_1 = arith.constant 0 : index
    %c0_2 = arith.constant 0 : index
    %c0_3 = arith.constant 0 : index
    %1 = vector.load %arg2[%c0_1, %c0_2, %c0_3] : memref<1x6x256xbf16, #tpu.memory_space<vmem>>, vector<1x6x256xbf16>
    %2 = vector.shape_cast %1 : vector<1x6x256xbf16> to vector<6x256xbf16>
    %cst = arith.constant dense<0.000000e+00> : vector<3x256xf32>
    %3 = tpu.matmul %0, %2, %cst {dimension_numbers = #tpu.dot_dimension_numbers<[1], [0], [0], [1], [0, 0, 1, 1], [], []>} : vector<3x6xbf16>, vector<6x256xbf16>, vector<3x256xf32> -> vector<3x256xf32>
    %c0_4 = arith.constant 0 : index
    %c0_5 = arith.constant 0 : index
    %4 = vector.load %arg4[%c0_4, %c0_5] : memref<3x1xf32, #tpu.memory_space<vmem>>, vector<3x1xf32>
    %5 = vector.broadcast %4 : vector<3x1xf32> to vector<3x256xf32>
    %6 = arith.addf %3, %5 : vector<3x256xf32>
    %cst_6 = arith.constant 0.000000e+00 : f32
    %7 = vector.broadcast %cst_6 : f32 to vector<3x256xf32>
    %8 = arith.maximumf %6, %7 : vector<3x256xf32>
    %9 = arith.truncf %8 : vector<3x256xf32> to vector<3x256xbf16>
    %c0_7 = arith.constant 0 : index
    %c0_8 = arith.constant 0 : index
    %c0_9 = arith.constant 0 : index
    %10 = vector.load %arg5[%c0_7, %c0_8, %c0_9] : memref<1x3x256xbf16, #tpu.memory_space<vmem>>, vector<1x3x256xbf16>
    %11 = vector.shape_cast %10 : vector<1x3x256xbf16> to vector<3x256xbf16>
    %12 = vector.shape_cast %9 : vector<3x256xbf16> to vector<1x3x256xbf16>
    tpu.vector_store %arg5[%c0_7, %c0_8, %c0_9], %12 {strides = array<i32>} : memref<1x3x256xbf16, #tpu.memory_space<vmem>>, vector<1x3x256xbf16>,
    return
  }
  func.func @transform_0(%arg0: i32, %arg1: i32) -> (i32, i32, i32) {
    %c0_i32 = arith.constant 0 : i32
    %c0_i32_0 = arith.constant 0 : i32
    return %arg0, %c0_i32, %arg1 : i32, i32, i32
  }
  func.func @transform_1(%arg0: i32, %arg1: i32) -> (i32, i32) {
    %c0_i32 = arith.constant 0 : i32
    %c0_i32_0 = arith.constant 0 : i32
    %c0_i32_1 = arith.constant 0 : i32
    return %c0_i32, %c0_i32_0 : i32, i32
  }
  func.func @transform_2(%arg0: i32, %arg1: i32) -> (i32, i32) {
    %c0_i32 = arith.constant 0 : i32
    %c0_i32_0 = arith.constant 0 : i32
    %c0_i32_1 = arith.constant 0 : i32
    return %c0_i32, %c0_i32_0 : i32, i32
  }
  func.func @transform_3(%arg0: i32, %arg1: i32) -> (i32, i32, i32) {
    %c0_i32 = arith.constant 0 : i32
    %c0_i32_0 = arith.constant 0 : i32
    return %arg0, %c0_i32, %arg1 : i32, i32, i32
  }
}

module attributes {stable_mosaic.version = 11 : i64} {
  func.func @_conv1x1_kernel(%arg0: i32, %arg1: i32, %arg2: memref<1x6x256xbf16, #tpu.memory_space<vmem>>, %arg3: memref<6x6xbf16, #tpu.memory_space<vmem>>, %arg4: memref<6x1xf32, #tpu.memory_space<vmem>>, %arg5: memref<1x6x256xf32, #tpu.memory_space<vmem>>) attributes {dimension_semantics = [#tpu.dimension_semantics<parallel>, #tpu.dimension_semantics<parallel>], iteration_bounds = array<i64: 2, 1>, scalar_prefetch = 0 : i64, scratch_operands = 0 : i64, tpu.core_type = #tpu.core_type<tc>, window_params = [{transform_indices = @transform_0, window_bounds = array<i64: 1, 6, 256>}, {pipeline_mode = #tpu.pipeline_mode<synchronous>, transform_indices = @transform_1, window_bounds = array<i64: 6, 6>}, {pipeline_mode = #tpu.pipeline_mode<synchronous>, transform_indices = @transform_2, window_bounds = array<i64: 6, 1>}, {transform_indices = @transform_3, window_bounds = array<i64: 1, 6, 256>}]} {
    %c0 = arith.constant 0 : index
    %c0_0 = arith.constant 0 : index
    %0 = vector.load %arg3[%c0, %c0_0] : memref<6x6xbf16, #tpu.memory_space<vmem>>, vector<6x6xbf16>
    %c0_1 = arith.constant 0 : index
    %c0_2 = arith.constant 0 : index
    %c0_3 = arith.constant 0 : index
    %1 = vector.load %arg2[%c0_1, %c0_2, %c0_3] : memref<1x6x256xbf16, #tpu.memory_space<vmem>>, vector<1x6x256xbf16>
    %2 = vector.shape_cast %1 : vector<1x6x256xbf16> to vector<6x256xbf16>
    %cst = arith.constant dense<0.000000e+00> : vector<6x256xf32>
    %3 = tpu.matmul %0, %2, %cst {dimension_numbers = #tpu.dot_dimension_numbers<[1], [0], [0], [1], [0, 0, 1, 1], [], []>} : vector<6x6xbf16>, vector<6x256xbf16>, vector<6x256xf32> -> vector<6x256xf32>
    %c0_4 = arith.constant 0 : index
    %c0_5 = arith.constant 0 : index
    %4 = vector.load %arg4[%c0_4, %c0_5] : memref<6x1xf32, #tpu.memory_space<vmem>>, vector<6x1xf32>
    %5 = vector.broadcast %4 : vector<6x1xf32> to vector<6x256xf32>
    %6 = arith.addf %3, %5 : vector<6x256xf32>
    %cst_6 = arith.constant 0.000000e+00 : f32
    %7 = vector.broadcast %cst_6 : f32 to vector<6x256xf32>
    %8 = arith.maximumf %6, %7 : vector<6x256xf32>
    %c0_7 = arith.constant 0 : index
    %c0_8 = arith.constant 0 : index
    %c0_9 = arith.constant 0 : index
    %9 = vector.load %arg5[%c0_7, %c0_8, %c0_9] : memref<1x6x256xf32, #tpu.memory_space<vmem>>, vector<1x6x256xf32>
    %10 = vector.shape_cast %9 : vector<1x6x256xf32> to vector<6x256xf32>
    %11 = vector.shape_cast %8 : vector<6x256xf32> to vector<1x6x256xf32>
    tpu.vector_store %arg5[%c0_7, %c0_8, %c0_9], %11 {strides = array<i32>} : memref<1x6x256xf32, #tpu.memory_space<vmem>>, vector<1x6x256xf32>,
    return
  }
  func.func @transform_0(%arg0: i32, %arg1: i32) -> (i32, i32, i32) {
    %c0_i32 = arith.constant 0 : i32
    %c0_i32_0 = arith.constant 0 : i32
    return %arg0, %c0_i32, %arg1 : i32, i32, i32
  }
  func.func @transform_1(%arg0: i32, %arg1: i32) -> (i32, i32) {
    %c0_i32 = arith.constant 0 : i32
    %c0_i32_0 = arith.constant 0 : i32
    %c0_i32_1 = arith.constant 0 : i32
    return %c0_i32, %c0_i32_0 : i32, i32
  }
  func.func @transform_2(%arg0: i32, %arg1: i32) -> (i32, i32) {
    %c0_i32 = arith.constant 0 : i32
    %c0_i32_0 = arith.constant 0 : i32
    %c0_i32_1 = arith.constant 0 : i32
    return %c0_i32, %c0_i32_0 : i32, i32
  }
  func.func @transform_3(%arg0: i32, %arg1: i32) -> (i32, i32, i32) {
    %c0_i32 = arith.constant 0 : i32
    %c0_i32_0 = arith.constant 0 : i32
    return %arg0, %c0_i32, %arg1 : i32, i32, i32
  }
}

module attributes {stable_mosaic.version = 11 : i64} {
  func.func @_fused_conv3x3_kernel(%arg0: i32, %arg1: i32, %arg2: memref<1x2x384xbf16, #tpu.memory_space<vmem>>, %arg3: memref<1x2x128xbf16, #tpu.memory_space<vmem>>, %arg4: memref<9x6x2xbf16, #tpu.memory_space<vmem>>, %arg5: memref<6x1xf32, #tpu.memory_space<vmem>>, %arg6: memref<1x3x384xbf16, #tpu.memory_space<vmem>>, %arg7: memref<6x3xbf16, #tpu.memory_space<vmem>>, %arg8: memref<1x6x384xbf16, #tpu.memory_space<vmem>>, %arg9: memref<1x6x384xf32, #tpu.memory_space<vmem>>) attributes {dimension_semantics = [#tpu.dimension_semantics<parallel>, #tpu.dimension_semantics<parallel>], iteration_bounds = array<i64: 2, 1>, scalar_prefetch = 0 : i64, scratch_operands = 0 : i64, tpu.core_type = #tpu.core_type<tc>, window_params = [{transform_indices = @transform_0, window_bounds = array<i64: 1, 2, 384>}, {transform_indices = @transform_1, window_bounds = array<i64: 1, 2, 128>}, {pipeline_mode = #tpu.pipeline_mode<synchronous>, transform_indices = @transform_2, window_bounds = array<i64: 9, 6, 2>}, {pipeline_mode = #tpu.pipeline_mode<synchronous>, transform_indices = @transform_3, window_bounds = array<i64: 6, 1>}, {transform_indices = @transform_4, window_bounds = array<i64: 1, 3, 384>}, {pipeline_mode = #tpu.pipeline_mode<synchronous>, transform_indices = @transform_5, window_bounds = array<i64: 6, 3>}, {transform_indices = @transform_6, window_bounds = array<i64: 1, 6, 384>}, {transform_indices = @transform_7, window_bounds = array<i64: 1, 6, 384>}]} {
    %c0 = arith.constant 0 : index
    %c0_0 = arith.constant 0 : index
    %c0_1 = arith.constant 0 : index
    %0 = vector.load %arg2[%c0, %c0_0, %c0_1] : memref<1x2x384xbf16, #tpu.memory_space<vmem>>, vector<1x2x384xbf16>
    %1 = vector.shape_cast %0 : vector<1x2x384xbf16> to vector<2x384xbf16>
    %c0_2 = arith.constant 0 : index
    %c0_3 = arith.constant 0 : index
    %c0_4 = arith.constant 0 : index
    %2 = vector.load %arg3[%c0_2, %c0_3, %c0_4] : memref<1x2x128xbf16, #tpu.memory_space<vmem>>, vector<1x2x128xbf16>
    %3 = vector.shape_cast %2 : vector<1x2x128xbf16> to vector<2x128xbf16>
    %4 = tpu.concatenate %1, %3 in 1 : vector<2x384xbf16>, vector<2x128xbf16> -> vector<2x512xbf16>
    %cst = arith.constant 0.000000e+00 : f32
    %5 = vector.broadcast %cst : f32 to vector<6x384xf32>
    %c0_5 = arith.constant 0 : index
    %c0_6 = arith.constant 0 : index
    %c0_7 = arith.constant 0 : index
    %6 = vector.load %arg4[%c0_5, %c0_6, %c0_7] : memref<9x6x2xbf16, #tpu.memory_space<vmem>>, vector<1x6x2xbf16>
    %7 = vector.shape_cast %6 : vector<1x6x2xbf16> to vector<6x2xbf16>
    %8 = vector.extract_strided_slice %4 {offsets = [0, 0], sizes = [2, 384], strides = [1, 1]} : vector<2x512xbf16> to vector<2x384xbf16>
    %cst_8 = arith.constant dense<0.000000e+00> : vector<6x384xf32>
    %9 = tpu.matmul %7, %8, %cst_8 {dimension_numbers = #tpu.dot_dimension_numbers<[1], [0], [0], [1], [0, 0, 1, 1], [], []>} : vector<6x2xbf16>, vector<2x384xbf16>, vector<6x384xf32> -> vector<6x384xf32>
    %10 = arith.addf %5, %9 : vector<6x384xf32>
    %c1 = arith.constant 1 : index
    %c0_9 = arith.constant 0 : index
    %c0_10 = arith.constant 0 : index
    %11 = vector.load %arg4[%c1, %c0_9, %c0_10] : memref<9x6x2xbf16, #tpu.memory_space<vmem>>, vector<1x6x2xbf16>
    %12 = vector.shape_cast %11 : vector<1x6x2xbf16> to vector<6x2xbf16>
    %13 = vector.extract_strided_slice %4 {offsets = [0, 1], sizes = [2, 384], strides = [1, 1]} : vector<2x512xbf16> to vector<2x384xbf16>
    %cst_11 = arith.constant dense<0.000000e+00> : vector<6x384xf32>
    %14 = tpu.matmul %12, %13, %cst_11 {dimension_numbers = #tpu.dot_dimension_numbers<[1], [0], [0], [1], [0, 0, 1, 1], [], []>} : vector<6x2xbf16>, vector<2x384xbf16>, vector<6x384xf32> -> vector<6x384xf32>
    %15 = arith.addf %10, %14 : vector<6x384xf32>
    %c2 = arith.constant 2 : index
    %c0_12 = arith.constant 0 : index
    %c0_13 = arith.constant 0 : index
    %16 = vector.load %arg4[%c2, %c0_12, %c0_13] : memref<9x6x2xbf16, #tpu.memory_space<vmem>>, vector<1x6x2xbf16>
    %17 = vector.shape_cast %16 : vector<1x6x2xbf16> to vector<6x2xbf16>
    %18 = vector.extract_strided_slice %4 {offsets = [0, 2], sizes = [2, 384], strides = [1, 1]} : vector<2x512xbf16> to vector<2x384xbf16>
    %cst_14 = arith.constant dense<0.000000e+00> : vector<6x384xf32>
    %19 = tpu.matmul %17, %18, %cst_14 {dimension_numbers = #tpu.dot_dimension_numbers<[1], [0], [0], [1], [0, 0, 1, 1], [], []>} : vector<6x2xbf16>, vector<2x384xbf16>, vector<6x384xf32> -> vector<6x384xf32>
    %20 = arith.addf %15, %19 : vector<6x384xf32>
    %c3 = arith.constant 3 : index
    %c0_15 = arith.constant 0 : index
    %c0_16 = arith.constant 0 : index
    %21 = vector.load %arg4[%c3, %c0_15, %c0_16] : memref<9x6x2xbf16, #tpu.memory_space<vmem>>, vector<1x6x2xbf16>
    %22 = vector.shape_cast %21 : vector<1x6x2xbf16> to vector<6x2xbf16>
    %23 = vector.extract_strided_slice %4 {offsets = [0, 18], sizes = [2, 384], strides = [1, 1]} : vector<2x512xbf16> to vector<2x384xbf16>
    %cst_17 = arith.constant dense<0.000000e+00> : vector<6x384xf32>
    %24 = tpu.matmul %22, %23, %cst_17 {dimension_numbers = #tpu.dot_dimension_numbers<[1], [0], [0], [1], [0, 0, 1, 1], [], []>} : vector<6x2xbf16>, vector<2x384xbf16>, vector<6x384xf32> -> vector<6x384xf32>
    %25 = arith.addf %20, %24 : vector<6x384xf32>
    %c4 = arith.constant 4 : index
    %c0_18 = arith.constant 0 : index
    %c0_19 = arith.constant 0 : index
    %26 = vector.load %arg4[%c4, %c0_18, %c0_19] : memref<9x6x2xbf16, #tpu.memory_space<vmem>>, vector<1x6x2xbf16>
    %27 = vector.shape_cast %26 : vector<1x6x2xbf16> to vector<6x2xbf16>
    %28 = vector.extract_strided_slice %4 {offsets = [0, 19], sizes = [2, 384], strides = [1, 1]} : vector<2x512xbf16> to vector<2x384xbf16>
    %cst_20 = arith.constant dense<0.000000e+00> : vector<6x384xf32>
    %29 = tpu.matmul %27, %28, %cst_20 {dimension_numbers = #tpu.dot_dimension_numbers<[1], [0], [0], [1], [0, 0, 1, 1], [], []>} : vector<6x2xbf16>, vector<2x384xbf16>, vector<6x384xf32> -> vector<6x384xf32>
    %30 = arith.addf %25, %29 : vector<6x384xf32>
    %c5 = arith.constant 5 : index
    %c0_21 = arith.constant 0 : index
    %c0_22 = arith.constant 0 : index
    %31 = vector.load %arg4[%c5, %c0_21, %c0_22] : memref<9x6x2xbf16, #tpu.memory_space<vmem>>, vector<1x6x2xbf16>
    %32 = vector.shape_cast %31 : vector<1x6x2xbf16> to vector<6x2xbf16>
    %33 = vector.extract_strided_slice %4 {offsets = [0, 20], sizes = [2, 384], strides = [1, 1]} : vector<2x512xbf16> to vector<2x384xbf16>
    %cst_23 = arith.constant dense<0.000000e+00> : vector<6x384xf32>
    %34 = tpu.matmul %32, %33, %cst_23 {dimension_numbers = #tpu.dot_dimension_numbers<[1], [0], [0], [1], [0, 0, 1, 1], [], []>} : vector<6x2xbf16>, vector<2x384xbf16>, vector<6x384xf32> -> vector<6x384xf32>
    %35 = arith.addf %30, %34 : vector<6x384xf32>
    %c6 = arith.constant 6 : index
    %c0_24 = arith.constant 0 : index
    %c0_25 = arith.constant 0 : index
    %36 = vector.load %arg4[%c6, %c0_24, %c0_25] : memref<9x6x2xbf16, #tpu.memory_space<vmem>>, vector<1x6x2xbf16>
    %37 = vector.shape_cast %36 : vector<1x6x2xbf16> to vector<6x2xbf16>
    %38 = vector.extract_strided_slice %4 {offsets = [0, 36], sizes = [2, 384], strides = [1, 1]} : vector<2x512xbf16> to vector<2x384xbf16>
    %cst_26 = arith.constant dense<0.000000e+00> : vector<6x384xf32>
    %39 = tpu.matmul %37, %38, %cst_26 {dimension_numbers = #tpu.dot_dimension_numbers<[1], [0], [0], [1], [0, 0, 1, 1], [], []>} : vector<6x2xbf16>, vector<2x384xbf16>, vector<6x384xf32> -> vector<6x384xf32>
    %40 = arith.addf %35, %39 : vector<6x384xf32>
    %c7 = arith.constant 7 : index
    %c0_27 = arith.constant 0 : index
    %c0_28 = arith.constant 0 : index
    %41 = vector.load %arg4[%c7, %c0_27, %c0_28] : memref<9x6x2xbf16, #tpu.memory_space<vmem>>, vector<1x6x2xbf16>
    %42 = vector.shape_cast %41 : vector<1x6x2xbf16> to vector<6x2xbf16>
    %43 = vector.extract_strided_slice %4 {offsets = [0, 37], sizes = [2, 384], strides = [1, 1]} : vector<2x512xbf16> to vector<2x384xbf16>
    %cst_29 = arith.constant dense<0.000000e+00> : vector<6x384xf32>
    %44 = tpu.matmul %42, %43, %cst_29 {dimension_numbers = #tpu.dot_dimension_numbers<[1], [0], [0], [1], [0, 0, 1, 1], [], []>} : vector<6x2xbf16>, vector<2x384xbf16>, vector<6x384xf32> -> vector<6x384xf32>
    %45 = arith.addf %40, %44 : vector<6x384xf32>
    %c8 = arith.constant 8 : index
    %c0_30 = arith.constant 0 : index
    %c0_31 = arith.constant 0 : index
    %46 = vector.load %arg4[%c8, %c0_30, %c0_31] : memref<9x6x2xbf16, #tpu.memory_space<vmem>>, vector<1x6x2xbf16>
    %47 = vector.shape_cast %46 : vector<1x6x2xbf16> to vector<6x2xbf16>
    %48 = vector.extract_strided_slice %4 {offsets = [0, 38], sizes = [2, 384], strides = [1, 1]} : vector<2x512xbf16> to vector<2x384xbf16>
    %cst_32 = arith.constant dense<0.000000e+00> : vector<6x384xf32>
    %49 = tpu.matmul %47, %48, %cst_32 {dimension_numbers = #tpu.dot_dimension_numbers<[1], [0], [0], [1], [0, 0, 1, 1], [], []>} : vector<6x2xbf16>, vector<2x384xbf16>, vector<6x384xf32> -> vector<6x384xf32>
    %50 = arith.addf %45, %49 : vector<6x384xf32>
    %c0_33 = arith.constant 0 : index
    %c0_34 = arith.constant 0 : index
    %51 = vector.load %arg7[%c0_33, %c0_34] : memref<6x3xbf16, #tpu.memory_space<vmem>>, vector<6x3xbf16>
    %c0_35 = arith.constant 0 : index
    %c0_36 = arith.constant 0 : index
    %c0_37 = arith.constant 0 : index
    %52 = vector.load %arg6[%c0_35, %c0_36, %c0_37] : memref<1x3x384xbf16, #tpu.memory_space<vmem>>, vector<1x3x384xbf16>
    %53 = vector.shape_cast %52 : vector<1x3x384xbf16> to vector<3x384xbf16>
    %cst_38 = arith.constant dense<0.000000e+00> : vector<6x384xf32>
    %54 = tpu.matmul %51, %53, %cst_38 {dimension_numbers = #tpu.dot_dimension_numbers<[1], [0], [0], [1], [0, 0, 1, 1], [], []>} : vector<6x3xbf16>, vector<3x384xbf16>, vector<6x384xf32> -> vector<6x384xf32>
    %55 = arith.addf %50, %54 : vector<6x384xf32>
    %c0_39 = arith.constant 0 : index
    %c0_40 = arith.constant 0 : index
    %56 = vector.load %arg5[%c0_39, %c0_40] : memref<6x1xf32, #tpu.memory_space<vmem>>, vector<6x1xf32>
    %57 = vector.broadcast %56 : vector<6x1xf32> to vector<6x384xf32>
    %58 = arith.addf %55, %57 : vector<6x384xf32>
    %cst_41 = arith.constant 0.000000e+00 : f32
    %59 = vector.broadcast %cst_41 : f32 to vector<6x384xf32>
    %60 = arith.maximumf %58, %59 : vector<6x384xf32>
    %c0_42 = arith.constant 0 : index
    %c0_43 = arith.constant 0 : index
    %c0_44 = arith.constant 0 : index
    %61 = vector.load %arg8[%c0_42, %c0_43, %c0_44] : memref<1x6x384xbf16, #tpu.memory_space<vmem>>, vector<1x6x384xbf16>
    %62 = vector.shape_cast %61 : vector<1x6x384xbf16> to vector<6x384xbf16>
    %63 = arith.extf %62 : vector<6x384xbf16> to vector<6x384xf32>
    %64 = arith.addf %60, %63 : vector<6x384xf32>
    %c0_45 = arith.constant 0 : index
    %c0_46 = arith.constant 0 : index
    %c0_47 = arith.constant 0 : index
    %65 = vector.load %arg9[%c0_45, %c0_46, %c0_47] : memref<1x6x384xf32, #tpu.memory_space<vmem>>, vector<1x6x384xf32>
    %66 = vector.shape_cast %65 : vector<1x6x384xf32> to vector<6x384xf32>
    %67 = vector.shape_cast %64 : vector<6x384xf32> to vector<1x6x384xf32>
    tpu.vector_store %arg9[%c0_45, %c0_46, %c0_47], %67 {strides = array<i32>} : memref<1x6x384xf32, #tpu.memory_space<vmem>>, vector<1x6x384xf32>,
    return
  }
  func.func @transform_0(%arg0: i32, %arg1: i32) -> (i32, i32, i32) {
    %c0_i32 = arith.constant 0 : i32
    %c0_i32_0 = arith.constant 0 : i32
    return %arg0, %c0_i32, %arg1 : i32, i32, i32
  }
  func.func @transform_1(%arg0: i32, %arg1: i32) -> (i32, i32, i32) {
    %c1_i32 = arith.constant 1 : i32
    %0 = arith.addi %arg1, %c1_i32 : i32
    %c3_i32 = arith.constant 3 : i32
    %1 = arith.muli %0, %c3_i32 : i32
    %c0_i32 = arith.constant 0 : i32
    %c0_i32_0 = arith.constant 0 : i32
    return %arg0, %c0_i32, %1 : i32, i32, i32
  }
  func.func @transform_2(%arg0: i32, %arg1: i32) -> (i32, i32, i32) {
    %c0_i32 = arith.constant 0 : i32
    %c0_i32_0 = arith.constant 0 : i32
    %c0_i32_1 = arith.constant 0 : i32
    %c0_i32_2 = arith.constant 0 : i32
    return %c0_i32, %c0_i32_0, %c0_i32_1 : i32, i32, i32
  }
  func.func @transform_3(%arg0: i32, %arg1: i32) -> (i32, i32) {
    %c0_i32 = arith.constant 0 : i32
    %c0_i32_0 = arith.constant 0 : i32
    %c0_i32_1 = arith.constant 0 : i32
    return %c0_i32, %c0_i32_0 : i32, i32
  }
  func.func @transform_4(%arg0: i32, %arg1: i32) -> (i32, i32, i32) {
    %c0_i32 = arith.constant 0 : i32
    %c0_i32_0 = arith.constant 0 : i32
    return %arg0, %c0_i32, %arg1 : i32, i32, i32
  }
  func.func @transform_5(%arg0: i32, %arg1: i32) -> (i32, i32) {
    %c0_i32 = arith.constant 0 : i32
    %c0_i32_0 = arith.constant 0 : i32
    %c0_i32_1 = arith.constant 0 : i32
    return %c0_i32, %c0_i32_0 : i32, i32
  }
  func.func @transform_6(%arg0: i32, %arg1: i32) -> (i32, i32, i32) {
    %c0_i32 = arith.constant 0 : i32
    %c0_i32_0 = arith.constant 0 : i32
    return %arg0, %c0_i32, %arg1 : i32, i32, i32
  }
  func.func @transform_7(%arg0: i32, %arg1: i32) -> (i32, i32, i32) {
    %c0_i32 = arith.constant 0 : i32
    %c0_i32_0 = arith.constant 0 : i32
    return %arg0, %c0_i32, %arg1 : i32, i32, i32
  }
}

</mosaic_0001>

<llo_original>
// kernel: att_ffc_forward.6
$region0: #{att_ffc_forward.6}
  #allocation0 [shape = 'u32[]', space=smem, size = 0x4, offset = 0x4, fixed_abs, tag = 'smem constant byte address 0x4 - core index']
  #allocation1 [shape = 'u32[72,128]{1,0:T(1,128)}', space=vmem, size = 0x9000, scoped, tag = 'internal scratch']
  #allocation2 [shape = 'f32[1,1]{1,0:T(1,128)S(1)}', space=vmem, size = 0x200, scoped, tag = 'scoped memory for att_ffc_forward.6']
  %s0 = inlined_call_operand.vmem [shape: bf16[2,8,512], index: 0, kind: input, shape index: {}, may-alias: {0,1}]
  %s1 = inlined_call_operand.vmem [shape: bf16[2,8,512], index: 1, kind: input, shape index: {}, may-alias: {0,1}]
  %s2 = inlined_call_operand.vmem [shape: bf16[9,1,8], index: 2, kind: input, shape index: {}]
  %s3 = inlined_call_operand.<no memory space> [shape: f32[1,1], index: 3, kind: input, shape index: {}]
  %s4 = inlined_call_operand.vmem [shape: bf16[2,1,384], index: 4, kind: output, shape index: {}]
  %s5 = sld [smem:[#allocation0]]
  $region49: #{att_ffc_forward.6} parent=0
    _
  %s7 = ssub.s32 1, %s5
  %s8 = scalar_select 0, %s7, %s5
  %v9 = vstv %s3
  %10 = vst [vmem:[#allocation2] sm:$0x1] %v9
  loop: start=0, step=1, limit=4
  $region2: #{att_ffc_forward.6} parent=0 // loop_pre_header
    _
  $region3: #{att_ffc_forward.6} parent=0 // loop_header
    %s12 = sphi 0, %s16
    %p13 = scmp.ge.s32.totalorder %s12, 4
    %s19 = sphi 0, %s31
    %s20 = sphi 0, %s27
    %s21 = sphi 0, %s19
    %s22 = sphi 0, %s20
    %s23 = sphi 0, %s21
    %s24 = sphi 0, %s22
    %s36 = sphi 0, %s38
    %s39 = sphi 0, %s36
    %s40 = sphi 0, %s39
    %s56 = sphi 0, %s40
    %s68 = sphi 0, %s70
    %s71 = sphi 0, %s68
    %s72 = sphi 0, %s71
    %s88 = sphi 0, %s72
    %s92 = sphi 0, %s92
    %s94 = sphi 0, %s92
    %s95 = sphi 0, %s94
    %s109 = sphi 0, %s95
    %s113 = sphi 0, %s113
    %s115 = sphi 0, %s113
    %s116 = sphi 0, %s115
    %s130 = sphi 0, %s116
    %s138 = sphi 0, %s140
    %s141 = sphi 0, %s138
    %s142 = sphi 0, %s141
    %s158 = sphi 0, %s142
  $region4: #{att_ffc_forward.6} parent=0 // loop_header_branch
    %15 = sbr.rel (%p13) target = $region8
  $region5: #{att_ffc_forward.6} parent=0 // loop_body
    %s17 = ssub.s32 %s12, 1
    %s18 = ssub.s32 %s12, 2
    %s25 = sadd.s32 1, %s20
    %p26 = scmp.ge.s32.totalorder %s25, 1
    %s27 = scalar_select %p26, 0, %s25
    %s28 = sadd.s32 1, %s19
    %s29 = scalar_select %p26, %s28, %s19
    %p30 = scmp.ge.s32.totalorder %s29, 2
    %s31 = scalar_select %p30, 0, %s29
    %s32 = ssub.s32 %s19, %s31
    %s33 = ssub.s32 %s20, %s27
    %s34 = sor.u32 %s32, %s33
    %p35 = scmp.eq.s32.totalorder %s34, 0
    %s37 = sadd.s32 %s36, 1
    %s38 = scalar_select %p35, %s36, %s37
    %p41 = pneg %p35
    %p42 = scmp.eq.s32.totalorder %s12, 1
    %p43 = por %p41, %p42
    %p44 = scmp.ne.s32.totalorder %s36, %s39
    %p45 = scmp.eq.s32.totalorder %s12, 0
    %p46 = por %p44, %p45
    %p47 = scmp.ne.s32.totalorder %s36, %s39
    %p48 = scmp.eq.s32.totalorder %s17, 1
    %p49 = por %p47, %p48
    %p50 = scmp.ne.s32.totalorder %s39, %s40
    %p51 = scmp.eq.s32.totalorder %s17, 0
    %p52 = por %p50, %p51
    %p53 = scmp.ne.s32.totalorder %s39, %s40
    %p54 = scmp.eq.s32.totalorder %s18, 1
    %p55 = por %p53, %p54
    %p57 = scmp.ne.s32.totalorder %s40, %s56
    %p58 = scmp.eq.s32.totalorder %s18, 0
    %p59 = por %p57, %p58
    %s60 = sadd.s32 %s20, 1
    %s61 = smul.u32 %s60, 3
    %s62 = sadd.s32 %s27, 1
    %s63 = smul.u32 %s62, 3
    %s64 = ssub.s32 %s19, %s31
    %s65 = ssub.s32 %s61, %s63
    %s66 = sor.u32 %s64, %s65
    %p67 = scmp.eq.s32.totalorder %s66, 0
    %s69 = sadd.s32 %s68, 1
    %s70 = scalar_select %p67, %s68, %s69
    %p73 = pneg %p67
    %p74 = scmp.eq.s32.totalorder %s12, 1
    %p75 = por %p73, %p74
    %p76 = scmp.ne.s32.totalorder %s68, %s71
    %p77 = scmp.eq.s32.totalorder %s12, 0
    %p78 = por %p76, %p77
    %p79 = scmp.ne.s32.totalorder %s68, %s71
    %p80 = scmp.eq.s32.totalorder %s17, 1
    %p81 = por %p79, %p80
    %p82 = scmp.ne.s32.totalorder %s71, %s72
    %p83 = scmp.eq.s32.totalorder %s17, 0
    %p84 = por %p82, %p83
    %p85 = scmp.ne.s32.totalorder %s71, %s72
    %p86 = scmp.eq.s32.totalorder %s18, 1
    %p87 = por %p85, %p86
    %p89 = scmp.ne.s32.totalorder %s72, %s88
    %p90 = scmp.eq.s32.totalorder %s18, 0
    %p91 = por %p89, %p90
    %s93 = sadd.s32 %s92, 1
    %p96 = scmp.eq.s32.totalorder %s12, 1
    %p97 = scmp.ne.s32.totalorder %s92, %s94
    %p98 = scmp.eq.s32.totalorder %s12, 0
    %p99 = por %p97, %p98
    %p100 = scmp.ne.s32.totalorder %s92, %s94
    %p101 = scmp.eq.s32.totalorder %s17, 1
    %p102 = por %p100, %p101
    %p103 = scmp.ne.s32.totalorder %s94, %s95
    %p104 = scmp.eq.s32.totalorder %s17, 0
    %p105 = por %p103, %p104
    %p106 = scmp.ne.s32.totalorder %s94, %s95
    %p107 = scmp.eq.s32.totalorder %s18, 1
    %p108 = por %p106, %p107
    %p110 = scmp.ne.s32.totalorder %s95, %s109
    %p111 = scmp.eq.s32.totalorder %s18, 0
    %p112 = por %p110, %p111
    %s114 = sadd.s32 %s113, 1
    %p117 = scmp.eq.s32.totalorder %s12, 1
    %p118 = scmp.ne.s32.totalorder %s113, %s115
    %p119 = scmp.eq.s32.totalorder %s12, 0
    %p120 = por %p118, %p119
    %p121 = scmp.ne.s32.totalorder %s113, %s115
    %p122 = scmp.eq.s32.totalorder %s17, 1
    %p123 = por %p121, %p122
    %p124 = scmp.ne.s32.totalorder %s115, %s116
    %p125 = scmp.eq.s32.totalorder %s17, 0
    %p126 = por %p124, %p125
    %p127 = scmp.ne.s32.totalorder %s115, %s116
    %p128 = scmp.eq.s32.totalorder %s18, 1
    %p129 = por %p127, %p128
    %p131 = scmp.ne.s32.totalorder %s116, %s130
    %p132 = scmp.eq.s32.totalorder %s18, 0
    %p133 = por %p131, %p132
    %s134 = ssub.s32 %s19, %s31
    %s135 = ssub.s32 %s20, %s27
    %s136 = sor.u32 %s134, %s135
    %p137 = scmp.eq.s32.totalorder %s136, 0
    %s139 = sadd.s32 %s138, 1
    %s140 = scalar_select %p137, %s138, %s139
    %p143 = pneg %p137
    %p144 = scmp.eq.s32.totalorder %s12, 1
    %p145 = por %p143, %p144
    %p146 = scmp.ne.s32.totalorder %s138, %s141
    %p147 = scmp.eq.s32.totalorder %s12, 0
    %p148 = por %p146, %p147
    %p149 = scmp.ne.s32.totalorder %s138, %s141
    %p150 = scmp.eq.s32.totalorder %s17, 1
    %p151 = por %p149, %p150
    %p152 = scmp.ne.s32.totalorder %s141, %s142
    %p153 = scmp.eq.s32.totalorder %s17, 0
    %p154 = por %p152, %p153
    %p155 = scmp.ne.s32.totalorder %s141, %s142
    %p156 = scmp.eq.s32.totalorder %s18, 1
    %p157 = por %p155, %p156
    %p159 = scmp.ne.s32.totalorder %s142, %s158
    %p160 = scmp.eq.s32.totalorder %s18, 0
    %p161 = por %p159, %p160
    %p162 = scmp.le.s32.totalorder 1, %s12
    %p163 = scmp.lt.s32.totalorder %s12, 3
    %p164 = pnand %p162, %p163
    %p165 = pneg %p164
    // Predicated region
    $region9: #{att_ffc_forward.6} parent=5 // pred_check
      _
    $region10: #{att_ffc_forward.6} parent=5 // pred_check_branch
      %167 = sbr.rel (%p164) target = $region12
    $region11: #{att_ffc_forward.6} parent=5 // pred_region
      %s168 = ssub.s32 %s12, 1
      // Predicated region
      $region13: #{att_ffc_forward.6} parent=11 // pred_check
        %p169 = pneg %p105
      $region14: #{att_ffc_forward.6} parent=11 // pred_check_branch
        %171 = sbr.rel (%p169) target = $region16
      $region15: #{att_ffc_forward.6} parent=11 // pred_region
        _
      $region16: #{att_ffc_forward.6} parent=11 // pred_fallthru
        _
      // Predicated region
      $region17: #{att_ffc_forward.6} parent=11 // pred_check
        %p172 = pneg %p126
      $region18: #{att_ffc_forward.6} parent=11 // pred_check_branch
        %174 = sbr.rel (%p172) target = $region20
      $region19: #{att_ffc_forward.6} parent=11 // pred_region
        _
      $region20: #{att_ffc_forward.6} parent=11 // pred_fallthru
        _
    $region12: #{att_ffc_forward.6} parent=5 // pred_fallthru
      _
    %p175 = scmp.lt.s32.totalorder %s12, 2
    // Predicated region
    $region21: #{att_ffc_forward.6} parent=5 // pred_check
      %p176 = pneg %p175
    $region22: #{att_ffc_forward.6} parent=5 // pred_check_branch
      %178 = sbr.rel (%p176) target = $region24
    $region23: #{att_ffc_forward.6} parent=5 // pred_region
      // Predicated region
      $region25: #{att_ffc_forward.6} parent=23 // pred_check
        %p179 = pneg %p46
      $region26: #{att_ffc_forward.6} parent=23 // pred_check_branch
        %181 = sbr.rel (%p179) target = $region28
      $region27: #{att_ffc_forward.6} parent=23 // pred_region
        %s182 = smul.u32 3, %s20
        %s183 = ssub.s32 4, %s182
        %p184 = scmp.lt.s32.totalorder %s183, 3
        %s185 = scalar_select %p184, %s183, 3
        %s186 = smul.u32 4, %s185
        %p187 = scmp.lt.s32.totalorder %s19, 1
        %s188 = scalar_select %p187, %s19, 1
        %p189 = scmp.lt.s32.totalorder %s182, 3
        %s190 = scalar_select %p189, %s182, 3
        %s191 = smul.addr %s188, 4
        %s192 = sadd.s32 %s190, %s191
        %s193 = smul.addr %s192, 4
        %s194 = scalar_lea.vmem %s0, %s193
        %s195 = smul.u32 3, %s20
        %s196 = ssub.s32 4, %s195
        %p197 = scmp.lt.s32.totalorder %s196, 3
        %s198 = scalar_select %p197, %s196, 3
        %s199 = smul.u32 4, %s198
      $region28: #{att_ffc_forward.6} parent=23 // pred_fallthru
        _
      // Predicated region
      $region29: #{att_ffc_forward.6} parent=23 // pred_check
        %p200 = pneg %p78
      $region30: #{att_ffc_forward.6} parent=23 // pred_check_branch
        %202 = sbr.rel (%p200) target = $region32
      $region31: #{att_ffc_forward.6} parent=23 // pred_region
        %s203 = sadd.s32 %s20, 1
        %s204 = smul.u32 %s203, 3
        %p205 = scmp.lt.s32.totalorder %s19, 1
        %s206 = scalar_select %p205, %s19, 1
        %p207 = scmp.lt.s32.totalorder %s204, 3
        %s208 = scalar_select %p207, %s204, 3
        %s209 = smul.addr %s206, 4
        %s210 = sadd.s32 %s208, %s209
        %s211 = smul.addr %s210, 4
        %s212 = scalar_lea.vmem %s1, %s211
        %s213 = sadd.s32 %s20, 1
        %s214 = smul.u32 %s213, 3
      $region32: #{att_ffc_forward.6} parent=23 // pred_fallthru
        _
    $region24: #{att_ffc_forward.6} parent=5 // pred_fallthru
      _
    %p215 = scmp.le.s32.totalorder 1, %s12
    %p216 = scmp.lt.s32.totalorder %s12, 3
    %p217 = pnand %p215, %p216
    %p218 = pneg %p217
    // Predicated region
    $region33: #{att_ffc_forward.6} parent=5 // pred_check
      _
    $region34: #{att_ffc_forward.6} parent=5 // pred_check_branch
      %220 = sbr.rel (%p217) target = $region36
    $region35: #{att_ffc_forward.6} parent=5 // pred_region
      %s221 = ssub.s32 %s12, 1
      %s222 = smul.u32 3, %s22
      %s223 = ssub.s32 4, %s222
      %p224 = scmp.lt.s32.totalorder %s223, 3
      %s225 = scalar_select %p224, %s223, 3
      %s226 = smul.u32 4, %s225
      %p227 = scmp.lt.s32.totalorder %s21, 1
      %s228 = scalar_select %p227, %s21, 1
      %p229 = scmp.lt.s32.totalorder %s222, 3
      %s230 = scalar_select %p229, %s222, 3
      %s231 = smul.addr %s228, 4
      %s232 = sadd.s32 %s230, %s231
      %s233 = smul.addr %s232, 4
      %s234 = scalar_lea.vmem %s0, %s233
      %p235 = pneg %p52
      %p236 = pneg %p49
      %s237 = sadd.s32 %s22, 1
      %s238 = smul.u32 %s237, 3
      %p239 = scmp.lt.s32.totalorder %s21, 1
      %s240 = scalar_select %p239, %s21, 1
      %p241 = scmp.lt.s32.totalorder %s238, 3
      %s242 = scalar_select %p241, %s238, 3
      %s243 = smul.addr %s240, 4
      %s244 = sadd.s32 %s242, %s243
      %s245 = smul.addr %s244, 4
      %s246 = scalar_lea.vmem %s1, %s245
      %p247 = pneg %p84
      %p248 = pneg %p81
      %p249 = pneg %p105
      %p250 = pneg %p102
      %p251 = pneg %p126
      %p252 = pneg %p123
      %p253 = pneg %p154
      %p254 = pneg %p151
      %s255 = smul.u32 3, %s22
      %p256 = scmp.lt.s32.totalorder %s21, 1
      %s257 = scalar_select %p256, %s21, 1
      %p258 = scmp.lt.s32.totalorder %s255, 2
      %s259 = scalar_select %p258, %s255, 2
      %s260 = smul.addr %s257, 3
      %s261 = sadd.s32 %s259, %s260
      %s262 = scalar_lea.vmem %s4, %s261
      %s263 = smul.u32 3, %s22
      %s264 = ssub.s32 4, %s263
      %p265 = scmp.lt.s32.totalorder %s264, 3
      %s266 = scalar_select %p265, %s264, 3
      %s267 = smul.u32 4, %s266
      %p268 = scmp.lt.s32.totalorder %s21, 1
      %s269 = scalar_select %p268, %s21, 1
      %p270 = scmp.lt.s32.totalorder %s263, 3
      %s271 = scalar_select %p270, %s263, 3
      %s272 = smul.addr %s269, 4
      %s273 = sadd.s32 %s271, %s272
      %s274 = smul.addr %s273, 4
      %s275 = scalar_lea.vmem %s0, %s274
      %s276 = smul.u32 3, %s22
      %s277 = ssub.s32 4, %s276
      %p278 = scmp.lt.s32.totalorder %s277, 3
      %s279 = scalar_select %p278, %s277, 3
      %s280 = smul.u32 4, %s279
      %s281 = sadd.s32 %s22, 1
      %s282 = smul.u32 %s281, 3
      %p283 = scmp.lt.s32.totalorder %s21, 1
      %s284 = scalar_select %p283, %s21, 1
      %p285 = scmp.lt.s32.totalorder %s282, 3
      %s286 = scalar_select %p285, %s282, 3
      %s287 = smul.addr %s284, 4
      %s288 = sadd.s32 %s286, %s287
      %s289 = smul.addr %s288, 4
      %s290 = scalar_lea.vmem %s1, %s289
      %s291 = sadd.s32 %s22, 1
      %s292 = smul.u32 %s291, 3
      %s293 = smul.u32 3, %s22
      %p294 = scmp.lt.s32.totalorder %s21, 1
      %s295 = scalar_select %p294, %s21, 1
      %p296 = scmp.lt.s32.totalorder %s293, 2
      %s297 = scalar_select %p296, %s293, 2
      %s298 = smul.addr %s295, 3
      %s299 = sadd.s32 %s297, %s298
      %s300 = scalar_lea.vmem %s4, %s299
      %s301 = smul.u32 3, %s22
      %v303 = vld [vmem:[%s275] sm:$0xff]
      %v304 = vld [vmem:[%s275 + $0x8] sm:$0xf]
      %v305 = vld [vmem:[%s290] sm:$0xf]
      %v308 = vunpack.c.l.b16 %v303
      %v309 = vunpack.c.h.b16 %v303
      %v310 = vunpack.c.l.b16 %v304
      %v311 = vpack.c.b16 %v308, %v308
      %v312 = vpack.c.b16 %v309, %v309
      %v313 = vpack.c.b16 %v310, %v310
      %v314 = vld [vmem:[%s2] sm:$0x1]
      %s315 = scalar_lea.vmem %s2, 1
      %v316 = vld [vmem:[%s315] sm:$0x1]
      %318 = vrot.lane.b32.xlu0 %v311, 127
      %v319 = vpop.permute.xlu0 %318
      %320 = vrot.lane.b32.xlu0 %v312, 127
      %v321 = vpop.permute.xlu0 %320
      %322 = vrot.lane.b32.xlu0 %v313, 127
      %v323 = vpop.permute.xlu0 %322
      %324 = vrot.lane.b32.xlu0 %v305, 127
      %v325 = vpop.permute.xlu0 %324
      %vm326 = vcmask 1039360
      %v327 = vsel %vm326, %v319, %v321
      %v328 = vsel %vm326, %v321, %v323
      %v329 = vsel %vm326, %v323, %v325
      %vm330 = vcmask 64512
      %v332 = vsel %vm330, %v316, 0
      %vm334 = vcmask 1043456
      %v336 = vsel %vm334, %v327, 0
      %v339 = vsel %vm334, %v328, 0
      %v342 = vsel %vm334, %v329, 0
      %344 = vmatpush.bf16.msra.mxu0 0
      %345 = vmatpush.bf16.msra.mxu0 0
      %346 = vmatpush.bf16.msra.mxu0 0
      %347 = vmatpush.bf16.msra.mxu0 0
      %348 = vmatpush.bf16.msra.mxu0 0
      %349 = vmatpush.bf16.msra.mxu0 0
      %350 = vmatpush.bf16.msra.mxu0 0
      %351 = vmatpush.bf16.msra.mxu0 %v336
      %352 = vmatmul.bf16.gmra.mxu0 %v332
      %v353 = vpop.f32.mrf.mxu0
      %v354 = vadd.f32 0.0, %v353
      %v355 = vpop.f32.mrf.mxu0
      %356 = vdwg.mxu0
      %357 = vmatpush.bf16.msra.mxu0 0
      %358 = vmatpush.bf16.msra.mxu0 0
      %359 = vmatpush.bf16.msra.mxu0 0
      %360 = vmatpush.bf16.msra.mxu0 0
      %361 = vmatpush.bf16.msra.mxu0 0
      %362 = vmatpush.bf16.msra.mxu0 0
      %363 = vmatpush.bf16.msra.mxu0 0
      %364 = vmatpush.bf16.msra.mxu0 %v339
      %365 = vmatmul.bf16.gmra.mxu0 %v332
      %v366 = vpop.f32.mrf.mxu0
      %v367 = vadd.f32 0.0, %v366
      %v368 = vpop.f32.mrf.mxu0
      %369 = vdwg.mxu0
      %370 = vmatpush.bf16.msra.mxu0 0
      %371 = vmatpush.bf16.msra.mxu0 0
      %372 = vmatpush.bf16.msra.mxu0 0
      %373 = vmatpush.bf16.msra.mxu0 0
      %374 = vmatpush.bf16.msra.mxu0 0
      %375 = vmatpush.bf16.msra.mxu0 0
      %376 = vmatpush.bf16.msra.mxu0 0
      %377 = vmatpush.bf16.msra.mxu0 %v342
      %378 = vmatmul.bf16.gmra.mxu0 %v332
      %v379 = vpop.f32.mrf.mxu0
      %v380 = vadd.f32 0.0, %v379
      %v381 = vpop.f32.mrf.mxu0
      %382 = vdwg.mxu0
      %v384 = vsel %vm330, %v314, 0
      %v387 = vsel %vm334, %v311, 0
      %v390 = vsel %vm334, %v312, 0
      %v393 = vsel %vm334, %v313, 0
      %395 = vmatpush.bf16.msra.mxu0 0
      %396 = vmatpush.bf16.msra.mxu0 0
      %397 = vmatpush.bf16.msra.mxu0 0
      %398 = vmatpush.bf16.msra.mxu0 0
      %399 = vmatpush.bf16.msra.mxu0 0
      %400 = vmatpush.bf16.msra.mxu0 0
      %401 = vmatpush.bf16.msra.mxu0 0
      %402 = vmatpush.bf16.msra.mxu0 %v387
      %403 = vmatmul.bf16.gmra.mxu0 %v384
      %v404 = vpop.f32.mrf.mxu0
      %v405 = vadd.f32 %v354, %v404
      %v406 = vpop.f32.mrf.mxu0
      %407 = vdwg.mxu0
      %408 = vmatpush.bf16.msra.mxu0 0
      %409 = vmatpush.bf16.msra.mxu0 0
      %410 = vmatpush.bf16.msra.mxu0 0
      %411 = vmatpush.bf16.msra.mxu0 0
      %412 = vmatpush.bf16.msra.mxu0 0
      %413 = vmatpush.bf16.msra.mxu0 0
      %414 = vmatpush.bf16.msra.mxu0 0
      %415 = vmatpush.bf16.msra.mxu0 %v390
      %416 = vmatmul.bf16.gmra.mxu0 %v384
      %v417 = vpop.f32.mrf.mxu0
      %v418 = vadd.f32 %v367, %v417
      %v419 = vpop.f32.mrf.mxu0
      %420 = vdwg.mxu0
      %421 = vmatpush.bf16.msra.mxu0 0
      %422 = vmatpush.bf16.msra.mxu0 0
      %423 = vmatpush.bf16.msra.mxu0 0
      %424 = vmatpush.bf16.msra.mxu0 0
      %425 = vmatpush.bf16.msra.mxu0 0
      %426 = vmatpush.bf16.msra.mxu0 0
      %427 = vmatpush.bf16.msra.mxu0 0
      %428 = vmatpush.bf16.msra.mxu0 %v393
      %429 = vmatmul.bf16.gmra.mxu0 %v384
      %v430 = vpop.f32.mrf.mxu0
      %v431 = vadd.f32 %v380, %v430
      %v432 = vpop.f32.mrf.mxu0
      %433 = vdwg.mxu0
      %s434 = scalar_lea.vmem %s2, 2
      %v435 = vld [vmem:[%s434] sm:$0x1]
      %436 = vrot.lane.b32.xlu0 %v311, 126
      %v437 = vpop.permute.xlu0 %436
      %438 = vrot.lane.b32.xlu0 %v312, 126
      %v439 = vpop.permute.xlu0 %438
      %440 = vrot.lane.b32.xlu0 %v313, 126
      %v441 = vpop.permute.xlu0 %440
      %442 = vrot.lane.b32.xlu0 %v305, 126
      %v443 = vpop.permute.xlu0 %442
      %vm444 = vcmask 1031168
      %v445 = vsel %vm444, %v437, %v439
      %v446 = vsel %vm444, %v439, %v441
      %v447 = vsel %vm444, %v441, %v443
      %v449 = vsel %vm330, %v435, 0
      %v452 = vsel %vm334, %v445, 0
      %v455 = vsel %vm334, %v446, 0
      %v458 = vsel %vm334, %v447, 0
      %460 = vmatpush.bf16.msra.mxu0 0
      %461 = vmatpush.bf16.msra.mxu0 0
      %462 = vmatpush.bf16.msra.mxu0 0
      %463 = vmatpush.bf16.msra.mxu0 0
      %464 = vmatpush.bf16.msra.mxu0 0
      %465 = vmatpush.bf16.msra.mxu0 0
      %466 = vmatpush.bf16.msra.mxu0 0
      %467 = vmatpush.bf16.msra.mxu0 %v452
      %468 = vmatmul.bf16.gmra.mxu0 %v449
      %v469 = vpop.f32.mrf.mxu0
      %v470 = vadd.f32 0.0, %v469
      %v471 = vpop.f32.mrf.mxu0
      %472 = vdwg.mxu0
      %473 = vmatpush.bf16.msra.mxu0 0
      %474 = vmatpush.bf16.msra.mxu0 0
      %475 = vmatpush.bf16.msra.mxu0 0
      %476 = vmatpush.bf16.msra.mxu0 0
      %477 = vmatpush.bf16.msra.mxu0 0
      %478 = vmatpush.bf16.msra.mxu0 0
      %479 = vmatpush.bf16.msra.mxu0 0
      %480 = vmatpush.bf16.msra.mxu0 %v455
      %481 = vmatmul.bf16.gmra.mxu0 %v449
      %v482 = vpop.f32.mrf.mxu0
      %v483 = vadd.f32 0.0, %v482
      %v484 = vpop.f32.mrf.mxu0
      %485 = vdwg.mxu0
      %486 = vmatpush.bf16.msra.mxu0 0
      %487 = vmatpush.bf16.msra.mxu0 0
      %488 = vmatpush.bf16.msra.mxu0 0
      %489 = vmatpush.bf16.msra.mxu0 0
      %490 = vmatpush.bf16.msra.mxu0 0
      %491 = vmatpush.bf16.msra.mxu0 0
      %492 = vmatpush.bf16.msra.mxu0 0
      %493 = vmatpush.bf16.msra.mxu0 %v458
      %494 = vmatmul.bf16.gmra.mxu0 %v449
      %v495 = vpop.f32.mrf.mxu0
      %v496 = vadd.f32 0.0, %v495
      %v497 = vpop.f32.mrf.mxu0
      %498 = vdwg.mxu0
      %v499 = vadd.f32 %v405, %v470
      %v500 = vadd.f32 %v418, %v483
      %v501 = vadd.f32 %v431, %v496
      %s502 = scalar_lea.vmem %s2, 3
      %v503 = vld [vmem:[%s502] sm:$0x1]
      %504 = vrot.lane.b32.xlu0 %v311, 110
      %v505 = vpop.permute.xlu0 %504
      %506 = vrot.lane.b32.xlu0 %v312, 110
      %v507 = vpop.permute.xlu0 %506
      %508 = vrot.lane.b32.xlu0 %v313, 110
      %v509 = vpop.permute.xlu0 %508
      %510 = vrot.lane.b32.xlu0 %v305, 110
      %v511 = vpop.permute.xlu0 %510
      %vm512 = vcmask 900096
      %v513 = vsel %vm512, %v505, %v507
      %v514 = vsel %vm512, %v507, %v509
      %v515 = vsel %vm512, %v509, %v511
      %v517 = vsel %vm330, %v503, 0
      %v520 = vsel %vm334, %v513, 0
      %v523 = vsel %vm334, %v514, 0
      %v526 = vsel %vm334, %v515, 0
      %528 = vmatpush.bf16.msra.mxu0 0
      %529 = vmatpush.bf16.msra.mxu0 0
      %530 = vmatpush.bf16.msra.mxu0 0
      %531 = vmatpush.bf16.msra.mxu0 0
      %532 = vmatpush.bf16.msra.mxu0 0
      %533 = vmatpush.bf16.msra.mxu0 0
      %534 = vmatpush.bf16.msra.mxu0 0
      %535 = vmatpush.bf16.msra.mxu0 %v520
      %536 = vmatmul.bf16.gmra.mxu0 %v517
      %v537 = vpop.f32.mrf.mxu0
      %v538 = vadd.f32 0.0, %v537
      %v539 = vpop.f32.mrf.mxu0
      %540 = vdwg.mxu0
      %541 = vmatpush.bf16.msra.mxu0 0
      %542 = vmatpush.bf16.msra.mxu0 0
      %543 = vmatpush.bf16.msra.mxu0 0
      %544 = vmatpush.bf16.msra.mxu0 0
      %545 = vmatpush.bf16.msra.mxu0 0
      %546 = vmatpush.bf16.msra.mxu0 0
      %547 = vmatpush.bf16.msra.mxu0 0
      %548 = vmatpush.bf16.msra.mxu0 %v523
      %549 = vmatmul.bf16.gmra.mxu0 %v517
      %v550 = vpop.f32.mrf.mxu0
      %v551 = vadd.f32 0.0, %v550
      %v552 = vpop.f32.mrf.mxu0
      %553 = vdwg.mxu0
      %554 = vmatpush.bf16.msra.mxu0 0
      %555 = vmatpush.bf16.msra.mxu0 0
      %556 = vmatpush.bf16.msra.mxu0 0
      %557 = vmatpush.bf16.msra.mxu0 0
      %558 = vmatpush.bf16.msra.mxu0 0
      %559 = vmatpush.bf16.msra.mxu0 0
      %560 = vmatpush.bf16.msra.mxu0 0
      %561 = vmatpush.bf16.msra.mxu0 %v526
      %562 = vmatmul.bf16.gmra.mxu0 %v517
      %v563 = vpop.f32.mrf.mxu0
      %v564 = vadd.f32 0.0, %v563
      %v565 = vpop.f32.mrf.mxu0
      %566 = vdwg.mxu0
      %v567 = vadd.f32 %v499, %v538
      %v568 = vadd.f32 %v500, %v551
      %v569 = vadd.f32 %v501, %v564
      %s570 = scalar_lea.vmem %s2, 4
      %v571 = vld [vmem:[%s570] sm:$0x1]
      %572 = vrot.lane.b32.xlu0 %v311, 109
      %v573 = vpop.permute.xlu0 %572
      %574 = vrot.lane.b32.xlu0 %v312, 109
      %v575 = vpop.permute.xlu0 %574
      %576 = vrot.lane.b32.xlu0 %v313, 109
      %v577 = vpop.permute.xlu0 %576
      %578 = vrot.lane.b32.xlu0 %v305, 109
      %v579 = vpop.permute.xlu0 %578
      %vm580 = vcmask 891904
      %v581 = vsel %vm580, %v573, %v575
      %v582 = vsel %vm580, %v575, %v577
      %v583 = vsel %vm580, %v577, %v579
      %v585 = vsel %vm330, %v571, 0
      %v588 = vsel %vm334, %v581, 0
      %v591 = vsel %vm334, %v582, 0
      %v594 = vsel %vm334, %v583, 0
      %596 = vmatpush.bf16.msra.mxu0 0
      %597 = vmatpush.bf16.msra.mxu0 0
      %598 = vmatpush.bf16.msra.mxu0 0
      %599 = vmatpush.bf16.msra.mxu0 0
      %600 = vmatpush.bf16.msra.mxu0 0
      %601 = vmatpush.bf16.msra.mxu0 0
      %602 = vmatpush.bf16.msra.mxu0 0
      %603 = vmatpush.bf16.msra.mxu0 %v588
      %604 = vmatmul.bf16.gmra.mxu0 %v585
      %v605 = vpop.f32.mrf.mxu0
      %v606 = vadd.f32 0.0, %v605
      %v607 = vpop.f32.mrf.mxu0
      %608 = vdwg.mxu0
      %609 = vmatpush.bf16.msra.mxu0 0
      %610 = vmatpush.bf16.msra.mxu0 0
      %611 = vmatpush.bf16.msra.mxu0 0
      %612 = vmatpush.bf16.msra.mxu0 0
      %613 = vmatpush.bf16.msra.mxu0 0
      %614 = vmatpush.bf16.msra.mxu0 0
      %615 = vmatpush.bf16.msra.mxu0 0
      %616 = vmatpush.bf16.msra.mxu0 %v591
      %617 = vmatmul.bf16.gmra.mxu0 %v585
      %v618 = vpop.f32.mrf.mxu0
      %v619 = vadd.f32 0.0, %v618
      %v620 = vpop.f32.mrf.mxu0
      %621 = vdwg.mxu0
      %622 = vmatpush.bf16.msra.mxu0 0
      %623 = vmatpush.bf16.msra.mxu0 0
      %624 = vmatpush.bf16.msra.mxu0 0
      %625 = vmatpush.bf16.msra.mxu0 0
      %626 = vmatpush.bf16.msra.mxu0 0
      %627 = vmatpush.bf16.msra.mxu0 0
      %628 = vmatpush.bf16.msra.mxu0 0
      %629 = vmatpush.bf16.msra.mxu0 %v594
      %630 = vmatmul.bf16.gmra.mxu0 %v585
      %v631 = vpop.f32.mrf.mxu0
      %v632 = vadd.f32 0.0, %v631
      %v633 = vpop.f32.mrf.mxu0
      %634 = vdwg.mxu0
      %v635 = vadd.f32 %v567, %v606
      %v636 = vadd.f32 %v568, %v619
      %v637 = vadd.f32 %v569, %v632
      %s638 = scalar_lea.vmem %s2, 5
      %v639 = vld [vmem:[%s638] sm:$0x1]
      %640 = vrot.lane.b32.xlu0 %v311, 108
      %v641 = vpop.permute.xlu0 %640
      %642 = vrot.lane.b32.xlu0 %v312, 108
      %v643 = vpop.permute.xlu0 %642
      %644 = vrot.lane.b32.xlu0 %v313, 108
      %v645 = vpop.permute.xlu0 %644
      %646 = vrot.lane.b32.xlu0 %v305, 108
      %v647 = vpop.permute.xlu0 %646
      %vm648 = vcmask 883712
      %v649 = vsel %vm648, %v641, %v643
      %v650 = vsel %vm648, %v643, %v645
      %v651 = vsel %vm648, %v645, %v647
      %v653 = vsel %vm330, %v639, 0
      %v656 = vsel %vm334, %v649, 0
      %v659 = vsel %vm334, %v650, 0
      %v662 = vsel %vm334, %v651, 0
      %664 = vmatpush.bf16.msra.mxu0 0
      %665 = vmatpush.bf16.msra.mxu0 0
      %666 = vmatpush.bf16.msra.mxu0 0
      %667 = vmatpush.bf16.msra.mxu0 0
      %668 = vmatpush.bf16.msra.mxu0 0
      %669 = vmatpush.bf16.msra.mxu0 0
      %670 = vmatpush.bf16.msra.mxu0 0
      %671 = vmatpush.bf16.msra.mxu0 %v656
      %672 = vmatmul.bf16.gmra.mxu0 %v653
      %v673 = vpop.f32.mrf.mxu0
      %v674 = vadd.f32 0.0, %v673
      %v675 = vpop.f32.mrf.mxu0
      %676 = vdwg.mxu0
      %677 = vmatpush.bf16.msra.mxu0 0
      %678 = vmatpush.bf16.msra.mxu0 0
      %679 = vmatpush.bf16.msra.mxu0 0
      %680 = vmatpush.bf16.msra.mxu0 0
      %681 = vmatpush.bf16.msra.mxu0 0
      %682 = vmatpush.bf16.msra.mxu0 0
      %683 = vmatpush.bf16.msra.mxu0 0
      %684 = vmatpush.bf16.msra.mxu0 %v659
      %685 = vmatmul.bf16.gmra.mxu0 %v653
      %v686 = vpop.f32.mrf.mxu0
      %v687 = vadd.f32 0.0, %v686
      %v688 = vpop.f32.mrf.mxu0
      %689 = vdwg.mxu0
      %690 = vmatpush.bf16.msra.mxu0 0
      %691 = vmatpush.bf16.msra.mxu0 0
      %692 = vmatpush.bf16.msra.mxu0 0
      %693 = vmatpush.bf16.msra.mxu0 0
      %694 = vmatpush.bf16.msra.mxu0 0
      %695 = vmatpush.bf16.msra.mxu0 0
      %696 = vmatpush.bf16.msra.mxu0 0
      %697 = vmatpush.bf16.msra.mxu0 %v662
      %698 = vmatmul.bf16.gmra.mxu0 %v653
      %v699 = vpop.f32.mrf.mxu0
      %v700 = vadd.f32 0.0, %v699
      %v701 = vpop.f32.mrf.mxu0
      %702 = vdwg.mxu0
      %v703 = vadd.f32 %v635, %v674
      %v704 = vadd.f32 %v636, %v687
      %v705 = vadd.f32 %v637, %v700
      %s706 = scalar_lea.vmem %s2, 6
      %v707 = vld [vmem:[%s706] sm:$0x1]
      %708 = vrot.lane.b32.xlu0 %v311, 92
      %v709 = vpop.permute.xlu0 %708
      %710 = vrot.lane.b32.xlu0 %v312, 92
      %v711 = vpop.permute.xlu0 %710
      %712 = vrot.lane.b32.xlu0 %v313, 92
      %v713 = vpop.permute.xlu0 %712
      %714 = vrot.lane.b32.xlu0 %v305, 92
      %v715 = vpop.permute.xlu0 %714
      %vm716 = vcmask 752640
      %v717 = vsel %vm716, %v709, %v711
      %v718 = vsel %vm716, %v711, %v713
      %v719 = vsel %vm716, %v713, %v715
      %v721 = vsel %vm330, %v707, 0
      %v724 = vsel %vm334, %v717, 0
      %v727 = vsel %vm334, %v718, 0
      %v730 = vsel %vm334, %v719, 0
      %732 = vmatpush.bf16.msra.mxu0 0
      %733 = vmatpush.bf16.msra.mxu0 0
      %734 = vmatpush.bf16.msra.mxu0 0
      %735 = vmatpush.bf16.msra.mxu0 0
      %736 = vmatpush.bf16.msra.mxu0 0
      %737 = vmatpush.bf16.msra.mxu0 0
      %738 = vmatpush.bf16.msra.mxu0 0
      %739 = vmatpush.bf16.msra.mxu0 %v724
      %740 = vmatmul.bf16.gmra.mxu0 %v721
      %v741 = vpop.f32.mrf.mxu0
      %v742 = vadd.f32 0.0, %v741
      %v743 = vpop.f32.mrf.mxu0
      %744 = vdwg.mxu0
      %745 = vmatpush.bf16.msra.mxu0 0
      %746 = vmatpush.bf16.msra.mxu0 0
      %747 = vmatpush.bf16.msra.mxu0 0
      %748 = vmatpush.bf16.msra.mxu0 0
      %749 = vmatpush.bf16.msra.mxu0 0
      %750 = vmatpush.bf16.msra.mxu0 0
      %751 = vmatpush.bf16.msra.mxu0 0
      %752 = vmatpush.bf16.msra.mxu0 %v727
      %753 = vmatmul.bf16.gmra.mxu0 %v721
      %v754 = vpop.f32.mrf.mxu0
      %v755 = vadd.f32 0.0, %v754
      %v756 = vpop.f32.mrf.mxu0
      %757 = vdwg.mxu0
      %758 = vmatpush.bf16.msra.mxu0 0
      %759 = vmatpush.bf16.msra.mxu0 0
      %760 = vmatpush.bf16.msra.mxu0 0
      %761 = vmatpush.bf16.msra.mxu0 0
      %762 = vmatpush.bf16.msra.mxu0 0
      %763 = vmatpush.bf16.msra.mxu0 0
      %764 = vmatpush.bf16.msra.mxu0 0
      %765 = vmatpush.bf16.msra.mxu0 %v730
      %766 = vmatmul.bf16.gmra.mxu0 %v721
      %v767 = vpop.f32.mrf.mxu0
      %v768 = vadd.f32 0.0, %v767
      %v769 = vpop.f32.mrf.mxu0
      %770 = vdwg.mxu0
      %v771 = vadd.f32 %v703, %v742
      %v772 = vadd.f32 %v704, %v755
      %v773 = vadd.f32 %v705, %v768
      %s774 = scalar_lea.vmem %s2, 7
      %v775 = vld [vmem:[%s774] sm:$0x1]
      %776 = vrot.lane.b32.xlu0 %v311, 91
      %v777 = vpop.permute.xlu0 %776
      %778 = vrot.lane.b32.xlu0 %v312, 91
      %v779 = vpop.permute.xlu0 %778
      %780 = vrot.lane.b32.xlu0 %v313, 91
      %v781 = vpop.permute.xlu0 %780
      %782 = vrot.lane.b32.xlu0 %v305, 91
      %v783 = vpop.permute.xlu0 %782
      %vm784 = vcmask 744448
      %v785 = vsel %vm784, %v777, %v779
      %v786 = vsel %vm784, %v779, %v781
      %v787 = vsel %vm784, %v781, %v783
      %v789 = vsel %vm330, %v775, 0
      %v792 = vsel %vm334, %v785, 0
      %v795 = vsel %vm334, %v786, 0
      %v798 = vsel %vm334, %v787, 0
      %800 = vmatpush.bf16.msra.mxu0 0
      %801 = vmatpush.bf16.msra.mxu0 0
      %802 = vmatpush.bf16.msra.mxu0 0
      %803 = vmatpush.bf16.msra.mxu0 0
      %804 = vmatpush.bf16.msra.mxu0 0
      %805 = vmatpush.bf16.msra.mxu0 0
      %806 = vmatpush.bf16.msra.mxu0 0
      %807 = vmatpush.bf16.msra.mxu0 %v792
      %808 = vmatmul.bf16.gmra.mxu0 %v789
      %v809 = vpop.f32.mrf.mxu0
      %v810 = vadd.f32 0.0, %v809
      %v811 = vpop.f32.mrf.mxu0
      %812 = vdwg.mxu0
      %813 = vmatpush.bf16.msra.mxu0 0
      %814 = vmatpush.bf16.msra.mxu0 0
      %815 = vmatpush.bf16.msra.mxu0 0
      %816 = vmatpush.bf16.msra.mxu0 0
      %817 = vmatpush.bf16.msra.mxu0 0
      %818 = vmatpush.bf16.msra.mxu0 0
      %819 = vmatpush.bf16.msra.mxu0 0
      %820 = vmatpush.bf16.msra.mxu0 %v795
      %821 = vmatmul.bf16.gmra.mxu0 %v789
      %v822 = vpop.f32.mrf.mxu0
      %v823 = vadd.f32 0.0, %v822
      %v824 = vpop.f32.mrf.mxu0
      %825 = vdwg.mxu0
      %826 = vmatpush.bf16.msra.mxu0 0
      %827 = vmatpush.bf16.msra.mxu0 0
      %828 = vmatpush.bf16.msra.mxu0 0
      %829 = vmatpush.bf16.msra.mxu0 0
      %830 = vmatpush.bf16.msra.mxu0 0
      %831 = vmatpush.bf16.msra.mxu0 0
      %832 = vmatpush.bf16.msra.mxu0 0
      %833 = vmatpush.bf16.msra.mxu0 %v798
      %834 = vmatmul.bf16.gmra.mxu0 %v789
      %v835 = vpop.f32.mrf.mxu0
      %v836 = vadd.f32 0.0, %v835
      %v837 = vpop.f32.mrf.mxu0
      %838 = vdwg.mxu0
      %v839 = vadd.f32 %v771, %v810
      %v840 = vadd.f32 %v772, %v823
      %v841 = vadd.f32 %v773, %v836
      %s842 = scalar_lea.vmem %s2, 8
      %v843 = vld [vmem:[%s842] sm:$0x1]
      %844 = vrot.lane.b32.xlu0 %v311, 90
      %v845 = vpop.permute.xlu0 %844
      %846 = vrot.lane.b32.xlu0 %v312, 90
      %v847 = vpop.permute.xlu0 %846
      %848 = vrot.lane.b32.xlu0 %v313, 90
      %v849 = vpop.permute.xlu0 %848
      %850 = vrot.lane.b32.xlu0 %v305, 90
      %v851 = vpop.permute.xlu0 %850
      %vm852 = vcmask 736256
      %v853 = vsel %vm852, %v845, %v847
      %v854 = vsel %vm852, %v847, %v849
      %v855 = vsel %vm852, %v849, %v851
      %v857 = vsel %vm330, %v843, 0
      %v860 = vsel %vm334, %v853, 0
      %v863 = vsel %vm334, %v854, 0
      %v866 = vsel %vm334, %v855, 0
      %868 = vmatpush.bf16.msra.mxu0 0
      %869 = vmatpush.bf16.msra.mxu0 0
      %870 = vmatpush.bf16.msra.mxu0 0
      %871 = vmatpush.bf16.msra.mxu0 0
      %872 = vmatpush.bf16.msra.mxu0 0
      %873 = vmatpush.bf16.msra.mxu0 0
      %874 = vmatpush.bf16.msra.mxu0 0
      %875 = vmatpush.bf16.msra.mxu0 %v860
      %876 = vmatmul.bf16.gmra.mxu0 %v857
      %v877 = vpop.f32.mrf.mxu0
      %v878 = vadd.f32 0.0, %v877
      %v879 = vpop.f32.mrf.mxu0
      %880 = vdwg.mxu0
      %881 = vmatpush.bf16.msra.mxu0 0
      %882 = vmatpush.bf16.msra.mxu0 0
      %883 = vmatpush.bf16.msra.mxu0 0
      %884 = vmatpush.bf16.msra.mxu0 0
      %885 = vmatpush.bf16.msra.mxu0 0
      %886 = vmatpush.bf16.msra.mxu0 0
      %887 = vmatpush.bf16.msra.mxu0 0
      %888 = vmatpush.bf16.msra.mxu0 %v863
      %889 = vmatmul.bf16.gmra.mxu0 %v857
      %v890 = vpop.f32.mrf.mxu0
      %v891 = vadd.f32 0.0, %v890
      %v892 = vpop.f32.mrf.mxu0
      %893 = vdwg.mxu0
      %894 = vmatpush.bf16.msra.mxu0 0
      %895 = vmatpush.bf16.msra.mxu0 0
      %896 = vmatpush.bf16.msra.mxu0 0
      %897 = vmatpush.bf16.msra.mxu0 0
      %898 = vmatpush.bf16.msra.mxu0 0
      %899 = vmatpush.bf16.msra.mxu0 0
      %900 = vmatpush.bf16.msra.mxu0 0
      %901 = vmatpush.bf16.msra.mxu0 %v866
      %902 = vmatmul.bf16.gmra.mxu0 %v857
      %v903 = vpop.f32.mrf.mxu0
      %v904 = vadd.f32 0.0, %v903
      %v905 = vpop.f32.mrf.mxu0
      %906 = vdwg.mxu0
      %v907 = vadd.f32 %v839, %v878
      %v908 = vadd.f32 %v840, %v891
      %v909 = vadd.f32 %v841, %v904
      %v910 = vld [vmem:[#allocation2] sm:$0x1]
      %912 = vset.pattern.permute.xlu0 0
      %913 = vperm.xlu0 %912, %v910
      %v914 = vpop.permute.xlu0 %913
      %v916 = vperm.slane %v914, 0
      %v917 = vadd.f32 %v907, %v916
      %v918 = vadd.f32 %v908, %v916
      %v919 = vadd.f32 %v909, %v916
      %v920 = vxor.u32 %v917, 2147483648
      %v921 = vxor.u32 %v918, 2147483648
      %v922 = vxor.u32 %v919, 2147483648
      %v923 = vmul.f32 %v920, 1.442695
      %v924 = vpow.pop %v923
      %v925 = vmul.f32 %v921, 1.442695
      %v926 = vpow.pop %v925
      %v927 = vmul.f32 %v922, 1.442695
      %v928 = vpow.pop %v927
      %v929 = vadd.f32 %v924, 1.0
      %v930 = vadd.f32 %v926, 1.0
      %v931 = vadd.f32 %v928, 1.0
      %v932 = vrcp.pop %v929
      %v933 = vmul.f32 %v929, %v932
      %v934 = vsub.f32 1.0, %v933
      %v935 = vmul.f32 %v932, %v934
      %v936 = vadd.f32 %v932, %v935
      %vm937 = vweird.f32 %v929
      %vm938 = vweird.f32 %v932
      %vm939 = vmor %vm937, %vm938
      %v940 = vsel %vm939, %v932, %v936
      %v941 = vand.u32 2147483647, %v929
      %vm942 = vcmp.eq.f32.partialorder %v941, 8.507059e+37
      %v943 = vand.u32 %v929, 2147483648
      %v944 = vor.u32 1.1754944e-38, %v943
      %v945 = vsel %vm942, %v944, %v940
      %v946 = vmul.f32 1.0, %v945
      %v947 = vrcp.pop %v930
      %v948 = vmul.f32 %v930, %v947
      %v949 = vsub.f32 1.0, %v948
      %v950 = vmul.f32 %v947, %v949
      %v951 = vadd.f32 %v947, %v950
      %vm952 = vweird.f32 %v930
      %vm953 = vweird.f32 %v947
      %vm954 = vmor %vm952, %vm953
      %v955 = vsel %vm954, %v947, %v951
      %v956 = vand.u32 2147483647, %v930
      %vm957 = vcmp.eq.f32.partialorder %v956, 8.507059e+37
      %v958 = vand.u32 %v930, 2147483648
      %v959 = vor.u32 1.1754944e-38, %v958
      %v960 = vsel %vm957, %v959, %v955
      %v961 = vmul.f32 1.0, %v960
      %v962 = vrcp.pop %v931
      %v963 = vmul.f32 %v931, %v962
      %v964 = vsub.f32 1.0, %v963
      %v965 = vmul.f32 %v962, %v964
      %v966 = vadd.f32 %v962, %v965
      %vm967 = vweird.f32 %v931
      %vm968 = vweird.f32 %v962
      %vm969 = vmor %vm967, %vm968
      %v970 = vsel %vm969, %v962, %v966
      %v971 = vand.u32 2147483647, %v931
      %vm972 = vcmp.eq.f32.partialorder %v971, 8.507059e+37
      %v973 = vand.u32 %v931, 2147483648
      %v974 = vor.u32 1.1754944e-38, %v973
      %v975 = vsel %vm972, %v974, %v970
      %v976 = vmul.f32 1.0, %v975
      %v977 = vpack.c.bf16 %v961, %v946
      %v978 = vpack.c.bf16 %v976, %v976
      %v981 = vrot.slane %v977, 3
      %v982 = vrot.slane %v978, 6
      %v983 = vrot.slane %v978, 1
      %vm984 = vcmask 1040384
      %v987 = vsel %vm984, %v977, %v981
      %vm988 = vcmask 1042434
      %v991 = vsel %vm988, %v982, %v983
      %vm992 = vcmask 1041408
      %v993 = vsel %vm992, %v987, %v991
      %vm995 = vcmask 1040384
      %vm996 = vsmask.f32 256
      %vm997 = vmand %vm995, %vm996
      %vm998 = vcmask 1041409
      %vm999 = vsmask.f32 1280
      %vm1000 = vmand %vm998, %vm999
      %vm1001 = vmor %vm1000, %vm997
      %vm1002 = vcmask 1042434
      %vm1003 = vsmask.f32 2304
      %vm1004 = vmand %vm1002, %vm1003
      %vm1005 = vmor %vm1004, %vm1001
      %v1006 = vld [vmem:[%s300] sm:$0x7]
      %v1007 = vsel %vm1005, %v993, %v1006
      %1008 = vst [vmem:[%s300] sm:$0x7] %v1007
      %s1009 = smul.u32 3, %s22
      %p1010 = scmp.lt.s32.totalorder %s21, 1
      %s1011 = scalar_select %p1010, %s21, 1
      %p1012 = scmp.lt.s32.totalorder %s1009, 2
      %s1013 = scalar_select %p1012, %s1009, 2
      %s1014 = smul.addr %s1011, 3
      %s1015 = sadd.s32 %s1013, %s1014
      %s1016 = scalar_lea.vmem %s4, %s1015
      // Predicated region
      $region37: #{att_ffc_forward.6} parent=35 // pred_check
        %p1017 = pneg %p151
      $region38: #{att_ffc_forward.6} parent=35 // pred_check_branch
        %1019 = sbr.rel (%p1017) target = $region40
      $region39: #{att_ffc_forward.6} parent=35 // pred_region
        %s1020 = smul.u32 3, %s22
      $region40: #{att_ffc_forward.6} parent=35 // pred_fallthru
        _
    $region36: #{att_ffc_forward.6} parent=5 // pred_fallthru
      _
    %p1021 = scmp.le.s32.totalorder 2, %s12
    // Predicated region
    $region41: #{att_ffc_forward.6} parent=5 // pred_check
      %p1022 = pneg %p1021
    $region42: #{att_ffc_forward.6} parent=5 // pred_check_branch
      %1024 = sbr.rel (%p1022) target = $region44
    $region43: #{att_ffc_forward.6} parent=5 // pred_region
      %s1025 = ssub.s32 %s12, 2
      // Predicated region
      $region45: #{att_ffc_forward.6} parent=43 // pred_check
        %p1026 = pneg %p157
      $region46: #{att_ffc_forward.6} parent=43 // pred_check_branch
        %1028 = sbr.rel (%p1026) target = $region48
      $region47: #{att_ffc_forward.6} parent=43 // pred_region
        %s1029 = smul.u32 3, %s24
        %p1030 = scmp.lt.s32.totalorder %s23, 1
        %s1031 = scalar_select %p1030, %s23, 1
        %p1032 = scmp.lt.s32.totalorder %s1029, 2
        %s1033 = scalar_select %p1032, %s1029, 2
        %s1034 = smul.addr %s1031, 3
        %s1035 = sadd.s32 %s1033, %s1034
        %s1036 = scalar_lea.vmem %s4, %s1035
      $region48: #{att_ffc_forward.6} parent=43 // pred_fallthru
        _
    $region44: #{att_ffc_forward.6} parent=5 // pred_fallthru
      _
  $region6: #{att_ffc_forward.6} parent=0 // loop_footer
    %s16 = sadd.s32 1, %s12
  $region7: #{att_ffc_forward.6} parent=0 // loop_footer_branch
    %11 = sbr.rel target = $region3
  $region8: #{att_ffc_forward.6} parent=0 // loop_exit
    _

// kernel: att_ffc_forward.7
$region0: #{att_ffc_forward.7}
  #allocation0 [shape = 'u32[]', space=smem, size = 0x4, offset = 0x4, fixed_abs, tag = 'smem constant byte address 0x4 - core index']
  #allocation1 [shape = 'u32[72,128]{1,0:T(1,128)}', space=vmem, size = 0x9000, scoped, tag = 'internal scratch']
  %s0 = inlined_call_operand.vmem [shape: bf16[2,9,512], index: 0, kind: input, shape index: {}, may-alias: {0,1}]
  %s1 = inlined_call_operand.vmem [shape: bf16[2,9,512], index: 1, kind: input, shape index: {}, may-alias: {0,1}]
  %s2 = inlined_call_operand.vmem [shape: bf16[9,8,9], index: 2, kind: input, shape index: {}]
  %s3 = inlined_call_operand.vmem [shape: f32[8,1], index: 3, kind: input, shape index: {}]
  %s4 = inlined_call_operand.vmem [shape: bf16[2,8,384], index: 4, kind: output, shape index: {}]
  %s5 = sld [smem:[#allocation0]]
  $region156: #{att_ffc_forward.7} parent=0
    _
  %s7 = ssub.s32 1, %s5
  %s8 = scalar_select 0, %s7, %s5
  $region1: #{att_ffc_forward.7} parent=0
    #allocation2 [shape = 'u8[24576]{0}', space=vmem, size = 0x6000, scoped, tag = 'input window, operand 0']
    #allocation3 [shape = 'u8[8192]{0}', space=vmem, size = 0x2000, scoped, tag = 'input window, operand 1']
    loop: start=0, step=1, limit=4
    $region2: #{att_ffc_forward.7} parent=1 // loop_pre_header
      _
    $region3: #{att_ffc_forward.7} parent=1 // loop_header
      %s10 = sphi 0, %s14
      %p11 = scmp.ge.s32.totalorder %s10, 4
      %s17 = sphi 0, %s29
      %s18 = sphi 0, %s25
      %s19 = sphi 0, %s17
      %s20 = sphi 0, %s18
      %s21 = sphi 0, %s19
      %s22 = sphi 0, %s20
      %s34 = sphi 0, %s36
      %s37 = sphi 0, %s34
      %s38 = sphi 0, %s37
      %s54 = sphi 0, %s38
      %s66 = sphi 0, %s68
      %s69 = sphi 0, %s66
      %s70 = sphi 0, %s69
      %s86 = sphi 0, %s70
      %s90 = sphi 0, %s90
      %s92 = sphi 0, %s90
      %s93 = sphi 0, %s92
      %s107 = sphi 0, %s93
      %s111 = sphi 0, %s111
      %s113 = sphi 0, %s111
      %s114 = sphi 0, %s113
      %s128 = sphi 0, %s114
      %s136 = sphi 0, %s138
      %s139 = sphi 0, %s136
      %s140 = sphi 0, %s139
      %s156 = sphi 0, %s140
    $region4: #{att_ffc_forward.7} parent=1 // loop_header_branch
      %13 = sbr.rel (%p11) target = $region8
    $region5: #{att_ffc_forward.7} parent=1 // loop_body
      %s15 = ssub.s32 %s10, 1
      %s16 = ssub.s32 %s10, 2
      %s23 = sadd.s32 1, %s18
      %p24 = scmp.ge.s32.totalorder %s23, 1
      %s25 = scalar_select %p24, 0, %s23
      %s26 = sadd.s32 1, %s17
      %s27 = scalar_select %p24, %s26, %s17
      %p28 = scmp.ge.s32.totalorder %s27, 2
      %s29 = scalar_select %p28, 0, %s27
      %s30 = ssub.s32 %s17, %s29
      %s31 = ssub.s32 %s18, %s25
      %s32 = sor.u32 %s30, %s31
      %p33 = scmp.eq.s32.totalorder %s32, 0
      %s35 = sadd.s32 %s34, 1
      %s36 = scalar_select %p33, %s34, %s35
      %p39 = pneg %p33
      %p40 = scmp.eq.s32.totalorder %s10, 1
      %p41 = por %p39, %p40
      %p42 = scmp.ne.s32.totalorder %s34, %s37
      %p43 = scmp.eq.s32.totalorder %s10, 0
      %p44 = por %p42, %p43
      %p45 = scmp.ne.s32.totalorder %s34, %s37
      %p46 = scmp.eq.s32.totalorder %s15, 1
      %p47 = por %p45, %p46
      %p48 = scmp.ne.s32.totalorder %s37, %s38
      %p49 = scmp.eq.s32.totalorder %s15, 0
      %p50 = por %p48, %p49
      %p51 = scmp.ne.s32.totalorder %s37, %s38
      %p52 = scmp.eq.s32.totalorder %s16, 1
      %p53 = por %p51, %p52
      %p55 = scmp.ne.s32.totalorder %s38, %s54
      %p56 = scmp.eq.s32.totalorder %s16, 0
      %p57 = por %p55, %p56
      %s58 = sadd.s32 %s18, 1
      %s59 = smul.u32 %s58, 3
      %s60 = sadd.s32 %s25, 1
      %s61 = smul.u32 %s60, 3
      %s62 = ssub.s32 %s17, %s29
      %s63 = ssub.s32 %s59, %s61
      %s64 = sor.u32 %s62, %s63
      %p65 = scmp.eq.s32.totalorder %s64, 0
      %s67 = sadd.s32 %s66, 1
      %s68 = scalar_select %p65, %s66, %s67
      %p71 = pneg %p65
      %p72 = scmp.eq.s32.totalorder %s10, 1
      %p73 = por %p71, %p72
      %p74 = scmp.ne.s32.totalorder %s66, %s69
      %p75 = scmp.eq.s32.totalorder %s10, 0
      %p76 = por %p74, %p75
      %p77 = scmp.ne.s32.totalorder %s66, %s69
      %p78 = scmp.eq.s32.totalorder %s15, 1
      %p79 = por %p77, %p78
      %p80 = scmp.ne.s32.totalorder %s69, %s70
      %p81 = scmp.eq.s32.totalorder %s15, 0
      %p82 = por %p80, %p81
      %p83 = scmp.ne.s32.totalorder %s69, %s70
      %p84 = scmp.eq.s32.totalorder %s16, 1
      %p85 = por %p83, %p84
      %p87 = scmp.ne.s32.totalorder %s70, %s86
      %p88 = scmp.eq.s32.totalorder %s16, 0
      %p89 = por %p87, %p88
      %s91 = sadd.s32 %s90, 1
      %p94 = scmp.eq.s32.totalorder %s10, 1
      %p95 = scmp.ne.s32.totalorder %s90, %s92
      %p96 = scmp.eq.s32.totalorder %s10, 0
      %p97 = por %p95, %p96
      %p98 = scmp.ne.s32.totalorder %s90, %s92
      %p99 = scmp.eq.s32.totalorder %s15, 1
      %p100 = por %p98, %p99
      %p101 = scmp.ne.s32.totalorder %s92, %s93
      %p102 = scmp.eq.s32.totalorder %s15, 0
      %p103 = por %p101, %p102
      %p104 = scmp.ne.s32.totalorder %s92, %s93
      %p105 = scmp.eq.s32.totalorder %s16, 1
      %p106 = por %p104, %p105
      %p108 = scmp.ne.s32.totalorder %s93, %s107
      %p109 = scmp.eq.s32.totalorder %s16, 0
      %p110 = por %p108, %p109
      %s112 = sadd.s32 %s111, 1
      %p115 = scmp.eq.s32.totalorder %s10, 1
      %p116 = scmp.ne.s32.totalorder %s111, %s113
      %p117 = scmp.eq.s32.totalorder %s10, 0
      %p118 = por %p116, %p117
      %p119 = scmp.ne.s32.totalorder %s111, %s113
      %p120 = scmp.eq.s32.totalorder %s15, 1
      %p121 = por %p119, %p120
      %p122 = scmp.ne.s32.totalorder %s113, %s114
      %p123 = scmp.eq.s32.totalorder %s15, 0
      %p124 = por %p122, %p123
      %p125 = scmp.ne.s32.totalorder %s113, %s114
      %p126 = scmp.eq.s32.totalorder %s16, 1
      %p127 = por %p125, %p126
      %p129 = scmp.ne.s32.totalorder %s114, %s128
      %p130 = scmp.eq.s32.totalorder %s16, 0
      %p131 = por %p129, %p130
      %s132 = ssub.s32 %s17, %s29
      %s133 = ssub.s32 %s18, %s25
      %s134 = sor.u32 %s132, %s133
      %p135 = scmp.eq.s32.totalorder %s134, 0
      %s137 = sadd.s32 %s136, 1
      %s138 = scalar_select %p135, %s136, %s137
      %p141 = pneg %p135
      %p142 = scmp.eq.s32.totalorder %s10, 1
      %p143 = por %p141, %p142
      %p144 = scmp.ne.s32.totalorder %s136, %s139
      %p145 = scmp.eq.s32.totalorder %s10, 0
      %p146 = por %p144, %p145
      %p147 = scmp.ne.s32.totalorder %s136, %s139
      %p148 = scmp.eq.s32.totalorder %s15, 1
      %p149 = por %p147, %p148
      %p150 = scmp.ne.s32.totalorder %s139, %s140
      %p151 = scmp.eq.s32.totalorder %s15, 0
      %p152 = por %p150, %p151
      %p153 = scmp.ne.s32.totalorder %s139, %s140
      %p154 = scmp.eq.s32.totalorder %s16, 1
      %p155 = por %p153, %p154
      %p157 = scmp.ne.s32.totalorder %s140, %s156
      %p158 = scmp.eq.s32.totalorder %s16, 0
      %p159 = por %p157, %p158
      %p160 = scmp.le.s32.totalorder 1, %s10
      %p161 = scmp.lt.s32.totalorder %s10, 3
      %p162 = pnand %p160, %p161
      %p163 = pneg %p162
      // Predicated region
      $region9: #{att_ffc_forward.7} parent=5 // pred_check
        _
      $region10: #{att_ffc_forward.7} parent=5 // pred_check_branch
        %165 = sbr.rel (%p162) target = $region12
      $region11: #{att_ffc_forward.7} parent=5 // pred_region
        %s166 = ssub.s32 %s10, 1
        // Predicated region
        $region13: #{att_ffc_forward.7} parent=11 // pred_check
          %p167 = pneg %p103
        $region14: #{att_ffc_forward.7} parent=11 // pred_check_branch
          %169 = sbr.rel (%p167) target = $region16
        $region15: #{att_ffc_forward.7} parent=11 // pred_region
          _
        $region16: #{att_ffc_forward.7} parent=11 // pred_fallthru
          _
        // Predicated region
        $region17: #{att_ffc_forward.7} parent=11 // pred_check
          %p170 = pneg %p124
        $region18: #{att_ffc_forward.7} parent=11 // pred_check_branch
          %172 = sbr.rel (%p170) target = $region20
        $region19: #{att_ffc_forward.7} parent=11 // pred_region
          _
        $region20: #{att_ffc_forward.7} parent=11 // pred_fallthru
          _
      $region12: #{att_ffc_forward.7} parent=5 // pred_fallthru
        _
      %p173 = scmp.lt.s32.totalorder %s10, 2
      // Predicated region
      $region21: #{att_ffc_forward.7} parent=5 // pred_check
        %p174 = pneg %p173
      $region22: #{att_ffc_forward.7} parent=5 // pred_check_branch
        %176 = sbr.rel (%p174) target = $region24
      $region23: #{att_ffc_forward.7} parent=5 // pred_region
        // Predicated region
        $region25: #{att_ffc_forward.7} parent=23 // pred_check
          %p177 = pneg %p44
        $region26: #{att_ffc_forward.7} parent=23 // pred_check_branch
          %179 = sbr.rel (%p177) target = $region28
        $region27: #{att_ffc_forward.7} parent=23 // pred_region
          %s180 = sand.u32 %s34, 1
          %s181 = sand.u32 %s34, 1
          %s182 = smul.addr %s181, 24
          %s183 = scalar_lea.vmem [#allocation2], %s182
          %s184 = smul.u32 3, %s18
          %s185 = ssub.s32 4, %s184
          %p186 = scmp.lt.s32.totalorder %s185, 3
          %s187 = scalar_select %p186, %s185, 3
          %s188 = smul.u32 8, %s187
          %p189 = scmp.ne.s32.totalorder 0, %s188
          %s190 = smul.addr %s17, 8
          %s191 = sadd.s32 %s184, %s190
          %s192 = smul.addr %s191, 4
          %s193 = scalar_lea.vmem %s0, %s192
          %s194 = smul.u32 %s187, 4
          // Predicated region
          $region29: #{att_ffc_forward.7} parent=27 // pred_check
            %p195 = pneg %p189
          $region30: #{att_ffc_forward.7} parent=27 // pred_check_branch
            %197 = sbr.rel (%p195) target = $region32
          $region31: #{att_ffc_forward.7} parent=27 // pred_region
            %p198 = scmp.lt.u32.totalorder %s194, 8
            %p199 = pneg %p198
            // Predicated region
            $region33: #{att_ffc_forward.7} parent=31 // pred_check
              _
            $region34: #{att_ffc_forward.7} parent=31 // pred_check_branch
              %201 = sbr.rel (%p198) target = $region36
            $region35: #{att_ffc_forward.7} parent=31 // pred_region
              %s219 = sand.u32 %s194, 7
              %p220 = scmp.eq.s32.totalorder %s219, 0
              // Predicated region
              $region48: #{att_ffc_forward.7} parent=35 // pred_check
                %p221 = pneg %p220
              $region49: #{att_ffc_forward.7} parent=35 // pred_check_branch
                %223 = sbr.rel (%p221) target = $region51
              $region50: #{att_ffc_forward.7} parent=35 // pred_region
                %s224 = sshrl.u32 %s194, 3
                %s225 = sshrl.u32 %s224, 4
                // While loop
                $region52: #{att_ffc_forward.7} parent=50 // loop_pre_header
                  _
                $region53: #{att_ffc_forward.7} parent=50 // loop_header
                  %s227 = sphi 0, %s229
                  %p228 = scmp.ge.s32.totalorder %s227, %s225
                  %s232 = sphi 0, %s301
                  %s233 = sphi %s193, %s304
                  %s234 = sphi %s183, %s305
                $region54: #{att_ffc_forward.7} parent=50 // loop_header_branch
                  %231 = sbr.rel (%p228) target = $region58
                $region55: #{att_ffc_forward.7} parent=50 // loop_body
                  %v235 = vld [vmem:[%s233] sm:$0xff]
                  %236 = vst [vmem:[%s234] sm:$0xff] %v235
                  %v237 = vld [vmem:[%s233 + $0x8] sm:$0xff]
                  %238 = vst [vmem:[%s234 + $0x8] sm:$0xff] %v237
                  %v239 = vld [vmem:[%s233 + $0x10] sm:$0xff]
                  %240 = vst [vmem:[%s234 + $0x10] sm:$0xff] %v239
                  %v241 = vld [vmem:[%s233 + $0x18] sm:$0xff]
                  %242 = vst [vmem:[%s234 + $0x18] sm:$0xff] %v241
                  %v243 = vld [vmem:[%s233 + $0x20] sm:$0xff]
                  %244 = vst [vmem:[%s234 + $0x20] sm:$0xff] %v243
                  %v245 = vld [vmem:[%s233 + $0x28] sm:$0xff]
                  %246 = vst [vmem:[%s234 + $0x28] sm:$0xff] %v245
                  %v247 = vld [vmem:[%s233 + $0x30] sm:$0xff]
                  %248 = vst [vmem:[%s234 + $0x30] sm:$0xff] %v247
                  %v249 = vld [vmem:[%s233 + $0x38] sm:$0xff]
                  %250 = vst [vmem:[%s234 + $0x38] sm:$0xff] %v249
                  %v251 = vld [vmem:[%s233 + $0x40] sm:$0xff]
                  %252 = vst [vmem:[%s234 + $0x40] sm:$0xff] %v251
                  %v253 = vld [vmem:[%s233 + $0x48] sm:$0xff]
                  %254 = vst [vmem:[%s234 + $0x48] sm:$0xff] %v253
                  %v255 = vld [vmem:[%s233 + $0x50] sm:$0xff]
                  %256 = vst [vmem:[%s234 + $0x50] sm:$0xff] %v255
                  %v257 = vld [vmem:[%s233 + $0x58] sm:$0xff]
                  %258 = vst [vmem:[%s234 + $0x58] sm:$0xff] %v257
                  %v259 = vld [vmem:[%s233 + $0x60] sm:$0xff]
                  %260 = vst [vmem:[%s234 + $0x60] sm:$0xff] %v259
                  %v261 = vld [vmem:[%s233 + $0x68] sm:$0xff]
                  %262 = vst [vmem:[%s234 + $0x68] sm:$0xff] %v261
                  %v263 = vld [vmem:[%s233 + $0x70] sm:$0xff]
                  %264 = vst [vmem:[%s234 + $0x70] sm:$0xff] %v263
                  %v265 = vld [vmem:[%s233 + $0x78] sm:$0xff]
                  %266 = vst [vmem:[%s234 + $0x78] sm:$0xff] %v265
                  %v267 = vld [vmem:[%s233 + $0x10] sm:$0xff]
                  %268 = vst [vmem:[%s234 + $0xc] sm:$0xff] %v267
                  %v269 = vld [vmem:[%s233 + $0x18] sm:$0xff]
                  %270 = vst [vmem:[%s234 + $0x14] sm:$0xff] %v269
                  %v271 = vld [vmem:[%s233 + $0x20] sm:$0xff]
                  %272 = vst [vmem:[%s234 + $0x1c] sm:$0xff] %v271
                  %v273 = vld [vmem:[%s233 + $0x28] sm:$0xff]
                  %274 = vst [vmem:[%s234 + $0x24] sm:$0xff] %v273
                  %v275 = vld [vmem:[%s233 + $0x30] sm:$0xff]
                  %276 = vst [vmem:[%s234 + $0x2c] sm:$0xff] %v275
                  %v277 = vld [vmem:[%s233 + $0x38] sm:$0xff]
                  %278 = vst [vmem:[%s234 + $0x34] sm:$0xff] %v277
                  %v279 = vld [vmem:[%s233 + $0x40] sm:$0xff]
                  %280 = vst [vmem:[%s234 + $0x3c] sm:$0xff] %v279
                  %v281 = vld [vmem:[%s233 + $0x48] sm:$0xff]
                  %282 = vst [vmem:[%s234 + $0x44] sm:$0xff] %v281
                  %v283 = vld [vmem:[%s233 + $0x50] sm:$0xff]
                  %284 = vst [vmem:[%s234 + $0x4c] sm:$0xff] %v283
                  %v285 = vld [vmem:[%s233 + $0x58] sm:$0xff]
                  %286 = vst [vmem:[%s234 + $0x54] sm:$0xff] %v285
                  %v287 = vld [vmem:[%s233 + $0x60] sm:$0xff]
                  %288 = vst [vmem:[%s234 + $0x5c] sm:$0xff] %v287
                  %v289 = vld [vmem:[%s233 + $0x68] sm:$0xff]
                  %290 = vst [vmem:[%s234 + $0x64] sm:$0xff] %v289
                  %v291 = vld [vmem:[%s233 + $0x70] sm:$0xff]
                  %292 = vst [vmem:[%s234 + $0x6c] sm:$0xff] %v291
                  %v293 = vld [vmem:[%s233 + $0x78] sm:$0xff]
                  %294 = vst [vmem:[%s234 + $0x74] sm:$0xff] %v293
                  %v295 = vld [vmem:[%s233 + $0x80] sm:$0xff]
                  %296 = vst [vmem:[%s234 + $0x7c] sm:$0xff] %v295
                  %v297 = vld [vmem:[%s233 + $0x88] sm:$0xff]
                  %298 = vst [vmem:[%s234 + $0x84] sm:$0xff] %v297
                  %s299 = sadd.s32 1, %s232
                  %p300 = scmp.ge.s32.totalorder %s299, %s225
                  %s301 = scalar_select %p300, 0, %s299
                  %s302 = smul.u32 %s301, 128
                  %s303 = smul.u32 %s301, 128
                  %s304 = scalar_lea.vmem %s193, %s302
                  %s305 = scalar_lea.vmem %s183, %s303 [#allocation2]
                $region56: #{att_ffc_forward.7} parent=50 // loop_footer
                  %s229 = sadd.s32 %s227, 1
                $region57: #{att_ffc_forward.7} parent=50 // loop_footer_branch
                  %226 = sbr.rel target = $region53
                $region58: #{att_ffc_forward.7} parent=50 // loop_exit
                  _
                %s306 = sshrl.u32 %s224, 4
                %s307 = sand.u32 %s224, 15
                %s308 = smul.u32 %s306, 16
                %s309 = smul.u32 8, %s308
                %s310 = scalar_lea.vmem %s193, %s309
                %s311 = smul.u32 8, %s308
                %s312 = scalar_lea.vmem %s183, %s311 [#allocation2]
                // While loop
                $region59: #{att_ffc_forward.7} parent=50 // loop_pre_header
                  _
                $region60: #{att_ffc_forward.7} parent=50 // loop_header
                  %s314 = sphi 0, %s316
                  %p315 = scmp.ge.s32.totalorder %s314, %s307
                  %s319 = sphi 0, %s328
                  %s320 = sphi %s310, %s331
                  %s321 = sphi %s312, %s332
                $region61: #{att_ffc_forward.7} parent=50 // loop_header_branch
                  %318 = sbr.rel (%p315) target = $region65
                $region62: #{att_ffc_forward.7} parent=50 // loop_body
                  %v322 = vld [vmem:[%s320] sm:$0xff]
                  %323 = vst [vmem:[%s321] sm:$0xff] %v322
                  %v324 = vld [vmem:[%s320 + $0x10] sm:$0xff]
                  %325 = vst [vmem:[%s321 + $0xc] sm:$0xff] %v324
                  %s326 = sadd.s32 1, %s319
                  %p327 = scmp.ge.s32.totalorder %s326, %s307
                  %s328 = scalar_select %p327, 0, %s326
                  %s329 = smul.u32 %s328, 8
                  %s330 = smul.u32 %s328, 8
                  %s331 = scalar_lea.vmem %s310, %s329
                  %s332 = scalar_lea.vmem %s312, %s330 [#allocation2]
                $region63: #{att_ffc_forward.7} parent=50 // loop_footer
                  %s316 = sadd.s32 %s314, 1
                $region64: #{att_ffc_forward.7} parent=50 // loop_footer_branch
                  %313 = sbr.rel target = $region60
                $region65: #{att_ffc_forward.7} parent=50 // loop_exit
                  _
              $region51: #{att_ffc_forward.7} parent=35 // pred_fallthru
                _
              %p333 = pneg %p220
              // Predicated region
              $region66: #{att_ffc_forward.7} parent=35 // pred_check
                _
              $region67: #{att_ffc_forward.7} parent=35 // pred_check_branch
                %335 = sbr.rel (%p220) target = $region69
              $region68: #{att_ffc_forward.7} parent=35 // pred_region
                %s336 = sand.u32 %s194, 7
                %s337 = ssub.s32 %s194, %s336
                %s338 = scalar_lea.vmem %s193, %s337
                %s339 = ssub.s32 %s194, %s336
                %s340 = scalar_lea.vmem %s183, %s339 [#allocation2]
                %s341 = sshrl.u32 %s194, 3
                %s342 = sshrl.u32 %s341, 4
                // While loop
                $region70: #{att_ffc_forward.7} parent=68 // loop_pre_header
                  _
                $region71: #{att_ffc_forward.7} parent=68 // loop_header
                  %s344 = sphi 0, %s346
                  %p345 = scmp.ge.s32.totalorder %s344, %s342
                  %s349 = sphi 0, %s418
                  %s350 = sphi %s193, %s421
                  %s351 = sphi %s183, %s422
                $region72: #{att_ffc_forward.7} parent=68 // loop_header_branch
                  %348 = sbr.rel (%p345) target = $region76
                $region73: #{att_ffc_forward.7} parent=68 // loop_body
                  %v352 = vld [vmem:[%s350] sm:$0xff]
                  %353 = vst [vmem:[%s351] sm:$0xff] %v352
                  %v354 = vld [vmem:[%s350 + $0x8] sm:$0xff]
                  %355 = vst [vmem:[%s351 + $0x8] sm:$0xff] %v354
                  %v356 = vld [vmem:[%s350 + $0x10] sm:$0xff]
                  %357 = vst [vmem:[%s351 + $0x10] sm:$0xff] %v356
                  %v358 = vld [vmem:[%s350 + $0x18] sm:$0xff]
                  %359 = vst [vmem:[%s351 + $0x18] sm:$0xff] %v358
                  %v360 = vld [vmem:[%s350 + $0x20] sm:$0xff]
                  %361 = vst [vmem:[%s351 + $0x20] sm:$0xff] %v360
                  %v362 = vld [vmem:[%s350 + $0x28] sm:$0xff]
                  %363 = vst [vmem:[%s351 + $0x28] sm:$0xff] %v362
                  %v364 = vld [vmem:[%s350 + $0x30] sm:$0xff]
                  %365 = vst [vmem:[%s351 + $0x30] sm:$0xff] %v364
                  %v366 = vld [vmem:[%s350 + $0x38] sm:$0xff]
                  %367 = vst [vmem:[%s351 + $0x38] sm:$0xff] %v366
                  %v368 = vld [vmem:[%s350 + $0x40] sm:$0xff]
                  %369 = vst [vmem:[%s351 + $0x40] sm:$0xff] %v368
                  %v370 = vld [vmem:[%s350 + $0x48] sm:$0xff]
                  %371 = vst [vmem:[%s351 + $0x48] sm:$0xff] %v370
                  %v372 = vld [vmem:[%s350 + $0x50] sm:$0xff]
                  %373 = vst [vmem:[%s351 + $0x50] sm:$0xff] %v372
                  %v374 = vld [vmem:[%s350 + $0x58] sm:$0xff]
                  %375 = vst [vmem:[%s351 + $0x58] sm:$0xff] %v374
                  %v376 = vld [vmem:[%s350 + $0x60] sm:$0xff]
                  %377 = vst [vmem:[%s351 + $0x60] sm:$0xff] %v376
                  %v378 = vld [vmem:[%s350 + $0x68] sm:$0xff]
                  %379 = vst [vmem:[%s351 + $0x68] sm:$0xff] %v378
                  %v380 = vld [vmem:[%s350 + $0x70] sm:$0xff]
                  %381 = vst [vmem:[%s351 + $0x70] sm:$0xff] %v380
                  %v382 = vld [vmem:[%s350 + $0x78] sm:$0xff]
                  %383 = vst [vmem:[%s351 + $0x78] sm:$0xff] %v382
                  %v384 = vld [vmem:[%s350 + $0x10] sm:$0xff]
                  %385 = vst [vmem:[%s351 + $0xc] sm:$0xff] %v384
                  %v386 = vld [vmem:[%s350 + $0x18] sm:$0xff]
                  %387 = vst [vmem:[%s351 + $0x14] sm:$0xff] %v386
                  %v388 = vld [vmem:[%s350 + $0x20] sm:$0xff]
                  %389 = vst [vmem:[%s351 + $0x1c] sm:$0xff] %v388
                  %v390 = vld [vmem:[%s350 + $0x28] sm:$0xff]
                  %391 = vst [vmem:[%s351 + $0x24] sm:$0xff] %v390
                  %v392 = vld [vmem:[%s350 + $0x30] sm:$0xff]
                  %393 = vst [vmem:[%s351 + $0x2c] sm:$0xff] %v392
                  %v394 = vld [vmem:[%s350 + $0x38] sm:$0xff]
                  %395 = vst [vmem:[%s351 + $0x34] sm:$0xff] %v394
                  %v396 = vld [vmem:[%s350 + $0x40] sm:$0xff]
                  %397 = vst [vmem:[%s351 + $0x3c] sm:$0xff] %v396
                  %v398 = vld [vmem:[%s350 + $0x48] sm:$0xff]
                  %399 = vst [vmem:[%s351 + $0x44] sm:$0xff] %v398
                  %v400 = vld [vmem:[%s350 + $0x50] sm:$0xff]
                  %401 = vst [vmem:[%s351 + $0x4c] sm:$0xff] %v400
                  %v402 = vld [vmem:[%s350 + $0x58] sm:$0xff]
                  %403 = vst [vmem:[%s351 + $0x54] sm:$0xff] %v402
                  %v404 = vld [vmem:[%s350 + $0x60] sm:$0xff]
                  %405 = vst [vmem:[%s351 + $0x5c] sm:$0xff] %v404
                  %v406 = vld [vmem:[%s350 + $0x68] sm:$0xff]
                  %407 = vst [vmem:[%s351 + $0x64] sm:$0xff] %v406
                  %v408 = vld [vmem:[%s350 + $0x70] sm:$0xff]
                  %409 = vst [vmem:[%s351 + $0x6c] sm:$0xff] %v408
                  %v410 = vld [vmem:[%s350 + $0x78] sm:$0xff]
                  %411 = vst [vmem:[%s351 + $0x74] sm:$0xff] %v410
                  %v412 = vld [vmem:[%s350 + $0x80] sm:$0xff]
                  %413 = vst [vmem:[%s351 + $0x7c] sm:$0xff] %v412
                  %v414 = vld [vmem:[%s350 + $0x88] sm:$0xff]
                  %415 = vst [vmem:[%s351 + $0x84] sm:$0xff] %v414
                  %s416 = sadd.s32 1, %s349
                  %p417 = scmp.ge.s32.totalorder %s416, %s342
                  %s418 = scalar_select %p417, 0, %s416
                  %s419 = smul.u32 %s418, 128
                  %s420 = smul.u32 %s418, 128
                  %s421 = scalar_lea.vmem %s193, %s419
                  %s422 = scalar_lea.vmem %s183, %s420 [#allocation2]
                $region74: #{att_ffc_forward.7} parent=68 // loop_footer
                  %s346 = sadd.s32 %s344, 1
                $region75: #{att_ffc_forward.7} parent=68 // loop_footer_branch
                  %343 = sbr.rel target = $region71
                $region76: #{att_ffc_forward.7} parent=68 // loop_exit
                  _
                %s423 = sshrl.u32 %s341, 4
                %s424 = sand.u32 %s341, 15
                %s425 = smul.u32 %s423, 16
                %s426 = smul.u32 8, %s425
                %s427 = scalar_lea.vmem %s193, %s426
                %s428 = smul.u32 8, %s425
                %s429 = scalar_lea.vmem %s183, %s428 [#allocation2]
                // While loop
                $region77: #{att_ffc_forward.7} parent=68 // loop_pre_header
                  _
                $region78: #{att_ffc_forward.7} parent=68 // loop_header
                  %s431 = sphi 0, %s433
                  %p432 = scmp.ge.s32.totalorder %s431, %s424
                  %s436 = sphi 0, %s445
                  %s437 = sphi %s427, %s448
                  %s438 = sphi %s429, %s449
                $region79: #{att_ffc_forward.7} parent=68 // loop_header_branch
                  %435 = sbr.rel (%p432) target = $region83
                $region80: #{att_ffc_forward.7} parent=68 // loop_body
                  %v439 = vld [vmem:[%s437] sm:$0xff]
                  %440 = vst [vmem:[%s438] sm:$0xff] %v439
                  %v441 = vld [vmem:[%s437 + $0x10] sm:$0xff]
                  %442 = vst [vmem:[%s438 + $0xc] sm:$0xff] %v441
                  %s443 = sadd.s32 1, %s436
                  %p444 = scmp.ge.s32.totalorder %s443, %s424
                  %s445 = scalar_select %p444, 0, %s443
                  %s446 = smul.u32 %s445, 8
                  %s447 = smul.u32 %s445, 8
                  %s448 = scalar_lea.vmem %s427, %s446
                  %s449 = scalar_lea.vmem %s429, %s447 [#allocation2]
                $region81: #{att_ffc_forward.7} parent=68 // loop_footer
                  %s433 = sadd.s32 %s431, 1
                $region82: #{att_ffc_forward.7} parent=68 // loop_footer_branch
                  %430 = sbr.rel target = $region78
                $region83: #{att_ffc_forward.7} parent=68 // loop_exit
                  _
                %s450 = sshll.u32 1, %s336
                %s451 = ssub.s32 %s450, 1
                loop: start=0, step=1, limit=1
                $region84: #{att_ffc_forward.7} parent=68 // loop_pre_header
                  _
                $region85: #{att_ffc_forward.7} parent=68 // loop_header
                  %s453 = sphi 0, %s457
                  %p454 = scmp.ge.s32.totalorder %s453, 1
                  %s458 = sphi %s338, %s338
                  %s459 = sphi %s340, %s340
                $region86: #{att_ffc_forward.7} parent=68 // loop_header_branch
                  %456 = sbr.rel (%p454) target = $region90
                $region87: #{att_ffc_forward.7} parent=68 // loop_body
                  %v460 = vld [vmem:[%s458] sm:%s451]
                  %461 = vst [vmem:[%s459] sm:%s451] %v460
                  %v462 = vld [vmem:[%s458 + $0x10] sm:%s451]
                  %463 = vst [vmem:[%s459 + $0xc] sm:%s451] %v462
                $region88: #{att_ffc_forward.7} parent=68 // loop_footer
                  %s457 = sadd.s32 1, %s453
                $region89: #{att_ffc_forward.7} parent=68 // loop_footer_branch
                  %452 = sbr.rel target = $region85
                $region90: #{att_ffc_forward.7} parent=68 // loop_exit
                  _
              $region69: #{att_ffc_forward.7} parent=35 // pred_fallthru
                _
            $region36: #{att_ffc_forward.7} parent=31 // pred_fallthru
              _
            // Predicated region
            $region37: #{att_ffc_forward.7} parent=31 // pred_check
              %p202 = pneg %p198
            $region38: #{att_ffc_forward.7} parent=31 // pred_check_branch
              %204 = sbr.rel (%p202) target = $region40
            $region39: #{att_ffc_forward.7} parent=31 // pred_region
              %s205 = sshll.u32 1, %s194
              %s206 = ssub.s32 %s205, 1
              loop: start=0, step=1, limit=1
              $region41: #{att_ffc_forward.7} parent=39 // loop_pre_header
                _
              $region42: #{att_ffc_forward.7} parent=39 // loop_header
                %s208 = sphi 0, %s212
                %p209 = scmp.ge.s32.totalorder %s208, 1
                %s213 = sphi %s193, %s193
                %s214 = sphi %s183, %s183
              $region43: #{att_ffc_forward.7} parent=39 // loop_header_branch
                %211 = sbr.rel (%p209) target = $region47
              $region44: #{att_ffc_forward.7} parent=39 // loop_body
                %v215 = vld [vmem:[%s213] sm:%s206]
                %216 = vst [vmem:[%s214] sm:%s206] %v215
                %v217 = vld [vmem:[%s213 + $0x10] sm:%s206]
                %218 = vst [vmem:[%s214 + $0xc] sm:%s206] %v217
              $region45: #{att_ffc_forward.7} parent=39 // loop_footer
                %s212 = sadd.s32 1, %s208
              $region46: #{att_ffc_forward.7} parent=39 // loop_footer_branch
                %207 = sbr.rel target = $region42
              $region47: #{att_ffc_forward.7} parent=39 // loop_exit
                _
            $region40: #{att_ffc_forward.7} parent=31 // pred_fallthru
              _
          $region32: #{att_ffc_forward.7} parent=27 // pred_fallthru
            _
          %464 = vnop
        $region28: #{att_ffc_forward.7} parent=23 // pred_fallthru
          _
        // Predicated region
        $region91: #{att_ffc_forward.7} parent=23 // pred_check
          %p465 = pneg %p76
        $region92: #{att_ffc_forward.7} parent=23 // pred_check_branch
          %467 = sbr.rel (%p465) target = $region94
        $region93: #{att_ffc_forward.7} parent=23 // pred_region
          %s468 = sand.u32 %s66, 1
          %s469 = sand.u32 %s66, 1
          %s470 = smul.addr %s469, 8
          %s471 = scalar_lea.vmem [#allocation3], %s470
          %s472 = sadd.s32 %s18, 1
          %s473 = smul.u32 %s472, 3
          %s474 = smul.addr %s17, 8
          %s475 = sadd.s32 %s473, %s474
          %s476 = smul.addr %s475, 4
          %s477 = scalar_lea.vmem %s1, %s476
          // Predicated region
          $region95: #{att_ffc_forward.7} parent=93 // pred_check
            _
          $region96: #{att_ffc_forward.7} parent=93 // pred_check_branch
            %479 = sbr.rel (0) target = $region98
          $region97: #{att_ffc_forward.7} parent=93 // pred_region
            // Predicated region
            $region99: #{att_ffc_forward.7} parent=97 // pred_check
              _
            $region100: #{att_ffc_forward.7} parent=97 // pred_check_branch
              %481 = sbr.rel target = $region102
            $region101: #{att_ffc_forward.7} parent=97 // pred_region
              // Predicated region
              $region114: #{att_ffc_forward.7} parent=101 // pred_check
                _
              $region115: #{att_ffc_forward.7} parent=101 // pred_check_branch
                %499 = sbr.rel (0) target = $region117
              $region116: #{att_ffc_forward.7} parent=101 // pred_region
                loop: start=0, step=1, limit=1
                $region118: #{att_ffc_forward.7} parent=116 // loop_pre_header
                  _
                $region119: #{att_ffc_forward.7} parent=116 // loop_header
                  %s501 = sphi 0, %s505
                  %p502 = scmp.ge.s32.totalorder %s501, 1
                  %s506 = sphi %s477, %s477
                  %s507 = sphi %s471, %s471
                $region120: #{att_ffc_forward.7} parent=116 // loop_header_branch
                  %504 = sbr.rel (%p502) target = $region124
                $region121: #{att_ffc_forward.7} parent=116 // loop_body
                  _
                $region122: #{att_ffc_forward.7} parent=116 // loop_footer
                  %s505 = sadd.s32 1, %s501
                $region123: #{att_ffc_forward.7} parent=116 // loop_footer_branch
                  %500 = sbr.rel target = $region119
                $region124: #{att_ffc_forward.7} parent=116 // loop_exit
                  _
                %s509 = ssub.s32 16, 1
                loop: start=0, step=1, limit=1
                $region125: #{att_ffc_forward.7} parent=116 // loop_pre_header
                  _
                $region126: #{att_ffc_forward.7} parent=116 // loop_header
                  %s511 = sphi 0, %s515
                  %p512 = scmp.ge.s32.totalorder %s511, 1
                  %s516 = sphi %s477, %s477
                  %s517 = sphi %s471, %s471
                $region127: #{att_ffc_forward.7} parent=116 // loop_header_branch
                  %514 = sbr.rel (%p512) target = $region131
                $region128: #{att_ffc_forward.7} parent=116 // loop_body
                  %v518 = vld [vmem:[%s516] sm:%s509]
                  %519 = vst [vmem:[%s517] sm:%s509] %v518
                  %v520 = vld [vmem:[%s516 + $0x10] sm:%s509]
                  %521 = vst [vmem:[%s517 + $0x4] sm:%s509] %v520
                $region129: #{att_ffc_forward.7} parent=116 // loop_footer
                  %s515 = sadd.s32 1, %s511
                $region130: #{att_ffc_forward.7} parent=116 // loop_footer_branch
                  %510 = sbr.rel target = $region126
                $region131: #{att_ffc_forward.7} parent=116 // loop_exit
                  _
              $region117: #{att_ffc_forward.7} parent=101 // pred_fallthru
                _
            $region102: #{att_ffc_forward.7} parent=97 // pred_fallthru
              _
            // Predicated region
            $region103: #{att_ffc_forward.7} parent=97 // pred_check
              _
            $region104: #{att_ffc_forward.7} parent=97 // pred_check_branch
              %483 = sbr.rel (0) target = $region106
            $region105: #{att_ffc_forward.7} parent=97 // pred_region
              %s485 = ssub.s32 16, 1
              loop: start=0, step=1, limit=1
              $region107: #{att_ffc_forward.7} parent=105 // loop_pre_header
                _
              $region108: #{att_ffc_forward.7} parent=105 // loop_header
                %s487 = sphi 0, %s491
                %p488 = scmp.ge.s32.totalorder %s487, 1
                %s492 = sphi %s477, %s477
                %s493 = sphi %s471, %s471
              $region109: #{att_ffc_forward.7} parent=105 // loop_header_branch
                %490 = sbr.rel (%p488) target = $region113
              $region110: #{att_ffc_forward.7} parent=105 // loop_body
                %v494 = vld [vmem:[%s492] sm:%s485]
                %495 = vst [vmem:[%s493] sm:%s485] %v494
                %v496 = vld [vmem:[%s492 + $0x10] sm:%s485]
                %497 = vst [vmem:[%s493 + $0x4] sm:%s485] %v496
              $region111: #{att_ffc_forward.7} parent=105 // loop_footer
                %s491 = sadd.s32 1, %s487
              $region112: #{att_ffc_forward.7} parent=105 // loop_footer_branch
                %486 = sbr.rel target = $region108
              $region113: #{att_ffc_forward.7} parent=105 // loop_exit
                _
            $region106: #{att_ffc_forward.7} parent=97 // pred_fallthru
              _
          $region98: #{att_ffc_forward.7} parent=93 // pred_fallthru
            _
          %522 = vnop
        $region94: #{att_ffc_forward.7} parent=23 // pred_fallthru
          _
      $region24: #{att_ffc_forward.7} parent=5 // pred_fallthru
        _
      %p523 = scmp.le.s32.totalorder 1, %s10
      %p524 = scmp.lt.s32.totalorder %s10, 3
      %p525 = pnand %p523, %p524
      %p526 = pneg %p525
      // Predicated region
      $region132: #{att_ffc_forward.7} parent=5 // pred_check
        _
      $region133: #{att_ffc_forward.7} parent=5 // pred_check_branch
        %528 = sbr.rel (%p525) target = $region135
      $region134: #{att_ffc_forward.7} parent=5 // pred_region
        %s529 = ssub.s32 %s10, 1
        %s530 = sand.u32 %s37, 1
        %s531 = sand.u32 %s37, 1
        %s532 = smul.addr %s531, 24
        %s533 = scalar_lea.vmem [#allocation2], %s532
        // Predicated region
        $region136: #{att_ffc_forward.7} parent=134 // pred_check
          %p534 = pneg %p50
        $region137: #{att_ffc_forward.7} parent=134 // pred_check_branch
          %536 = sbr.rel (%p534) target = $region139
        $region138: #{att_ffc_forward.7} parent=134 // pred_region
          _
        $region139: #{att_ffc_forward.7} parent=134 // pred_fallthru
          _
        %s537 = sand.u32 %s69, 1
        %s538 = sand.u32 %s69, 1
        %s539 = smul.addr %s538, 8
        %s540 = scalar_lea.vmem [#allocation3], %s539
        // Predicated region
        $region140: #{att_ffc_forward.7} parent=134 // pred_check
          %p541 = pneg %p82
        $region141: #{att_ffc_forward.7} parent=134 // pred_check_branch
          %543 = sbr.rel (%p541) target = $region143
        $region142: #{att_ffc_forward.7} parent=134 // pred_region
          _
        $region143: #{att_ffc_forward.7} parent=134 // pred_fallthru
          _
        %s544 = sand.u32 %s37, 1
        %s545 = sand.u32 %s37, 1
        %s546 = smul.addr %s545, 24
        %s547 = scalar_lea.vmem [#allocation2], %s546
        %p548 = pneg %p50
        %p549 = pneg %p47
        %s550 = sand.u32 %s69, 1
        %s551 = sand.u32 %s69, 1
        %s552 = smul.addr %s551, 8
        %s553 = scalar_lea.vmem [#allocation3], %s552
        %p554 = pneg %p82
        %p555 = pneg %p79
        %p556 = pneg %p103
        %p557 = pneg %p100
        %p558 = pneg %p124
        %p559 = pneg %p121
        %p560 = pneg %p152
        %p561 = pneg %p149
        %s562 = smul.u32 3, %s20
        %p563 = scmp.lt.s32.totalorder %s19, 1
        %s564 = scalar_select %p563, %s19, 1
        %p565 = scmp.lt.s32.totalorder %s562, 2
        %s566 = scalar_select %p565, %s562, 2
        %s567 = smul.addr %s564, 3
        %s568 = sadd.s32 %s566, %s567
        %s569 = smul.addr %s568, 4
        %s570 = scalar_lea.vmem %s4, %s569
        %s571 = smul.u32 3, %s20
        %s572 = ssub.s32 4, %s571
        %p573 = scmp.lt.s32.totalorder %s572, 3
        %s574 = scalar_select %p573, %s572, 3
        %s575 = smul.u32 8, %s574
        %s576 = sadd.s32 %s20, 1
        %s577 = smul.u32 %s576, 3
        %s578 = smul.u32 3, %s20
        %p579 = scmp.lt.s32.totalorder %s19, 1
        %s580 = scalar_select %p579, %s19, 1
        %p581 = scmp.lt.s32.totalorder %s578, 2
        %s582 = scalar_select %p581, %s578, 2
        %s583 = smul.addr %s580, 3
        %s584 = sadd.s32 %s582, %s583
        %s585 = smul.addr %s584, 4
        %s586 = scalar_lea.vmem %s4, %s585
        %s587 = smul.u32 3, %s20
        %v589 = vld [vmem:[%s533] sm:$0xff]
        %v590 = vld [vmem:[%s533 + $0x8] sm:$0xf]
        %v591 = vld [vmem:[%s533 + $0xc] sm:$0x11]
        %v592 = vld [vmem:[%s533 + $0x14] sm:$0x1]
        %v593 = vld [vmem:[%s540] sm:$0xf]
        %v594 = vld [vmem:[%s540 + $0x4] sm:$0x1]
        %v599 = vunpack.c.l.b16 %v589
        %v600 = vunpack.c.h.b16 %v589
        %v601 = vunpack.c.l.b16 %v590
        %v602 = vunpack.c.l.b16 %v591
        %v603 = vunpack.c.h.b16 %v591
        %v604 = vunpack.c.l.b16 %v592
        %v605 = vpack.c.b16 %v602, %v599
        %v606 = vpack.c.b16 %v603, %v600
        %v607 = vpack.c.b16 %v604, %v601
        %v610 = vunpack.c.l.b16 %v593
        %v611 = vunpack.c.l.b16 %v594
        %v612 = vpack.c.b16 %v611, %v610
        %v613 = vld [vmem:[%s2] sm:$0xf]
        %s614 = scalar_lea.vmem %s2, 4
        %v615 = vld [vmem:[%s614] sm:$0xf]
        %616 = vrot.lane.b32.xlu0 %v605, 127
        %v617 = vpop.permute.xlu0 %616
        %618 = vrot.lane.b32.xlu0 %v606, 127
        %v619 = vpop.permute.xlu0 %618
        %620 = vrot.lane.b32.xlu0 %v607, 127
        %v621 = vpop.permute.xlu0 %620
        %622 = vrot.lane.b32.xlu0 %v612, 127
        %v623 = vpop.permute.xlu0 %622
        %vm624 = vcmask 1039360
        %v625 = vsel %vm624, %v617, %v619
        %v626 = vsel %vm624, %v619, %v621
        %v627 = vsel %vm624, %v621, %v623
        %vm628 = vcmask 72704
        %v630 = vsel %vm628, %v615, 0
        %vm632 = vcmask 1043456
        %vm633 = vcmask 1044480
        %v634 = vsel %vm632, 4294967295, 65535
        %v635 = vsel %vm633, %v634, 0
        %v637 = vand.u32 %v625, %v635
        %v640 = vand.u32 %v626, %v635
        %v643 = vand.u32 %v627, %v635
        %645 = vmatpush.bf16.msra.mxu0 0
        %646 = vmatpush.bf16.msra.mxu0 0
        %647 = vmatpush.bf16.msra.mxu0 0
        %648 = vmatpush.bf16.msra.mxu0 0
        %649 = vmatpush.bf16.msra.mxu0 0
        %650 = vmatpush.bf16.msra.mxu0 0
        %651 = vmatpush.bf16.msra.mxu0 0
        %652 = vmatpush.bf16.msra.mxu0 %v637
        %653 = vmatmul.bf16.gmra.mxu0 %v630
        %v654 = vpop.f32.mrf.mxu0
        %v655 = vadd.f32 0.0, %v654
        %v656 = vpop.f32.mrf.mxu0
        %657 = vdwg.mxu0
        %658 = vmatpush.bf16.msra.mxu0 0
        %659 = vmatpush.bf16.msra.mxu0 0
        %660 = vmatpush.bf16.msra.mxu0 0
        %661 = vmatpush.bf16.msra.mxu0 0
        %662 = vmatpush.bf16.msra.mxu0 0
        %663 = vmatpush.bf16.msra.mxu0 0
        %664 = vmatpush.bf16.msra.mxu0 0
        %665 = vmatpush.bf16.msra.mxu0 %v640
        %666 = vmatmul.bf16.gmra.mxu0 %v630
        %v667 = vpop.f32.mrf.mxu0
        %v668 = vadd.f32 0.0, %v667
        %v669 = vpop.f32.mrf.mxu0
        %670 = vdwg.mxu0
        %671 = vmatpush.bf16.msra.mxu0 0
        %672 = vmatpush.bf16.msra.mxu0 0
        %673 = vmatpush.bf16.msra.mxu0 0
        %674 = vmatpush.bf16.msra.mxu0 0
        %675 = vmatpush.bf16.msra.mxu0 0
        %676 = vmatpush.bf16.msra.mxu0 0
        %677 = vmatpush.bf16.msra.mxu0 0
        %678 = vmatpush.bf16.msra.mxu0 %v643
        %679 = vmatmul.bf16.gmra.mxu0 %v630
        %v680 = vpop.f32.mrf.mxu0
        %v681 = vadd.f32 0.0, %v680
        %v682 = vpop.f32.mrf.mxu0
        %683 = vdwg.mxu0
        %v685 = vsel %vm628, %v613, 0
        %v688 = vand.u32 %v605, %v635
        %v691 = vand.u32 %v606, %v635
        %v694 = vand.u32 %v607, %v635
        %696 = vmatpush.bf16.msra.mxu0 0
        %697 = vmatpush.bf16.msra.mxu0 0
        %698 = vmatpush.bf16.msra.mxu0 0
        %699 = vmatpush.bf16.msra.mxu0 0
        %700 = vmatpush.bf16.msra.mxu0 0
        %701 = vmatpush.bf16.msra.mxu0 0
        %702 = vmatpush.bf16.msra.mxu0 0
        %703 = vmatpush.bf16.msra.mxu0 %v688
        %704 = vmatmul.bf16.gmra.mxu0 %v685
        %v705 = vpop.f32.mrf.mxu0
        %v706 = vadd.f32 %v655, %v705
        %v707 = vpop.f32.mrf.mxu0
        %708 = vdwg.mxu0
        %709 = vmatpush.bf16.msra.mxu0 0
        %710 = vmatpush.bf16.msra.mxu0 0
        %711 = vmatpush.bf16.msra.mxu0 0
        %712 = vmatpush.bf16.msra.mxu0 0
        %713 = vmatpush.bf16.msra.mxu0 0
        %714 = vmatpush.bf16.msra.mxu0 0
        %715 = vmatpush.bf16.msra.mxu0 0
        %716 = vmatpush.bf16.msra.mxu0 %v691
        %717 = vmatmul.bf16.gmra.mxu0 %v685
        %v718 = vpop.f32.mrf.mxu0
        %v719 = vadd.f32 %v668, %v718
        %v720 = vpop.f32.mrf.mxu0
        %721 = vdwg.mxu0
        %722 = vmatpush.bf16.msra.mxu0 0
        %723 = vmatpush.bf16.msra.mxu0 0
        %724 = vmatpush.bf16.msra.mxu0 0
        %725 = vmatpush.bf16.msra.mxu0 0
        %726 = vmatpush.bf16.msra.mxu0 0
        %727 = vmatpush.bf16.msra.mxu0 0
        %728 = vmatpush.bf16.msra.mxu0 0
        %729 = vmatpush.bf16.msra.mxu0 %v694
        %730 = vmatmul.bf16.gmra.mxu0 %v685
        %v731 = vpop.f32.mrf.mxu0
        %v732 = vadd.f32 %v681, %v731
        %v733 = vpop.f32.mrf.mxu0
        %734 = vdwg.mxu0
        %s735 = scalar_lea.vmem %s2, 8
        %v736 = vld [vmem:[%s735] sm:$0xf]
        %737 = vrot.lane.b32.xlu0 %v605, 126
        %v738 = vpop.permute.xlu0 %737
        %739 = vrot.lane.b32.xlu0 %v606, 126
        %v740 = vpop.permute.xlu0 %739
        %741 = vrot.lane.b32.xlu0 %v607, 126
        %v742 = vpop.permute.xlu0 %741
        %743 = vrot.lane.b32.xlu0 %v612, 126
        %v744 = vpop.permute.xlu0 %743
        %vm745 = vcmask 1031168
        %v746 = vsel %vm745, %v738, %v740
        %v747 = vsel %vm745, %v740, %v742
        %v748 = vsel %vm745, %v742, %v744
        %v750 = vsel %vm628, %v736, 0
        %v753 = vand.u32 %v746, %v635
        %v756 = vand.u32 %v747, %v635
        %v759 = vand.u32 %v748, %v635
        %761 = vmatpush.bf16.msra.mxu0 0
        %762 = vmatpush.bf16.msra.mxu0 0
        %763 = vmatpush.bf16.msra.mxu0 0
        %764 = vmatpush.bf16.msra.mxu0 0
        %765 = vmatpush.bf16.msra.mxu0 0
        %766 = vmatpush.bf16.msra.mxu0 0
        %767 = vmatpush.bf16.msra.mxu0 0
        %768 = vmatpush.bf16.msra.mxu0 %v753
        %769 = vmatmul.bf16.gmra.mxu0 %v750
        %v770 = vpop.f32.mrf.mxu0
        %v771 = vadd.f32 0.0, %v770
        %v772 = vpop.f32.mrf.mxu0
        %773 = vdwg.mxu0
        %774 = vmatpush.bf16.msra.mxu0 0
        %775 = vmatpush.bf16.msra.mxu0 0
        %776 = vmatpush.bf16.msra.mxu0 0
        %777 = vmatpush.bf16.msra.mxu0 0
        %778 = vmatpush.bf16.msra.mxu0 0
        %779 = vmatpush.bf16.msra.mxu0 0
        %780 = vmatpush.bf16.msra.mxu0 0
        %781 = vmatpush.bf16.msra.mxu0 %v756
        %782 = vmatmul.bf16.gmra.mxu0 %v750
        %v783 = vpop.f32.mrf.mxu0
        %v784 = vadd.f32 0.0, %v783
        %v785 = vpop.f32.mrf.mxu0
        %786 = vdwg.mxu0
        %787 = vmatpush.bf16.msra.mxu0 0
        %788 = vmatpush.bf16.msra.mxu0 0
        %789 = vmatpush.bf16.msra.mxu0 0
        %790 = vmatpush.bf16.msra.mxu0 0
        %791 = vmatpush.bf16.msra.mxu0 0
        %792 = vmatpush.bf16.msra.mxu0 0
        %793 = vmatpush.bf16.msra.mxu0 0
        %794 = vmatpush.bf16.msra.mxu0 %v759
        %795 = vmatmul.bf16.gmra.mxu0 %v750
        %v796 = vpop.f32.mrf.mxu0
        %v797 = vadd.f32 0.0, %v796
        %v798 = vpop.f32.mrf.mxu0
        %799 = vdwg.mxu0
        %v800 = vadd.f32 %v706, %v771
        %v801 = vadd.f32 %v719, %v784
        %v802 = vadd.f32 %v732, %v797
        %s803 = scalar_lea.vmem %s2, 12
        %v804 = vld [vmem:[%s803] sm:$0xf]
        %805 = vrot.lane.b32.xlu0 %v605, 110
        %v806 = vpop.permute.xlu0 %805
        %807 = vrot.lane.b32.xlu0 %v606, 110
        %v808 = vpop.permute.xlu0 %807
        %809 = vrot.lane.b32.xlu0 %v607, 110
        %v810 = vpop.permute.xlu0 %809
        %811 = vrot.lane.b32.xlu0 %v612, 110
        %v812 = vpop.permute.xlu0 %811
        %vm813 = vcmask 900096
        %v814 = vsel %vm813, %v806, %v808
        %v815 = vsel %vm813, %v808, %v810
        %v816 = vsel %vm813, %v810, %v812
        %v818 = vsel %vm628, %v804, 0
        %v821 = vand.u32 %v814, %v635
        %v824 = vand.u32 %v815, %v635
        %v827 = vand.u32 %v816, %v635
        %829 = vmatpush.bf16.msra.mxu0 0
        %830 = vmatpush.bf16.msra.mxu0 0
        %831 = vmatpush.bf16.msra.mxu0 0
        %832 = vmatpush.bf16.msra.mxu0 0
        %833 = vmatpush.bf16.msra.mxu0 0
        %834 = vmatpush.bf16.msra.mxu0 0
        %835 = vmatpush.bf16.msra.mxu0 0
        %836 = vmatpush.bf16.msra.mxu0 %v821
        %837 = vmatmul.bf16.gmra.mxu0 %v818
        %v838 = vpop.f32.mrf.mxu0
        %v839 = vadd.f32 0.0, %v838
        %v840 = vpop.f32.mrf.mxu0
        %841 = vdwg.mxu0
        %842 = vmatpush.bf16.msra.mxu0 0
        %843 = vmatpush.bf16.msra.mxu0 0
        %844 = vmatpush.bf16.msra.mxu0 0
        %845 = vmatpush.bf16.msra.mxu0 0
        %846 = vmatpush.bf16.msra.mxu0 0
        %847 = vmatpush.bf16.msra.mxu0 0
        %848 = vmatpush.bf16.msra.mxu0 0
        %849 = vmatpush.bf16.msra.mxu0 %v824
        %850 = vmatmul.bf16.gmra.mxu0 %v818
        %v851 = vpop.f32.mrf.mxu0
        %v852 = vadd.f32 0.0, %v851
        %v853 = vpop.f32.mrf.mxu0
        %854 = vdwg.mxu0
        %855 = vmatpush.bf16.msra.mxu0 0
        %856 = vmatpush.bf16.msra.mxu0 0
        %857 = vmatpush.bf16.msra.mxu0 0
        %858 = vmatpush.bf16.msra.mxu0 0
        %859 = vmatpush.bf16.msra.mxu0 0
        %860 = vmatpush.bf16.msra.mxu0 0
        %861 = vmatpush.bf16.msra.mxu0 0
        %862 = vmatpush.bf16.msra.mxu0 %v827
        %863 = vmatmul.bf16.gmra.mxu0 %v818
        %v864 = vpop.f32.mrf.mxu0
        %v865 = vadd.f32 0.0, %v864
        %v866 = vpop.f32.mrf.mxu0
        %867 = vdwg.mxu0
        %v868 = vadd.f32 %v800, %v839
        %v869 = vadd.f32 %v801, %v852
        %v870 = vadd.f32 %v802, %v865
        %s871 = scalar_lea.vmem %s2, 16
        %v872 = vld [vmem:[%s871] sm:$0xf]
        %873 = vrot.lane.b32.xlu0 %v605, 109
        %v874 = vpop.permute.xlu0 %873
        %875 = vrot.lane.b32.xlu0 %v606, 109
        %v876 = vpop.permute.xlu0 %875
        %877 = vrot.lane.b32.xlu0 %v607, 109
        %v878 = vpop.permute.xlu0 %877
        %879 = vrot.lane.b32.xlu0 %v612, 109
        %v880 = vpop.permute.xlu0 %879
        %vm881 = vcmask 891904
        %v882 = vsel %vm881, %v874, %v876
        %v883 = vsel %vm881, %v876, %v878
        %v884 = vsel %vm881, %v878, %v880
        %v886 = vsel %vm628, %v872, 0
        %v889 = vand.u32 %v882, %v635
        %v892 = vand.u32 %v883, %v635
        %v895 = vand.u32 %v884, %v635
        %897 = vmatpush.bf16.msra.mxu0 0
        %898 = vmatpush.bf16.msra.mxu0 0
        %899 = vmatpush.bf16.msra.mxu0 0
        %900 = vmatpush.bf16.msra.mxu0 0
        %901 = vmatpush.bf16.msra.mxu0 0
        %902 = vmatpush.bf16.msra.mxu0 0
        %903 = vmatpush.bf16.msra.mxu0 0
        %904 = vmatpush.bf16.msra.mxu0 %v889
        %905 = vmatmul.bf16.gmra.mxu0 %v886
        %v906 = vpop.f32.mrf.mxu0
        %v907 = vadd.f32 0.0, %v906
        %v908 = vpop.f32.mrf.mxu0
        %909 = vdwg.mxu0
        %910 = vmatpush.bf16.msra.mxu0 0
        %911 = vmatpush.bf16.msra.mxu0 0
        %912 = vmatpush.bf16.msra.mxu0 0
        %913 = vmatpush.bf16.msra.mxu0 0
        %914 = vmatpush.bf16.msra.mxu0 0
        %915 = vmatpush.bf16.msra.mxu0 0
        %916 = vmatpush.bf16.msra.mxu0 0
        %917 = vmatpush.bf16.msra.mxu0 %v892
        %918 = vmatmul.bf16.gmra.mxu0 %v886
        %v919 = vpop.f32.mrf.mxu0
        %v920 = vadd.f32 0.0, %v919
        %v921 = vpop.f32.mrf.mxu0
        %922 = vdwg.mxu0
        %923 = vmatpush.bf16.msra.mxu0 0
        %924 = vmatpush.bf16.msra.mxu0 0
        %925 = vmatpush.bf16.msra.mxu0 0
        %926 = vmatpush.bf16.msra.mxu0 0
        %927 = vmatpush.bf16.msra.mxu0 0
        %928 = vmatpush.bf16.msra.mxu0 0
        %929 = vmatpush.bf16.msra.mxu0 0
        %930 = vmatpush.bf16.msra.mxu0 %v895
        %931 = vmatmul.bf16.gmra.mxu0 %v886
        %v932 = vpop.f32.mrf.mxu0
        %v933 = vadd.f32 0.0, %v932
        %v934 = vpop.f32.mrf.mxu0
        %935 = vdwg.mxu0
        %v936 = vadd.f32 %v868, %v907
        %v937 = vadd.f32 %v869, %v920
        %v938 = vadd.f32 %v870, %v933
        %s939 = scalar_lea.vmem %s2, 20
        %v940 = vld [vmem:[%s939] sm:$0xf]
        %941 = vrot.lane.b32.xlu0 %v605, 108
        %v942 = vpop.permute.xlu0 %941
        %943 = vrot.lane.b32.xlu0 %v606, 108
        %v944 = vpop.permute.xlu0 %943
        %945 = vrot.lane.b32.xlu0 %v607, 108
        %v946 = vpop.permute.xlu0 %945
        %947 = vrot.lane.b32.xlu0 %v612, 108
        %v948 = vpop.permute.xlu0 %947
        %vm949 = vcmask 883712
        %v950 = vsel %vm949, %v942, %v944
        %v951 = vsel %vm949, %v944, %v946
        %v952 = vsel %vm949, %v946, %v948
        %v954 = vsel %vm628, %v940, 0
        %v957 = vand.u32 %v950, %v635
        %v960 = vand.u32 %v951, %v635
        %v963 = vand.u32 %v952, %v635
        %965 = vmatpush.bf16.msra.mxu0 0
        %966 = vmatpush.bf16.msra.mxu0 0
        %967 = vmatpush.bf16.msra.mxu0 0
        %968 = vmatpush.bf16.msra.mxu0 0
        %969 = vmatpush.bf16.msra.mxu0 0
        %970 = vmatpush.bf16.msra.mxu0 0
        %971 = vmatpush.bf16.msra.mxu0 0
        %972 = vmatpush.bf16.msra.mxu0 %v957
        %973 = vmatmul.bf16.gmra.mxu0 %v954
        %v974 = vpop.f32.mrf.mxu0
        %v975 = vadd.f32 0.0, %v974
        %v976 = vpop.f32.mrf.mxu0
        %977 = vdwg.mxu0
        %978 = vmatpush.bf16.msra.mxu0 0
        %979 = vmatpush.bf16.msra.mxu0 0
        %980 = vmatpush.bf16.msra.mxu0 0
        %981 = vmatpush.bf16.msra.mxu0 0
        %982 = vmatpush.bf16.msra.mxu0 0
        %983 = vmatpush.bf16.msra.mxu0 0
        %984 = vmatpush.bf16.msra.mxu0 0
        %985 = vmatpush.bf16.msra.mxu0 %v960
        %986 = vmatmul.bf16.gmra.mxu0 %v954
        %v987 = vpop.f32.mrf.mxu0
        %v988 = vadd.f32 0.0, %v987
        %v989 = vpop.f32.mrf.mxu0
        %990 = vdwg.mxu0
        %991 = vmatpush.bf16.msra.mxu0 0
        %992 = vmatpush.bf16.msra.mxu0 0
        %993 = vmatpush.bf16.msra.mxu0 0
        %994 = vmatpush.bf16.msra.mxu0 0
        %995 = vmatpush.bf16.msra.mxu0 0
        %996 = vmatpush.bf16.msra.mxu0 0
        %997 = vmatpush.bf16.msra.mxu0 0
        %998 = vmatpush.bf16.msra.mxu0 %v963
        %999 = vmatmul.bf16.gmra.mxu0 %v954
        %v1000 = vpop.f32.mrf.mxu0
        %v1001 = vadd.f32 0.0, %v1000
        %v1002 = vpop.f32.mrf.mxu0
        %1003 = vdwg.mxu0
        %v1004 = vadd.f32 %v936, %v975
        %v1005 = vadd.f32 %v937, %v988
        %v1006 = vadd.f32 %v938, %v1001
        %s1007 = scalar_lea.vmem %s2, 24
        %v1008 = vld [vmem:[%s1007] sm:$0xf]
        %1009 = vrot.lane.b32.xlu0 %v605, 92
        %v1010 = vpop.permute.xlu0 %1009
        %1011 = vrot.lane.b32.xlu0 %v606, 92
        %v1012 = vpop.permute.xlu0 %1011
        %1013 = vrot.lane.b32.xlu0 %v607, 92
        %v1014 = vpop.permute.xlu0 %1013
        %1015 = vrot.lane.b32.xlu0 %v612, 92
        %v1016 = vpop.permute.xlu0 %1015
        %vm1017 = vcmask 752640
        %v1018 = vsel %vm1017, %v1010, %v1012
        %v1019 = vsel %vm1017, %v1012, %v1014
        %v1020 = vsel %vm1017, %v1014, %v1016
        %v1022 = vsel %vm628, %v1008, 0
        %v1025 = vand.u32 %v1018, %v635
        %v1028 = vand.u32 %v1019, %v635
        %v1031 = vand.u32 %v1020, %v635
        %1033 = vmatpush.bf16.msra.mxu0 0
        %1034 = vmatpush.bf16.msra.mxu0 0
        %1035 = vmatpush.bf16.msra.mxu0 0
        %1036 = vmatpush.bf16.msra.mxu0 0
        %1037 = vmatpush.bf16.msra.mxu0 0
        %1038 = vmatpush.bf16.msra.mxu0 0
        %1039 = vmatpush.bf16.msra.mxu0 0
        %1040 = vmatpush.bf16.msra.mxu0 %v1025
        %1041 = vmatmul.bf16.gmra.mxu0 %v1022
        %v1042 = vpop.f32.mrf.mxu0
        %v1043 = vadd.f32 0.0, %v1042
        %v1044 = vpop.f32.mrf.mxu0
        %1045 = vdwg.mxu0
        %1046 = vmatpush.bf16.msra.mxu0 0
        %1047 = vmatpush.bf16.msra.mxu0 0
        %1048 = vmatpush.bf16.msra.mxu0 0
        %1049 = vmatpush.bf16.msra.mxu0 0
        %1050 = vmatpush.bf16.msra.mxu0 0
        %1051 = vmatpush.bf16.msra.mxu0 0
        %1052 = vmatpush.bf16.msra.mxu0 0
        %1053 = vmatpush.bf16.msra.mxu0 %v1028
        %1054 = vmatmul.bf16.gmra.mxu0 %v1022
        %v1055 = vpop.f32.mrf.mxu0
        %v1056 = vadd.f32 0.0, %v1055
        %v1057 = vpop.f32.mrf.mxu0
        %1058 = vdwg.mxu0
        %1059 = vmatpush.bf16.msra.mxu0 0
        %1060 = vmatpush.bf16.msra.mxu0 0
        %1061 = vmatpush.bf16.msra.mxu0 0
        %1062 = vmatpush.bf16.msra.mxu0 0
        %1063 = vmatpush.bf16.msra.mxu0 0
        %1064 = vmatpush.bf16.msra.mxu0 0
        %1065 = vmatpush.bf16.msra.mxu0 0
        %1066 = vmatpush.bf16.msra.mxu0 %v1031
        %1067 = vmatmul.bf16.gmra.mxu0 %v1022
        %v1068 = vpop.f32.mrf.mxu0
        %v1069 = vadd.f32 0.0, %v1068
        %v1070 = vpop.f32.mrf.mxu0
        %1071 = vdwg.mxu0
        %v1072 = vadd.f32 %v1004, %v1043
        %v1073 = vadd.f32 %v1005, %v1056
        %v1074 = vadd.f32 %v1006, %v1069
        %s1075 = scalar_lea.vmem %s2, 28
        %v1076 = vld [vmem:[%s1075] sm:$0xf]
        %1077 = vrot.lane.b32.xlu0 %v605, 91
        %v1078 = vpop.permute.xlu0 %1077
        %1079 = vrot.lane.b32.xlu0 %v606, 91
        %v1080 = vpop.permute.xlu0 %1079
        %1081 = vrot.lane.b32.xlu0 %v607, 91
        %v1082 = vpop.permute.xlu0 %1081
        %1083 = vrot.lane.b32.xlu0 %v612, 91
        %v1084 = vpop.permute.xlu0 %1083
        %vm1085 = vcmask 744448
        %v1086 = vsel %vm1085, %v1078, %v1080
        %v1087 = vsel %vm1085, %v1080, %v1082
        %v1088 = vsel %vm1085, %v1082, %v1084
        %v1090 = vsel %vm628, %v1076, 0
        %v1093 = vand.u32 %v1086, %v635
        %v1096 = vand.u32 %v1087, %v635
        %v1099 = vand.u32 %v1088, %v635
        %1101 = vmatpush.bf16.msra.mxu0 0
        %1102 = vmatpush.bf16.msra.mxu0 0
        %1103 = vmatpush.bf16.msra.mxu0 0
        %1104 = vmatpush.bf16.msra.mxu0 0
        %1105 = vmatpush.bf16.msra.mxu0 0
        %1106 = vmatpush.bf16.msra.mxu0 0
        %1107 = vmatpush.bf16.msra.mxu0 0
        %1108 = vmatpush.bf16.msra.mxu0 %v1093
        %1109 = vmatmul.bf16.gmra.mxu0 %v1090
        %v1110 = vpop.f32.mrf.mxu0
        %v1111 = vadd.f32 0.0, %v1110
        %v1112 = vpop.f32.mrf.mxu0
        %1113 = vdwg.mxu0
        %1114 = vmatpush.bf16.msra.mxu0 0
        %1115 = vmatpush.bf16.msra.mxu0 0
        %1116 = vmatpush.bf16.msra.mxu0 0
        %1117 = vmatpush.bf16.msra.mxu0 0
        %1118 = vmatpush.bf16.msra.mxu0 0
        %1119 = vmatpush.bf16.msra.mxu0 0
        %1120 = vmatpush.bf16.msra.mxu0 0
        %1121 = vmatpush.bf16.msra.mxu0 %v1096
        %1122 = vmatmul.bf16.gmra.mxu0 %v1090
        %v1123 = vpop.f32.mrf.mxu0
        %v1124 = vadd.f32 0.0, %v1123
        %v1125 = vpop.f32.mrf.mxu0
        %1126 = vdwg.mxu0
        %1127 = vmatpush.bf16.msra.mxu0 0
        %1128 = vmatpush.bf16.msra.mxu0 0
        %1129 = vmatpush.bf16.msra.mxu0 0
        %1130 = vmatpush.bf16.msra.mxu0 0
        %1131 = vmatpush.bf16.msra.mxu0 0
        %1132 = vmatpush.bf16.msra.mxu0 0
        %1133 = vmatpush.bf16.msra.mxu0 0
        %1134 = vmatpush.bf16.msra.mxu0 %v1099
        %1135 = vmatmul.bf16.gmra.mxu0 %v1090
        %v1136 = vpop.f32.mrf.mxu0
        %v1137 = vadd.f32 0.0, %v1136
        %v1138 = vpop.f32.mrf.mxu0
        %1139 = vdwg.mxu0
        %v1140 = vadd.f32 %v1072, %v1111
        %v1141 = vadd.f32 %v1073, %v1124
        %v1142 = vadd.f32 %v1074, %v1137
        %s1143 = scalar_lea.vmem %s2, 32
        %v1144 = vld [vmem:[%s1143] sm:$0xf]
        %1145 = vrot.lane.b32.xlu0 %v605, 90
        %v1146 = vpop.permute.xlu0 %1145
        %1147 = vrot.lane.b32.xlu0 %v606, 90
        %v1148 = vpop.permute.xlu0 %1147
        %1149 = vrot.lane.b32.xlu0 %v607, 90
        %v1150 = vpop.permute.xlu0 %1149
        %1151 = vrot.lane.b32.xlu0 %v612, 90
        %v1152 = vpop.permute.xlu0 %1151
        %vm1153 = vcmask 736256
        %v1154 = vsel %vm1153, %v1146, %v1148
        %v1155 = vsel %vm1153, %v1148, %v1150
        %v1156 = vsel %vm1153, %v1150, %v1152
        %v1158 = vsel %vm628, %v1144, 0
        %v1161 = vand.u32 %v1154, %v635
        %v1164 = vand.u32 %v1155, %v635
        %v1167 = vand.u32 %v1156, %v635
        %1169 = vmatpush.bf16.msra.mxu0 0
        %1170 = vmatpush.bf16.msra.mxu0 0
        %1171 = vmatpush.bf16.msra.mxu0 0
        %1172 = vmatpush.bf16.msra.mxu0 0
        %1173 = vmatpush.bf16.msra.mxu0 0
        %1174 = vmatpush.bf16.msra.mxu0 0
        %1175 = vmatpush.bf16.msra.mxu0 0
        %1176 = vmatpush.bf16.msra.mxu0 %v1161
        %1177 = vmatmul.bf16.gmra.mxu0 %v1158
        %v1178 = vpop.f32.mrf.mxu0
        %v1179 = vadd.f32 0.0, %v1178
        %v1180 = vpop.f32.mrf.mxu0
        %1181 = vdwg.mxu0
        %1182 = vmatpush.bf16.msra.mxu0 0
        %1183 = vmatpush.bf16.msra.mxu0 0
        %1184 = vmatpush.bf16.msra.mxu0 0
        %1185 = vmatpush.bf16.msra.mxu0 0
        %1186 = vmatpush.bf16.msra.mxu0 0
        %1187 = vmatpush.bf16.msra.mxu0 0
        %1188 = vmatpush.bf16.msra.mxu0 0
        %1189 = vmatpush.bf16.msra.mxu0 %v1164
        %1190 = vmatmul.bf16.gmra.mxu0 %v1158
        %v1191 = vpop.f32.mrf.mxu0
        %v1192 = vadd.f32 0.0, %v1191
        %v1193 = vpop.f32.mrf.mxu0
        %1194 = vdwg.mxu0
        %1195 = vmatpush.bf16.msra.mxu0 0
        %1196 = vmatpush.bf16.msra.mxu0 0
        %1197 = vmatpush.bf16.msra.mxu0 0
        %1198 = vmatpush.bf16.msra.mxu0 0
        %1199 = vmatpush.bf16.msra.mxu0 0
        %1200 = vmatpush.bf16.msra.mxu0 0
        %1201 = vmatpush.bf16.msra.mxu0 0
        %1202 = vmatpush.bf16.msra.mxu0 %v1167
        %1203 = vmatmul.bf16.gmra.mxu0 %v1158
        %v1204 = vpop.f32.mrf.mxu0
        %v1205 = vadd.f32 0.0, %v1204
        %v1206 = vpop.f32.mrf.mxu0
        %1207 = vdwg.mxu0
        %v1208 = vadd.f32 %v1140, %v1179
        %v1209 = vadd.f32 %v1141, %v1192
        %v1210 = vadd.f32 %v1142, %v1205
        %v1211 = vld [vmem:[%s3] sm:$0xff]
        %1213 = vset.pattern.permute.xlu0 0
        %1214 = vperm.xlu0 %1213, %v1211
        %v1215 = vpop.permute.xlu0 %1214
        %v1217 = vadd.f32 %v1208, %v1215
        %v1218 = vadd.f32 %v1209, %v1215
        %v1219 = vadd.f32 %v1210, %v1215
        %v1220 = vmax.f32 %v1217, 0.0
        %v1221 = vmax.f32 %v1218, 0.0
        %v1222 = vmax.f32 %v1219, 0.0
        %v1223 = vpack.c.bf16 %v1221, %v1220
        %v1224 = vpack.c.bf16 %v1222, %v1222
        %1225 = vst [vmem:[%s586] sm:$0xff] %v1223
        %1226 = vst [vmem:[%s586 + $0x8] sm:$0xf] %v1224
        %s1227 = smul.u32 3, %s20
        %p1228 = scmp.lt.s32.totalorder %s19, 1
        %s1229 = scalar_select %p1228, %s19, 1
        %p1230 = scmp.lt.s32.totalorder %s1227, 2
        %s1231 = scalar_select %p1230, %s1227, 2
        %s1232 = smul.addr %s1229, 3
        %s1233 = sadd.s32 %s1231, %s1232
        %s1234 = smul.addr %s1233, 4
        %s1235 = scalar_lea.vmem %s4, %s1234
        // Predicated region
        $region144: #{att_ffc_forward.7} parent=134 // pred_check
          %p1236 = pneg %p149
        $region145: #{att_ffc_forward.7} parent=134 // pred_check_branch
          %1238 = sbr.rel (%p1236) target = $region147
        $region146: #{att_ffc_forward.7} parent=134 // pred_region
          %s1239 = smul.u32 3, %s20
        $region147: #{att_ffc_forward.7} parent=134 // pred_fallthru
          _
      $region135: #{att_ffc_forward.7} parent=5 // pred_fallthru
        _
      %p1240 = scmp.le.s32.totalorder 2, %s10
      // Predicated region
      $region148: #{att_ffc_forward.7} parent=5 // pred_check
        %p1241 = pneg %p1240
      $region149: #{att_ffc_forward.7} parent=5 // pred_check_branch
        %1243 = sbr.rel (%p1241) target = $region151
      $region150: #{att_ffc_forward.7} parent=5 // pred_region
        %s1244 = ssub.s32 %s10, 2
        // Predicated region
        $region152: #{att_ffc_forward.7} parent=150 // pred_check
          %p1245 = pneg %p155
        $region153: #{att_ffc_forward.7} parent=150 // pred_check_branch
          %1247 = sbr.rel (%p1245) target = $region155
        $region154: #{att_ffc_forward.7} parent=150 // pred_region
          %s1248 = smul.u32 3, %s22
          %p1249 = scmp.lt.s32.totalorder %s21, 1
          %s1250 = scalar_select %p1249, %s21, 1
          %p1251 = scmp.lt.s32.totalorder %s1248, 2
          %s1252 = scalar_select %p1251, %s1248, 2
          %s1253 = smul.addr %s1250, 3
          %s1254 = sadd.s32 %s1252, %s1253
          %s1255 = smul.addr %s1254, 4
          %s1256 = scalar_lea.vmem %s4, %s1255
        $region155: #{att_ffc_forward.7} parent=150 // pred_fallthru
          _
      $region151: #{att_ffc_forward.7} parent=5 // pred_fallthru
        _
    $region6: #{att_ffc_forward.7} parent=1 // loop_footer
      %s14 = sadd.s32 1, %s10
    $region7: #{att_ffc_forward.7} parent=1 // loop_footer_branch
      %9 = sbr.rel target = $region3
    $region8: #{att_ffc_forward.7} parent=1 // loop_exit
      _

// kernel: att_ffc_forward.8
$region0: #{att_ffc_forward.8}
  #allocation0 [shape = 'u32[]', space=smem, size = 0x4, offset = 0x4, fixed_abs, tag = 'smem constant byte address 0x4 - core index']
  #allocation1 [shape = 'u32[72,128]{1,0:T(1,128)}', space=vmem, size = 0x9000, scoped, tag = 'internal scratch']
  %s0 = inlined_call_operand.vmem [shape: bf16[2,8,512], index: 0, kind: input, shape index: {}, may-alias: {0,1}]
  %s1 = inlined_call_operand.vmem [shape: bf16[2,8,512], index: 1, kind: input, shape index: {}, may-alias: {0,1}]
  %s2 = inlined_call_operand.vmem [shape: bf16[9,2,8], index: 2, kind: input, shape index: {}]
  %s3 = inlined_call_operand.vmem [shape: f32[2,1], index: 3, kind: input, shape index: {}]
  %s4 = inlined_call_operand.vmem [shape: bf16[2,2,384], index: 4, kind: input, shape index: {}]
  %s5 = inlined_call_operand.vmem [shape: f32[2,2,384], index: 5, kind: output, shape index: {}]
  %s6 = sld [smem:[#allocation0]]
  $region53: #{att_ffc_forward.8} parent=0
    _
  %s8 = ssub.s32 1, %s6
  %s9 = scalar_select 0, %s8, %s6
  loop: start=0, step=1, limit=4
  $region2: #{att_ffc_forward.8} parent=0 // loop_pre_header
    _
  $region3: #{att_ffc_forward.8} parent=0 // loop_header
    %s11 = sphi 0, %s15
    %p12 = scmp.ge.s32.totalorder %s11, 4
    %s18 = sphi 0, %s30
    %s19 = sphi 0, %s26
    %s20 = sphi 0, %s18
    %s21 = sphi 0, %s19
    %s22 = sphi 0, %s20
    %s23 = sphi 0, %s21
    %s35 = sphi 0, %s37
    %s38 = sphi 0, %s35
    %s39 = sphi 0, %s38
    %s55 = sphi 0, %s39
    %s67 = sphi 0, %s69
    %s70 = sphi 0, %s67
    %s71 = sphi 0, %s70
    %s87 = sphi 0, %s71
    %s91 = sphi 0, %s91
    %s93 = sphi 0, %s91
    %s94 = sphi 0, %s93
    %s108 = sphi 0, %s94
    %s112 = sphi 0, %s112
    %s114 = sphi 0, %s112
    %s115 = sphi 0, %s114
    %s129 = sphi 0, %s115
    %s137 = sphi 0, %s139
    %s140 = sphi 0, %s137
    %s141 = sphi 0, %s140
    %s157 = sphi 0, %s141
    %s165 = sphi 0, %s167
    %s168 = sphi 0, %s165
    %s169 = sphi 0, %s168
    %s185 = sphi 0, %s169
  $region4: #{att_ffc_forward.8} parent=0 // loop_header_branch
    %14 = sbr.rel (%p12) target = $region8
  $region5: #{att_ffc_forward.8} parent=0 // loop_body
    %s16 = ssub.s32 %s11, 1
    %s17 = ssub.s32 %s11, 2
    %s24 = sadd.s32 1, %s19
    %p25 = scmp.ge.s32.totalorder %s24, 1
    %s26 = scalar_select %p25, 0, %s24
    %s27 = sadd.s32 1, %s18
    %s28 = scalar_select %p25, %s27, %s18
    %p29 = scmp.ge.s32.totalorder %s28, 2
    %s30 = scalar_select %p29, 0, %s28
    %s31 = ssub.s32 %s18, %s30
    %s32 = ssub.s32 %s19, %s26
    %s33 = sor.u32 %s31, %s32
    %p34 = scmp.eq.s32.totalorder %s33, 0
    %s36 = sadd.s32 %s35, 1
    %s37 = scalar_select %p34, %s35, %s36
    %p40 = pneg %p34
    %p41 = scmp.eq.s32.totalorder %s11, 1
    %p42 = por %p40, %p41
    %p43 = scmp.ne.s32.totalorder %s35, %s38
    %p44 = scmp.eq.s32.totalorder %s11, 0
    %p45 = por %p43, %p44
    %p46 = scmp.ne.s32.totalorder %s35, %s38
    %p47 = scmp.eq.s32.totalorder %s16, 1
    %p48 = por %p46, %p47
    %p49 = scmp.ne.s32.totalorder %s38, %s39
    %p50 = scmp.eq.s32.totalorder %s16, 0
    %p51 = por %p49, %p50
    %p52 = scmp.ne.s32.totalorder %s38, %s39
    %p53 = scmp.eq.s32.totalorder %s17, 1
    %p54 = por %p52, %p53
    %p56 = scmp.ne.s32.totalorder %s39, %s55
    %p57 = scmp.eq.s32.totalorder %s17, 0
    %p58 = por %p56, %p57
    %s59 = sadd.s32 %s19, 1
    %s60 = smul.u32 %s59, 3
    %s61 = sadd.s32 %s26, 1
    %s62 = smul.u32 %s61, 3
    %s63 = ssub.s32 %s18, %s30
    %s64 = ssub.s32 %s60, %s62
    %s65 = sor.u32 %s63, %s64
    %p66 = scmp.eq.s32.totalorder %s65, 0
    %s68 = sadd.s32 %s67, 1
    %s69 = scalar_select %p66, %s67, %s68
    %p72 = pneg %p66
    %p73 = scmp.eq.s32.totalorder %s11, 1
    %p74 = por %p72, %p73
    %p75 = scmp.ne.s32.totalorder %s67, %s70
    %p76 = scmp.eq.s32.totalorder %s11, 0
    %p77 = por %p75, %p76
    %p78 = scmp.ne.s32.totalorder %s67, %s70
    %p79 = scmp.eq.s32.totalorder %s16, 1
    %p80 = por %p78, %p79
    %p81 = scmp.ne.s32.totalorder %s70, %s71
    %p82 = scmp.eq.s32.totalorder %s16, 0
    %p83 = por %p81, %p82
    %p84 = scmp.ne.s32.totalorder %s70, %s71
    %p85 = scmp.eq.s32.totalorder %s17, 1
    %p86 = por %p84, %p85
    %p88 = scmp.ne.s32.totalorder %s71, %s87
    %p89 = scmp.eq.s32.totalorder %s17, 0
    %p90 = por %p88, %p89
    %s92 = sadd.s32 %s91, 1
    %p95 = scmp.eq.s32.totalorder %s11, 1
    %p96 = scmp.ne.s32.totalorder %s91, %s93
    %p97 = scmp.eq.s32.totalorder %s11, 0
    %p98 = por %p96, %p97
    %p99 = scmp.ne.s32.totalorder %s91, %s93
    %p100 = scmp.eq.s32.totalorder %s16, 1
    %p101 = por %p99, %p100
    %p102 = scmp.ne.s32.totalorder %s93, %s94
    %p103 = scmp.eq.s32.totalorder %s16, 0
    %p104 = por %p102, %p103
    %p105 = scmp.ne.s32.totalorder %s93, %s94
    %p106 = scmp.eq.s32.totalorder %s17, 1
    %p107 = por %p105, %p106
    %p109 = scmp.ne.s32.totalorder %s94, %s108
    %p110 = scmp.eq.s32.totalorder %s17, 0
    %p111 = por %p109, %p110
    %s113 = sadd.s32 %s112, 1
    %p116 = scmp.eq.s32.totalorder %s11, 1
    %p117 = scmp.ne.s32.totalorder %s112, %s114
    %p118 = scmp.eq.s32.totalorder %s11, 0
    %p119 = por %p117, %p118
    %p120 = scmp.ne.s32.totalorder %s112, %s114
    %p121 = scmp.eq.s32.totalorder %s16, 1
    %p122 = por %p120, %p121
    %p123 = scmp.ne.s32.totalorder %s114, %s115
    %p124 = scmp.eq.s32.totalorder %s16, 0
    %p125 = por %p123, %p124
    %p126 = scmp.ne.s32.totalorder %s114, %s115
    %p127 = scmp.eq.s32.totalorder %s17, 1
    %p128 = por %p126, %p127
    %p130 = scmp.ne.s32.totalorder %s115, %s129
    %p131 = scmp.eq.s32.totalorder %s17, 0
    %p132 = por %p130, %p131
    %s133 = ssub.s32 %s18, %s30
    %s134 = ssub.s32 %s19, %s26
    %s135 = sor.u32 %s133, %s134
    %p136 = scmp.eq.s32.totalorder %s135, 0
    %s138 = sadd.s32 %s137, 1
    %s139 = scalar_select %p136, %s137, %s138
    %p142 = pneg %p136
    %p143 = scmp.eq.s32.totalorder %s11, 1
    %p144 = por %p142, %p143
    %p145 = scmp.ne.s32.totalorder %s137, %s140
    %p146 = scmp.eq.s32.totalorder %s11, 0
    %p147 = por %p145, %p146
    %p148 = scmp.ne.s32.totalorder %s137, %s140
    %p149 = scmp.eq.s32.totalorder %s16, 1
    %p150 = por %p148, %p149
    %p151 = scmp.ne.s32.totalorder %s140, %s141
    %p152 = scmp.eq.s32.totalorder %s16, 0
    %p153 = por %p151, %p152
    %p154 = scmp.ne.s32.totalorder %s140, %s141
    %p155 = scmp.eq.s32.totalorder %s17, 1
    %p156 = por %p154, %p155
    %p158 = scmp.ne.s32.totalorder %s141, %s157
    %p159 = scmp.eq.s32.totalorder %s17, 0
    %p160 = por %p158, %p159
    %s161 = ssub.s32 %s18, %s30
    %s162 = ssub.s32 %s19, %s26
    %s163 = sor.u32 %s161, %s162
    %p164 = scmp.eq.s32.totalorder %s163, 0
    %s166 = sadd.s32 %s165, 1
    %s167 = scalar_select %p164, %s165, %s166
    %p170 = pneg %p164
    %p171 = scmp.eq.s32.totalorder %s11, 1
    %p172 = por %p170, %p171
    %p173 = scmp.ne.s32.totalorder %s165, %s168
    %p174 = scmp.eq.s32.totalorder %s11, 0
    %p175 = por %p173, %p174
    %p176 = scmp.ne.s32.totalorder %s165, %s168
    %p177 = scmp.eq.s32.totalorder %s16, 1
    %p178 = por %p176, %p177
    %p179 = scmp.ne.s32.totalorder %s168, %s169
    %p180 = scmp.eq.s32.totalorder %s16, 0
    %p181 = por %p179, %p180
    %p182 = scmp.ne.s32.totalorder %s168, %s169
    %p183 = scmp.eq.s32.totalorder %s17, 1
    %p184 = por %p182, %p183
    %p186 = scmp.ne.s32.totalorder %s169, %s185
    %p187 = scmp.eq.s32.totalorder %s17, 0
    %p188 = por %p186, %p187
    %p189 = scmp.le.s32.totalorder 1, %s11
    %p190 = scmp.lt.s32.totalorder %s11, 3
    %p191 = pnand %p189, %p190
    %p192 = pneg %p191
    // Predicated region
    $region9: #{att_ffc_forward.8} parent=5 // pred_check
      _
    $region10: #{att_ffc_forward.8} parent=5 // pred_check_branch
      %194 = sbr.rel (%p191) target = $region12
    $region11: #{att_ffc_forward.8} parent=5 // pred_region
      %s195 = ssub.s32 %s11, 1
      // Predicated region
      $region13: #{att_ffc_forward.8} parent=11 // pred_check
        %p196 = pneg %p104
      $region14: #{att_ffc_forward.8} parent=11 // pred_check_branch
        %198 = sbr.rel (%p196) target = $region16
      $region15: #{att_ffc_forward.8} parent=11 // pred_region
        _
      $region16: #{att_ffc_forward.8} parent=11 // pred_fallthru
        _
      // Predicated region
      $region17: #{att_ffc_forward.8} parent=11 // pred_check
        %p199 = pneg %p125
      $region18: #{att_ffc_forward.8} parent=11 // pred_check_branch
        %201 = sbr.rel (%p199) target = $region20
      $region19: #{att_ffc_forward.8} parent=11 // pred_region
        _
      $region20: #{att_ffc_forward.8} parent=11 // pred_fallthru
        _
    $region12: #{att_ffc_forward.8} parent=5 // pred_fallthru
      _
    %p202 = scmp.lt.s32.totalorder %s11, 2
    // Predicated region
    $region21: #{att_ffc_forward.8} parent=5 // pred_check
      %p203 = pneg %p202
    $region22: #{att_ffc_forward.8} parent=5 // pred_check_branch
      %205 = sbr.rel (%p203) target = $region24
    $region23: #{att_ffc_forward.8} parent=5 // pred_region
      // Predicated region
      $region25: #{att_ffc_forward.8} parent=23 // pred_check
        %p206 = pneg %p45
      $region26: #{att_ffc_forward.8} parent=23 // pred_check_branch
        %208 = sbr.rel (%p206) target = $region28
      $region27: #{att_ffc_forward.8} parent=23 // pred_region
        %s209 = smul.u32 3, %s19
        %s210 = ssub.s32 4, %s209
        %p211 = scmp.lt.s32.totalorder %s210, 3
        %s212 = scalar_select %p211, %s210, 3
        %s213 = smul.u32 4, %s212
        %p214 = scmp.lt.s32.totalorder %s18, 1
        %s215 = scalar_select %p214, %s18, 1
        %p216 = scmp.lt.s32.totalorder %s209, 3
        %s217 = scalar_select %p216, %s209, 3
        %s218 = smul.addr %s215, 4
        %s219 = sadd.s32 %s217, %s218
        %s220 = smul.addr %s219, 4
        %s221 = scalar_lea.vmem %s0, %s220
        %s222 = smul.u32 3, %s19
        %s223 = ssub.s32 4, %s222
        %p224 = scmp.lt.s32.totalorder %s223, 3
        %s225 = scalar_select %p224, %s223, 3
        %s226 = smul.u32 4, %s225
      $region28: #{att_ffc_forward.8} parent=23 // pred_fallthru
        _
      // Predicated region
      $region29: #{att_ffc_forward.8} parent=23 // pred_check
        %p227 = pneg %p77
      $region30: #{att_ffc_forward.8} parent=23 // pred_check_branch
        %229 = sbr.rel (%p227) target = $region32
      $region31: #{att_ffc_forward.8} parent=23 // pred_region
        %s230 = sadd.s32 %s19, 1
        %s231 = smul.u32 %s230, 3
        %p232 = scmp.lt.s32.totalorder %s18, 1
        %s233 = scalar_select %p232, %s18, 1
        %p234 = scmp.lt.s32.totalorder %s231, 3
        %s235 = scalar_select %p234, %s231, 3
        %s236 = smul.addr %s233, 4
        %s237 = sadd.s32 %s235, %s236
        %s238 = smul.addr %s237, 4
        %s239 = scalar_lea.vmem %s1, %s238
        %s240 = sadd.s32 %s19, 1
        %s241 = smul.u32 %s240, 3
      $region32: #{att_ffc_forward.8} parent=23 // pred_fallthru
        _
      // Predicated region
      $region33: #{att_ffc_forward.8} parent=23 // pred_check
        %p242 = pneg %p147
      $region34: #{att_ffc_forward.8} parent=23 // pred_check_branch
        %244 = sbr.rel (%p242) target = $region36
      $region35: #{att_ffc_forward.8} parent=23 // pred_region
        %s245 = smul.u32 3, %s19
        %p246 = scmp.lt.s32.totalorder %s18, 1
        %s247 = scalar_select %p246, %s18, 1
        %p248 = scmp.lt.s32.totalorder %s245, 2
        %s249 = scalar_select %p248, %s245, 2
        %s250 = smul.addr %s247, 3
        %s251 = sadd.s32 %s249, %s250
        %s252 = scalar_lea.vmem %s4, %s251
        %s253 = smul.u32 3, %s19
      $region36: #{att_ffc_forward.8} parent=23 // pred_fallthru
        _
    $region24: #{att_ffc_forward.8} parent=5 // pred_fallthru
      _
    %p254 = scmp.le.s32.totalorder 1, %s11
    %p255 = scmp.lt.s32.totalorder %s11, 3
    %p256 = pnand %p254, %p255
    %p257 = pneg %p256
    // Predicated region
    $region37: #{att_ffc_forward.8} parent=5 // pred_check
      _
    $region38: #{att_ffc_forward.8} parent=5 // pred_check_branch
      %259 = sbr.rel (%p256) target = $region40
    $region39: #{att_ffc_forward.8} parent=5 // pred_region
      %s260 = ssub.s32 %s11, 1
      %s261 = smul.u32 3, %s21
      %s262 = ssub.s32 4, %s261
      %p263 = scmp.lt.s32.totalorder %s262, 3
      %s264 = scalar_select %p263, %s262, 3
      %s265 = smul.u32 4, %s264
      %p266 = scmp.lt.s32.totalorder %s20, 1
      %s267 = scalar_select %p266, %s20, 1
      %p268 = scmp.lt.s32.totalorder %s261, 3
      %s269 = scalar_select %p268, %s261, 3
      %s270 = smul.addr %s267, 4
      %s271 = sadd.s32 %s269, %s270
      %s272 = smul.addr %s271, 4
      %s273 = scalar_lea.vmem %s0, %s272
      %p274 = pneg %p51
      %p275 = pneg %p48
      %s276 = sadd.s32 %s21, 1
      %s277 = smul.u32 %s276, 3
      %p278 = scmp.lt.s32.totalorder %s20, 1
      %s279 = scalar_select %p278, %s20, 1
      %p280 = scmp.lt.s32.totalorder %s277, 3
      %s281 = scalar_select %p280, %s277, 3
      %s282 = smul.addr %s279, 4
      %s283 = sadd.s32 %s281, %s282
      %s284 = smul.addr %s283, 4
      %s285 = scalar_lea.vmem %s1, %s284
      %p286 = pneg %p83
      %p287 = pneg %p80
      %p288 = pneg %p104
      %p289 = pneg %p101
      %p290 = pneg %p125
      %p291 = pneg %p122
      %s292 = smul.u32 3, %s21
      %p293 = scmp.lt.s32.totalorder %s20, 1
      %s294 = scalar_select %p293, %s20, 1
      %p295 = scmp.lt.s32.totalorder %s292, 2
      %s296 = scalar_select %p295, %s292, 2
      %s297 = smul.addr %s294, 3
      %s298 = sadd.s32 %s296, %s297
      %s299 = scalar_lea.vmem %s4, %s298
      %p300 = pneg %p153
      %p301 = pneg %p150
      %p302 = pneg %p181
      %p303 = pneg %p178
      %s304 = smul.u32 3, %s21
      %p305 = scmp.lt.s32.totalorder %s20, 1
      %s306 = scalar_select %p305, %s20, 1
      %p307 = scmp.lt.s32.totalorder %s304, 2
      %s308 = scalar_select %p307, %s304, 2
      %s309 = smul.addr %s306, 3
      %s310 = sadd.s32 %s308, %s309
      %s311 = smul.addr %s310, 2
      %s312 = scalar_lea.vmem %s5, %s311
      %s313 = smul.u32 3, %s21
      %s314 = ssub.s32 4, %s313
      %p315 = scmp.lt.s32.totalorder %s314, 3
      %s316 = scalar_select %p315, %s314, 3
      %s317 = smul.u32 4, %s316
      %p318 = scmp.lt.s32.totalorder %s20, 1
      %s319 = scalar_select %p318, %s20, 1
      %p320 = scmp.lt.s32.totalorder %s313, 3
      %s321 = scalar_select %p320, %s313, 3
      %s322 = smul.addr %s319, 4
      %s323 = sadd.s32 %s321, %s322
      %s324 = smul.addr %s323, 4
      %s325 = scalar_lea.vmem %s0, %s324
      %s326 = smul.u32 3, %s21
      %s327 = ssub.s32 4, %s326
      %p328 = scmp.lt.s32.totalorder %s327, 3
      %s329 = scalar_select %p328, %s327, 3
      %s330 = smul.u32 4, %s329
      %s331 = sadd.s32 %s21, 1
      %s332 = smul.u32 %s331, 3
      %p333 = scmp.lt.s32.totalorder %s20, 1
      %s334 = scalar_select %p333, %s20, 1
      %p335 = scmp.lt.s32.totalorder %s332, 3
      %s336 = scalar_select %p335, %s332, 3
      %s337 = smul.addr %s334, 4
      %s338 = sadd.s32 %s336, %s337
      %s339 = smul.addr %s338, 4
      %s340 = scalar_lea.vmem %s1, %s339
      %s341 = sadd.s32 %s21, 1
      %s342 = smul.u32 %s341, 3
      %s343 = smul.u32 3, %s21
      %p344 = scmp.lt.s32.totalorder %s20, 1
      %s345 = scalar_select %p344, %s20, 1
      %p346 = scmp.lt.s32.totalorder %s343, 2
      %s347 = scalar_select %p346, %s343, 2
      %s348 = smul.addr %s345, 3
      %s349 = sadd.s32 %s347, %s348
      %s350 = scalar_lea.vmem %s4, %s349
      %s351 = smul.u32 3, %s21
      %s352 = smul.u32 3, %s21
      %p353 = scmp.lt.s32.totalorder %s20, 1
      %s354 = scalar_select %p353, %s20, 1
      %p355 = scmp.lt.s32.totalorder %s352, 2
      %s356 = scalar_select %p355, %s352, 2
      %s357 = smul.addr %s354, 3
      %s358 = sadd.s32 %s356, %s357
      %s359 = smul.addr %s358, 2
      %s360 = scalar_lea.vmem %s5, %s359
      %s361 = smul.u32 3, %s21
      %v363 = vld [vmem:[%s325] sm:$0xff]
      %v364 = vld [vmem:[%s325 + $0x8] sm:$0xf]
      %v365 = vld [vmem:[%s340] sm:$0xf]
      %v368 = vunpack.c.l.b16 %v363
      %v369 = vunpack.c.h.b16 %v363
      %v370 = vunpack.c.l.b16 %v364
      %v371 = vpack.c.b16 %v368, %v368
      %v372 = vpack.c.b16 %v369, %v369
      %v373 = vpack.c.b16 %v370, %v370
      %v374 = vld [vmem:[%s2] sm:$0x1]
      %s375 = scalar_lea.vmem %s2, 1
      %v376 = vld [vmem:[%s375] sm:$0x1]
      %378 = vrot.lane.b32.xlu0 %v371, 127
      %v379 = vpop.permute.xlu0 %378
      %380 = vrot.lane.b32.xlu0 %v372, 127
      %v381 = vpop.permute.xlu0 %380
      %382 = vrot.lane.b32.xlu0 %v373, 127
      %v383 = vpop.permute.xlu0 %382
      %384 = vrot.lane.b32.xlu0 %v365, 127
      %v385 = vpop.permute.xlu0 %384
      %vm386 = vcmask 1039360
      %v387 = vsel %vm386, %v379, %v381
      %v388 = vsel %vm386, %v381, %v383
      %v389 = vsel %vm386, %v383, %v385
      %vm390 = vcmask 64512
      %v392 = vsel %vm390, %v376, 0
      %vm394 = vcmask 1043456
      %v396 = vsel %vm394, %v387, 0
      %v399 = vsel %vm394, %v388, 0
      %v402 = vsel %vm394, %v389, 0
      %404 = vmatpush.bf16.msra.mxu0 0
      %405 = vmatpush.bf16.msra.mxu0 0
      %406 = vmatpush.bf16.msra.mxu0 0
      %407 = vmatpush.bf16.msra.mxu0 0
      %408 = vmatpush.bf16.msra.mxu0 0
      %409 = vmatpush.bf16.msra.mxu0 0
      %410 = vmatpush.bf16.msra.mxu0 0
      %411 = vmatpush.bf16.msra.mxu0 %v396
      %412 = vmatmul.bf16.gmra.mxu0 %v392
      %v413 = vpop.f32.mrf.mxu0
      %v414 = vadd.f32 0.0, %v413
      %v415 = vpop.f32.mrf.mxu0
      %416 = vdwg.mxu0
      %417 = vmatpush.bf16.msra.mxu0 0
      %418 = vmatpush.bf16.msra.mxu0 0
      %419 = vmatpush.bf16.msra.mxu0 0
      %420 = vmatpush.bf16.msra.mxu0 0
      %421 = vmatpush.bf16.msra.mxu0 0
      %422 = vmatpush.bf16.msra.mxu0 0
      %423 = vmatpush.bf16.msra.mxu0 0
      %424 = vmatpush.bf16.msra.mxu0 %v399
      %425 = vmatmul.bf16.gmra.mxu0 %v392
      %v426 = vpop.f32.mrf.mxu0
      %v427 = vadd.f32 0.0, %v426
      %v428 = vpop.f32.mrf.mxu0
      %429 = vdwg.mxu0
      %430 = vmatpush.bf16.msra.mxu0 0
      %431 = vmatpush.bf16.msra.mxu0 0
      %432 = vmatpush.bf16.msra.mxu0 0
      %433 = vmatpush.bf16.msra.mxu0 0
      %434 = vmatpush.bf16.msra.mxu0 0
      %435 = vmatpush.bf16.msra.mxu0 0
      %436 = vmatpush.bf16.msra.mxu0 0
      %437 = vmatpush.bf16.msra.mxu0 %v402
      %438 = vmatmul.bf16.gmra.mxu0 %v392
      %v439 = vpop.f32.mrf.mxu0
      %v440 = vadd.f32 0.0, %v439
      %v441 = vpop.f32.mrf.mxu0
      %442 = vdwg.mxu0
      %v444 = vsel %vm390, %v374, 0
      %v447 = vsel %vm394, %v371, 0
      %v450 = vsel %vm394, %v372, 0
      %v453 = vsel %vm394, %v373, 0
      %455 = vmatpush.bf16.msra.mxu0 0
      %456 = vmatpush.bf16.msra.mxu0 0
      %457 = vmatpush.bf16.msra.mxu0 0
      %458 = vmatpush.bf16.msra.mxu0 0
      %459 = vmatpush.bf16.msra.mxu0 0
      %460 = vmatpush.bf16.msra.mxu0 0
      %461 = vmatpush.bf16.msra.mxu0 0
      %462 = vmatpush.bf16.msra.mxu0 %v447
      %463 = vmatmul.bf16.gmra.mxu0 %v444
      %v464 = vpop.f32.mrf.mxu0
      %v465 = vadd.f32 %v414, %v464
      %v466 = vpop.f32.mrf.mxu0
      %467 = vdwg.mxu0
      %468 = vmatpush.bf16.msra.mxu0 0
      %469 = vmatpush.bf16.msra.mxu0 0
      %470 = vmatpush.bf16.msra.mxu0 0
      %471 = vmatpush.bf16.msra.mxu0 0
      %472 = vmatpush.bf16.msra.mxu0 0
      %473 = vmatpush.bf16.msra.mxu0 0
      %474 = vmatpush.bf16.msra.mxu0 0
      %475 = vmatpush.bf16.msra.mxu0 %v450
      %476 = vmatmul.bf16.gmra.mxu0 %v444
      %v477 = vpop.f32.mrf.mxu0
      %v478 = vadd.f32 %v427, %v477
      %v479 = vpop.f32.mrf.mxu0
      %480 = vdwg.mxu0
      %481 = vmatpush.bf16.msra.mxu0 0
      %482 = vmatpush.bf16.msra.mxu0 0
      %483 = vmatpush.bf16.msra.mxu0 0
      %484 = vmatpush.bf16.msra.mxu0 0
      %485 = vmatpush.bf16.msra.mxu0 0
      %486 = vmatpush.bf16.msra.mxu0 0
      %487 = vmatpush.bf16.msra.mxu0 0
      %488 = vmatpush.bf16.msra.mxu0 %v453
      %489 = vmatmul.bf16.gmra.mxu0 %v444
      %v490 = vpop.f32.mrf.mxu0
      %v491 = vadd.f32 %v440, %v490
      %v492 = vpop.f32.mrf.mxu0
      %493 = vdwg.mxu0
      %s494 = scalar_lea.vmem %s2, 2
      %v495 = vld [vmem:[%s494] sm:$0x1]
      %496 = vrot.lane.b32.xlu0 %v371, 126
      %v497 = vpop.permute.xlu0 %496
      %498 = vrot.lane.b32.xlu0 %v372, 126
      %v499 = vpop.permute.xlu0 %498
      %500 = vrot.lane.b32.xlu0 %v373, 126
      %v501 = vpop.permute.xlu0 %500
      %502 = vrot.lane.b32.xlu0 %v365, 126
      %v503 = vpop.permute.xlu0 %502
      %vm504 = vcmask 1031168
      %v505 = vsel %vm504, %v497, %v499
      %v506 = vsel %vm504, %v499, %v501
      %v507 = vsel %vm504, %v501, %v503
      %v509 = vsel %vm390, %v495, 0
      %v512 = vsel %vm394, %v505, 0
      %v515 = vsel %vm394, %v506, 0
      %v518 = vsel %vm394, %v507, 0
      %520 = vmatpush.bf16.msra.mxu0 0
      %521 = vmatpush.bf16.msra.mxu0 0
      %522 = vmatpush.bf16.msra.mxu0 0
      %523 = vmatpush.bf16.msra.mxu0 0
      %524 = vmatpush.bf16.msra.mxu0 0
      %525 = vmatpush.bf16.msra.mxu0 0
      %526 = vmatpush.bf16.msra.mxu0 0
      %527 = vmatpush.bf16.msra.mxu0 %v512
      %528 = vmatmul.bf16.gmra.mxu0 %v509
      %v529 = vpop.f32.mrf.mxu0
      %v530 = vadd.f32 0.0, %v529
      %v531 = vpop.f32.mrf.mxu0
      %532 = vdwg.mxu0
      %533 = vmatpush.bf16.msra.mxu0 0
      %534 = vmatpush.bf16.msra.mxu0 0
      %535 = vmatpush.bf16.msra.mxu0 0
      %536 = vmatpush.bf16.msra.mxu0 0
      %537 = vmatpush.bf16.msra.mxu0 0
      %538 = vmatpush.bf16.msra.mxu0 0
      %539 = vmatpush.bf16.msra.mxu0 0
      %540 = vmatpush.bf16.msra.mxu0 %v515
      %541 = vmatmul.bf16.gmra.mxu0 %v509
      %v542 = vpop.f32.mrf.mxu0
      %v543 = vadd.f32 0.0, %v542
      %v544 = vpop.f32.mrf.mxu0
      %545 = vdwg.mxu0
      %546 = vmatpush.bf16.msra.mxu0 0
      %547 = vmatpush.bf16.msra.mxu0 0
      %548 = vmatpush.bf16.msra.mxu0 0
      %549 = vmatpush.bf16.msra.mxu0 0
      %550 = vmatpush.bf16.msra.mxu0 0
      %551 = vmatpush.bf16.msra.mxu0 0
      %552 = vmatpush.bf16.msra.mxu0 0
      %553 = vmatpush.bf16.msra.mxu0 %v518
      %554 = vmatmul.bf16.gmra.mxu0 %v509
      %v555 = vpop.f32.mrf.mxu0
      %v556 = vadd.f32 0.0, %v555
      %v557 = vpop.f32.mrf.mxu0
      %558 = vdwg.mxu0
      %v559 = vadd.f32 %v465, %v530
      %v560 = vadd.f32 %v478, %v543
      %v561 = vadd.f32 %v491, %v556
      %s562 = scalar_lea.vmem %s2, 3
      %v563 = vld [vmem:[%s562] sm:$0x1]
      %564 = vrot.lane.b32.xlu0 %v371, 110
      %v565 = vpop.permute.xlu0 %564
      %566 = vrot.lane.b32.xlu0 %v372, 110
      %v567 = vpop.permute.xlu0 %566
      %568 = vrot.lane.b32.xlu0 %v373, 110
      %v569 = vpop.permute.xlu0 %568
      %570 = vrot.lane.b32.xlu0 %v365, 110
      %v571 = vpop.permute.xlu0 %570
      %vm572 = vcmask 900096
      %v573 = vsel %vm572, %v565, %v567
      %v574 = vsel %vm572, %v567, %v569
      %v575 = vsel %vm572, %v569, %v571
      %v577 = vsel %vm390, %v563, 0
      %v580 = vsel %vm394, %v573, 0
      %v583 = vsel %vm394, %v574, 0
      %v586 = vsel %vm394, %v575, 0
      %588 = vmatpush.bf16.msra.mxu0 0
      %589 = vmatpush.bf16.msra.mxu0 0
      %590 = vmatpush.bf16.msra.mxu0 0
      %591 = vmatpush.bf16.msra.mxu0 0
      %592 = vmatpush.bf16.msra.mxu0 0
      %593 = vmatpush.bf16.msra.mxu0 0
      %594 = vmatpush.bf16.msra.mxu0 0
      %595 = vmatpush.bf16.msra.mxu0 %v580
      %596 = vmatmul.bf16.gmra.mxu0 %v577
      %v597 = vpop.f32.mrf.mxu0
      %v598 = vadd.f32 0.0, %v597
      %v599 = vpop.f32.mrf.mxu0
      %600 = vdwg.mxu0
      %601 = vmatpush.bf16.msra.mxu0 0
      %602 = vmatpush.bf16.msra.mxu0 0
      %603 = vmatpush.bf16.msra.mxu0 0
      %604 = vmatpush.bf16.msra.mxu0 0
      %605 = vmatpush.bf16.msra.mxu0 0
      %606 = vmatpush.bf16.msra.mxu0 0
      %607 = vmatpush.bf16.msra.mxu0 0
      %608 = vmatpush.bf16.msra.mxu0 %v583
      %609 = vmatmul.bf16.gmra.mxu0 %v577
      %v610 = vpop.f32.mrf.mxu0
      %v611 = vadd.f32 0.0, %v610
      %v612 = vpop.f32.mrf.mxu0
      %613 = vdwg.mxu0
      %614 = vmatpush.bf16.msra.mxu0 0
      %615 = vmatpush.bf16.msra.mxu0 0
      %616 = vmatpush.bf16.msra.mxu0 0
      %617 = vmatpush.bf16.msra.mxu0 0
      %618 = vmatpush.bf16.msra.mxu0 0
      %619 = vmatpush.bf16.msra.mxu0 0
      %620 = vmatpush.bf16.msra.mxu0 0
      %621 = vmatpush.bf16.msra.mxu0 %v586
      %622 = vmatmul.bf16.gmra.mxu0 %v577
      %v623 = vpop.f32.mrf.mxu0
      %v624 = vadd.f32 0.0, %v623
      %v625 = vpop.f32.mrf.mxu0
      %626 = vdwg.mxu0
      %v627 = vadd.f32 %v559, %v598
      %v628 = vadd.f32 %v560, %v611
      %v629 = vadd.f32 %v561, %v624
      %s630 = scalar_lea.vmem %s2, 4
      %v631 = vld [vmem:[%s630] sm:$0x1]
      %632 = vrot.lane.b32.xlu0 %v371, 109
      %v633 = vpop.permute.xlu0 %632
      %634 = vrot.lane.b32.xlu0 %v372, 109
      %v635 = vpop.permute.xlu0 %634
      %636 = vrot.lane.b32.xlu0 %v373, 109
      %v637 = vpop.permute.xlu0 %636
      %638 = vrot.lane.b32.xlu0 %v365, 109
      %v639 = vpop.permute.xlu0 %638
      %vm640 = vcmask 891904
      %v641 = vsel %vm640, %v633, %v635
      %v642 = vsel %vm640, %v635, %v637
      %v643 = vsel %vm640, %v637, %v639
      %v645 = vsel %vm390, %v631, 0
      %v648 = vsel %vm394, %v641, 0
      %v651 = vsel %vm394, %v642, 0
      %v654 = vsel %vm394, %v643, 0
      %656 = vmatpush.bf16.msra.mxu0 0
      %657 = vmatpush.bf16.msra.mxu0 0
      %658 = vmatpush.bf16.msra.mxu0 0
      %659 = vmatpush.bf16.msra.mxu0 0
      %660 = vmatpush.bf16.msra.mxu0 0
      %661 = vmatpush.bf16.msra.mxu0 0
      %662 = vmatpush.bf16.msra.mxu0 0
      %663 = vmatpush.bf16.msra.mxu0 %v648
      %664 = vmatmul.bf16.gmra.mxu0 %v645
      %v665 = vpop.f32.mrf.mxu0
      %v666 = vadd.f32 0.0, %v665
      %v667 = vpop.f32.mrf.mxu0
      %668 = vdwg.mxu0
      %669 = vmatpush.bf16.msra.mxu0 0
      %670 = vmatpush.bf16.msra.mxu0 0
      %671 = vmatpush.bf16.msra.mxu0 0
      %672 = vmatpush.bf16.msra.mxu0 0
      %673 = vmatpush.bf16.msra.mxu0 0
      %674 = vmatpush.bf16.msra.mxu0 0
      %675 = vmatpush.bf16.msra.mxu0 0
      %676 = vmatpush.bf16.msra.mxu0 %v651
      %677 = vmatmul.bf16.gmra.mxu0 %v645
      %v678 = vpop.f32.mrf.mxu0
      %v679 = vadd.f32 0.0, %v678
      %v680 = vpop.f32.mrf.mxu0
      %681 = vdwg.mxu0
      %682 = vmatpush.bf16.msra.mxu0 0
      %683 = vmatpush.bf16.msra.mxu0 0
      %684 = vmatpush.bf16.msra.mxu0 0
      %685 = vmatpush.bf16.msra.mxu0 0
      %686 = vmatpush.bf16.msra.mxu0 0
      %687 = vmatpush.bf16.msra.mxu0 0
      %688 = vmatpush.bf16.msra.mxu0 0
      %689 = vmatpush.bf16.msra.mxu0 %v654
      %690 = vmatmul.bf16.gmra.mxu0 %v645
      %v691 = vpop.f32.mrf.mxu0
      %v692 = vadd.f32 0.0, %v691
      %v693 = vpop.f32.mrf.mxu0
      %694 = vdwg.mxu0
      %v695 = vadd.f32 %v627, %v666
      %v696 = vadd.f32 %v628, %v679
      %v697 = vadd.f32 %v629, %v692
      %s698 = scalar_lea.vmem %s2, 5
      %v699 = vld [vmem:[%s698] sm:$0x1]
      %700 = vrot.lane.b32.xlu0 %v371, 108
      %v701 = vpop.permute.xlu0 %700
      %702 = vrot.lane.b32.xlu0 %v372, 108
      %v703 = vpop.permute.xlu0 %702
      %704 = vrot.lane.b32.xlu0 %v373, 108
      %v705 = vpop.permute.xlu0 %704
      %706 = vrot.lane.b32.xlu0 %v365, 108
      %v707 = vpop.permute.xlu0 %706
      %vm708 = vcmask 883712
      %v709 = vsel %vm708, %v701, %v703
      %v710 = vsel %vm708, %v703, %v705
      %v711 = vsel %vm708, %v705, %v707
      %v713 = vsel %vm390, %v699, 0
      %v716 = vsel %vm394, %v709, 0
      %v719 = vsel %vm394, %v710, 0
      %v722 = vsel %vm394, %v711, 0
      %724 = vmatpush.bf16.msra.mxu0 0
      %725 = vmatpush.bf16.msra.mxu0 0
      %726 = vmatpush.bf16.msra.mxu0 0
      %727 = vmatpush.bf16.msra.mxu0 0
      %728 = vmatpush.bf16.msra.mxu0 0
      %729 = vmatpush.bf16.msra.mxu0 0
      %730 = vmatpush.bf16.msra.mxu0 0
      %731 = vmatpush.bf16.msra.mxu0 %v716
      %732 = vmatmul.bf16.gmra.mxu0 %v713
      %v733 = vpop.f32.mrf.mxu0
      %v734 = vadd.f32 0.0, %v733
      %v735 = vpop.f32.mrf.mxu0
      %736 = vdwg.mxu0
      %737 = vmatpush.bf16.msra.mxu0 0
      %738 = vmatpush.bf16.msra.mxu0 0
      %739 = vmatpush.bf16.msra.mxu0 0
      %740 = vmatpush.bf16.msra.mxu0 0
      %741 = vmatpush.bf16.msra.mxu0 0
      %742 = vmatpush.bf16.msra.mxu0 0
      %743 = vmatpush.bf16.msra.mxu0 0
      %744 = vmatpush.bf16.msra.mxu0 %v719
      %745 = vmatmul.bf16.gmra.mxu0 %v713
      %v746 = vpop.f32.mrf.mxu0
      %v747 = vadd.f32 0.0, %v746
      %v748 = vpop.f32.mrf.mxu0
      %749 = vdwg.mxu0
      %750 = vmatpush.bf16.msra.mxu0 0
      %751 = vmatpush.bf16.msra.mxu0 0
      %752 = vmatpush.bf16.msra.mxu0 0
      %753 = vmatpush.bf16.msra.mxu0 0
      %754 = vmatpush.bf16.msra.mxu0 0
      %755 = vmatpush.bf16.msra.mxu0 0
      %756 = vmatpush.bf16.msra.mxu0 0
      %757 = vmatpush.bf16.msra.mxu0 %v722
      %758 = vmatmul.bf16.gmra.mxu0 %v713
      %v759 = vpop.f32.mrf.mxu0
      %v760 = vadd.f32 0.0, %v759
      %v761 = vpop.f32.mrf.mxu0
      %762 = vdwg.mxu0
      %v763 = vadd.f32 %v695, %v734
      %v764 = vadd.f32 %v696, %v747
      %v765 = vadd.f32 %v697, %v760
      %s766 = scalar_lea.vmem %s2, 6
      %v767 = vld [vmem:[%s766] sm:$0x1]
      %768 = vrot.lane.b32.xlu0 %v371, 92
      %v769 = vpop.permute.xlu0 %768
      %770 = vrot.lane.b32.xlu0 %v372, 92
      %v771 = vpop.permute.xlu0 %770
      %772 = vrot.lane.b32.xlu0 %v373, 92
      %v773 = vpop.permute.xlu0 %772
      %774 = vrot.lane.b32.xlu0 %v365, 92
      %v775 = vpop.permute.xlu0 %774
      %vm776 = vcmask 752640
      %v777 = vsel %vm776, %v769, %v771
      %v778 = vsel %vm776, %v771, %v773
      %v779 = vsel %vm776, %v773, %v775
      %v781 = vsel %vm390, %v767, 0
      %v784 = vsel %vm394, %v777, 0
      %v787 = vsel %vm394, %v778, 0
      %v790 = vsel %vm394, %v779, 0
      %792 = vmatpush.bf16.msra.mxu0 0
      %793 = vmatpush.bf16.msra.mxu0 0
      %794 = vmatpush.bf16.msra.mxu0 0
      %795 = vmatpush.bf16.msra.mxu0 0
      %796 = vmatpush.bf16.msra.mxu0 0
      %797 = vmatpush.bf16.msra.mxu0 0
      %798 = vmatpush.bf16.msra.mxu0 0
      %799 = vmatpush.bf16.msra.mxu0 %v784
      %800 = vmatmul.bf16.gmra.mxu0 %v781
      %v801 = vpop.f32.mrf.mxu0
      %v802 = vadd.f32 0.0, %v801
      %v803 = vpop.f32.mrf.mxu0
      %804 = vdwg.mxu0
      %805 = vmatpush.bf16.msra.mxu0 0
      %806 = vmatpush.bf16.msra.mxu0 0
      %807 = vmatpush.bf16.msra.mxu0 0
      %808 = vmatpush.bf16.msra.mxu0 0
      %809 = vmatpush.bf16.msra.mxu0 0
      %810 = vmatpush.bf16.msra.mxu0 0
      %811 = vmatpush.bf16.msra.mxu0 0
      %812 = vmatpush.bf16.msra.mxu0 %v787
      %813 = vmatmul.bf16.gmra.mxu0 %v781
      %v814 = vpop.f32.mrf.mxu0
      %v815 = vadd.f32 0.0, %v814
      %v816 = vpop.f32.mrf.mxu0
      %817 = vdwg.mxu0
      %818 = vmatpush.bf16.msra.mxu0 0
      %819 = vmatpush.bf16.msra.mxu0 0
      %820 = vmatpush.bf16.msra.mxu0 0
      %821 = vmatpush.bf16.msra.mxu0 0
      %822 = vmatpush.bf16.msra.mxu0 0
      %823 = vmatpush.bf16.msra.mxu0 0
      %824 = vmatpush.bf16.msra.mxu0 0
      %825 = vmatpush.bf16.msra.mxu0 %v790
      %826 = vmatmul.bf16.gmra.mxu0 %v781
      %v827 = vpop.f32.mrf.mxu0
      %v828 = vadd.f32 0.0, %v827
      %v829 = vpop.f32.mrf.mxu0
      %830 = vdwg.mxu0
      %v831 = vadd.f32 %v763, %v802
      %v832 = vadd.f32 %v764, %v815
      %v833 = vadd.f32 %v765, %v828
      %s834 = scalar_lea.vmem %s2, 7
      %v835 = vld [vmem:[%s834] sm:$0x1]
      %836 = vrot.lane.b32.xlu0 %v371, 91
      %v837 = vpop.permute.xlu0 %836
      %838 = vrot.lane.b32.xlu0 %v372, 91
      %v839 = vpop.permute.xlu0 %838
      %840 = vrot.lane.b32.xlu0 %v373, 91
      %v841 = vpop.permute.xlu0 %840
      %842 = vrot.lane.b32.xlu0 %v365, 91
      %v843 = vpop.permute.xlu0 %842
      %vm844 = vcmask 744448
      %v845 = vsel %vm844, %v837, %v839
      %v846 = vsel %vm844, %v839, %v841
      %v847 = vsel %vm844, %v841, %v843
      %v849 = vsel %vm390, %v835, 0
      %v852 = vsel %vm394, %v845, 0
      %v855 = vsel %vm394, %v846, 0
      %v858 = vsel %vm394, %v847, 0
      %860 = vmatpush.bf16.msra.mxu0 0
      %861 = vmatpush.bf16.msra.mxu0 0
      %862 = vmatpush.bf16.msra.mxu0 0
      %863 = vmatpush.bf16.msra.mxu0 0
      %864 = vmatpush.bf16.msra.mxu0 0
      %865 = vmatpush.bf16.msra.mxu0 0
      %866 = vmatpush.bf16.msra.mxu0 0
      %867 = vmatpush.bf16.msra.mxu0 %v852
      %868 = vmatmul.bf16.gmra.mxu0 %v849
      %v869 = vpop.f32.mrf.mxu0
      %v870 = vadd.f32 0.0, %v869
      %v871 = vpop.f32.mrf.mxu0
      %872 = vdwg.mxu0
      %873 = vmatpush.bf16.msra.mxu0 0
      %874 = vmatpush.bf16.msra.mxu0 0
      %875 = vmatpush.bf16.msra.mxu0 0
      %876 = vmatpush.bf16.msra.mxu0 0
      %877 = vmatpush.bf16.msra.mxu0 0
      %878 = vmatpush.bf16.msra.mxu0 0
      %879 = vmatpush.bf16.msra.mxu0 0
      %880 = vmatpush.bf16.msra.mxu0 %v855
      %881 = vmatmul.bf16.gmra.mxu0 %v849
      %v882 = vpop.f32.mrf.mxu0
      %v883 = vadd.f32 0.0, %v882
      %v884 = vpop.f32.mrf.mxu0
      %885 = vdwg.mxu0
      %886 = vmatpush.bf16.msra.mxu0 0
      %887 = vmatpush.bf16.msra.mxu0 0
      %888 = vmatpush.bf16.msra.mxu0 0
      %889 = vmatpush.bf16.msra.mxu0 0
      %890 = vmatpush.bf16.msra.mxu0 0
      %891 = vmatpush.bf16.msra.mxu0 0
      %892 = vmatpush.bf16.msra.mxu0 0
      %893 = vmatpush.bf16.msra.mxu0 %v858
      %894 = vmatmul.bf16.gmra.mxu0 %v849
      %v895 = vpop.f32.mrf.mxu0
      %v896 = vadd.f32 0.0, %v895
      %v897 = vpop.f32.mrf.mxu0
      %898 = vdwg.mxu0
      %v899 = vadd.f32 %v831, %v870
      %v900 = vadd.f32 %v832, %v883
      %v901 = vadd.f32 %v833, %v896
      %s902 = scalar_lea.vmem %s2, 8
      %v903 = vld [vmem:[%s902] sm:$0x1]
      %904 = vrot.lane.b32.xlu0 %v371, 90
      %v905 = vpop.permute.xlu0 %904
      %906 = vrot.lane.b32.xlu0 %v372, 90
      %v907 = vpop.permute.xlu0 %906
      %908 = vrot.lane.b32.xlu0 %v373, 90
      %v909 = vpop.permute.xlu0 %908
      %910 = vrot.lane.b32.xlu0 %v365, 90
      %v911 = vpop.permute.xlu0 %910
      %vm912 = vcmask 736256
      %v913 = vsel %vm912, %v905, %v907
      %v914 = vsel %vm912, %v907, %v909
      %v915 = vsel %vm912, %v909, %v911
      %v917 = vsel %vm390, %v903, 0
      %v920 = vsel %vm394, %v913, 0
      %v923 = vsel %vm394, %v914, 0
      %v926 = vsel %vm394, %v915, 0
      %928 = vmatpush.bf16.msra.mxu0 0
      %929 = vmatpush.bf16.msra.mxu0 0
      %930 = vmatpush.bf16.msra.mxu0 0
      %931 = vmatpush.bf16.msra.mxu0 0
      %932 = vmatpush.bf16.msra.mxu0 0
      %933 = vmatpush.bf16.msra.mxu0 0
      %934 = vmatpush.bf16.msra.mxu0 0
      %935 = vmatpush.bf16.msra.mxu0 %v920
      %936 = vmatmul.bf16.gmra.mxu0 %v917
      %v937 = vpop.f32.mrf.mxu0
      %v938 = vadd.f32 0.0, %v937
      %v939 = vpop.f32.mrf.mxu0
      %940 = vdwg.mxu0
      %941 = vmatpush.bf16.msra.mxu0 0
      %942 = vmatpush.bf16.msra.mxu0 0
      %943 = vmatpush.bf16.msra.mxu0 0
      %944 = vmatpush.bf16.msra.mxu0 0
      %945 = vmatpush.bf16.msra.mxu0 0
      %946 = vmatpush.bf16.msra.mxu0 0
      %947 = vmatpush.bf16.msra.mxu0 0
      %948 = vmatpush.bf16.msra.mxu0 %v923
      %949 = vmatmul.bf16.gmra.mxu0 %v917
      %v950 = vpop.f32.mrf.mxu0
      %v951 = vadd.f32 0.0, %v950
      %v952 = vpop.f32.mrf.mxu0
      %953 = vdwg.mxu0
      %954 = vmatpush.bf16.msra.mxu0 0
      %955 = vmatpush.bf16.msra.mxu0 0
      %956 = vmatpush.bf16.msra.mxu0 0
      %957 = vmatpush.bf16.msra.mxu0 0
      %958 = vmatpush.bf16.msra.mxu0 0
      %959 = vmatpush.bf16.msra.mxu0 0
      %960 = vmatpush.bf16.msra.mxu0 0
      %961 = vmatpush.bf16.msra.mxu0 %v926
      %962 = vmatmul.bf16.gmra.mxu0 %v917
      %v963 = vpop.f32.mrf.mxu0
      %v964 = vadd.f32 0.0, %v963
      %v965 = vpop.f32.mrf.mxu0
      %966 = vdwg.mxu0
      %v967 = vadd.f32 %v899, %v938
      %v968 = vadd.f32 %v900, %v951
      %v969 = vadd.f32 %v901, %v964
      %v970 = vld [vmem:[%s3] sm:$0x3]
      %972 = vset.pattern.permute.xlu0 0
      %973 = vperm.xlu0 %972, %v970
      %v974 = vpop.permute.xlu0 %973
      %v976 = vadd.f32 %v967, %v974
      %v977 = vadd.f32 %v968, %v974
      %v978 = vadd.f32 %v969, %v974
      %v979 = vmax.f32 %v976, 0.0
      %v980 = vmax.f32 %v977, 0.0
      %v981 = vmax.f32 %v978, 0.0
      %v982 = vld [vmem:[%s350] sm:$0x7]
      %v983 = vunpack.c.l.bf16 %v982
      %985 = vst [vmem:[#allocation1] ss:$4 sm:$0xff] %v983
      %v986 = vld.sshfl [vmem:[#allocation1] sm:$0xff pattern:$0x73625140]
      %v987 = vld.sshfl [vmem:[#allocation1 + $0x8] sm:$0xff pattern:$0x73625140]
      %v988 = vld.sshfl [vmem:[#allocation1 + $0x10] sm:$0xff pattern:$0x73625140]
      %v992 = vadd.f32 %v979, %v986
      %v993 = vadd.f32 %v980, %v987
      %v994 = vadd.f32 %v981, %v988
      %v998 = vrot.slane %v993, 6
      %v999 = vrot.slane %v994, 4
      %vm1000 = vcmask 1041408
      %v1001 = vsel %vm1000, %v992, %v998
      %v1002 = vsel %vm394, %v1001, %v999
      %1004 = vst [vmem:[%s360] sm:$0x3f] %v1002
      %s1005 = smul.u32 3, %s21
      %p1006 = scmp.lt.s32.totalorder %s20, 1
      %s1007 = scalar_select %p1006, %s20, 1
      %p1008 = scmp.lt.s32.totalorder %s1005, 2
      %s1009 = scalar_select %p1008, %s1005, 2
      %s1010 = smul.addr %s1007, 3
      %s1011 = sadd.s32 %s1009, %s1010
      %s1012 = smul.addr %s1011, 2
      %s1013 = scalar_lea.vmem %s5, %s1012
      // Predicated region
      $region41: #{att_ffc_forward.8} parent=39 // pred_check
        %p1014 = pneg %p178
      $region42: #{att_ffc_forward.8} parent=39 // pred_check_branch
        %1016 = sbr.rel (%p1014) target = $region44
      $region43: #{att_ffc_forward.8} parent=39 // pred_region
        %s1017 = smul.u32 3, %s21
      $region44: #{att_ffc_forward.8} parent=39 // pred_fallthru
        _
    $region40: #{att_ffc_forward.8} parent=5 // pred_fallthru
      _
    %p1018 = scmp.le.s32.totalorder 2, %s11
    // Predicated region
    $region45: #{att_ffc_forward.8} parent=5 // pred_check
      %p1019 = pneg %p1018
    $region46: #{att_ffc_forward.8} parent=5 // pred_check_branch
      %1021 = sbr.rel (%p1019) target = $region48
    $region47: #{att_ffc_forward.8} parent=5 // pred_region
      %s1022 = ssub.s32 %s11, 2
      // Predicated region
      $region49: #{att_ffc_forward.8} parent=47 // pred_check
        %p1023 = pneg %p184
      $region50: #{att_ffc_forward.8} parent=47 // pred_check_branch
        %1025 = sbr.rel (%p1023) target = $region52
      $region51: #{att_ffc_forward.8} parent=47 // pred_region
        %s1026 = smul.u32 3, %s23
        %p1027 = scmp.lt.s32.totalorder %s22, 1
        %s1028 = scalar_select %p1027, %s22, 1
        %p1029 = scmp.lt.s32.totalorder %s1026, 2
        %s1030 = scalar_select %p1029, %s1026, 2
        %s1031 = smul.addr %s1028, 3
        %s1032 = sadd.s32 %s1030, %s1031
        %s1033 = smul.addr %s1032, 2
        %s1034 = scalar_lea.vmem %s5, %s1033
      $region52: #{att_ffc_forward.8} parent=47 // pred_fallthru
        _
    $region48: #{att_ffc_forward.8} parent=5 // pred_fallthru
      _
  $region6: #{att_ffc_forward.8} parent=0 // loop_footer
    %s15 = sadd.s32 1, %s11
  $region7: #{att_ffc_forward.8} parent=0 // loop_footer_branch
    %10 = sbr.rel target = $region3
  $region8: #{att_ffc_forward.8} parent=0 // loop_exit
    _

// kernel: att_ffc_forward.9
$region0: #{att_ffc_forward.9}
  #allocation0 [shape = 'u32[]', space=smem, size = 0x4, offset = 0x4, fixed_abs, tag = 'smem constant byte address 0x4 - core index']
  #allocation1 [shape = 'u32[72,128]{1,0:T(1,128)}', space=vmem, size = 0x9000, scoped, tag = 'internal scratch']
  %s0 = inlined_call_operand.vmem [shape: bf16[2,6,256], index: 0, kind: input, shape index: {}]
  %s1 = inlined_call_operand.vmem [shape: bf16[3,6], index: 1, kind: input, shape index: {}]
  %s2 = inlined_call_operand.vmem [shape: f32[3,1], index: 2, kind: input, shape index: {}]
  %s3 = inlined_call_operand.vmem [shape: bf16[2,3,256], index: 3, kind: output, shape index: {}]
  %s4 = sld [smem:[#allocation0]]
  $region45: #{att_ffc_forward.9} parent=0
    _
  %s6 = ssub.s32 1, %s4
  %s7 = scalar_select 0, %s6, %s4
  loop: start=0, step=1, limit=4
  $region2: #{att_ffc_forward.9} parent=0 // loop_pre_header
    _
  $region3: #{att_ffc_forward.9} parent=0 // loop_header
    %s9 = sphi 0, %s13
    %p10 = scmp.ge.s32.totalorder %s9, 4
    %s16 = sphi 0, %s28
    %s17 = sphi 0, %s24
    %s18 = sphi 0, %s16
    %s19 = sphi 0, %s17
    %s20 = sphi 0, %s18
    %s21 = sphi 0, %s19
    %s33 = sphi 0, %s35
    %s36 = sphi 0, %s33
    %s37 = sphi 0, %s36
    %s53 = sphi 0, %s37
    %s57 = sphi 0, %s57
    %s59 = sphi 0, %s57
    %s60 = sphi 0, %s59
    %s74 = sphi 0, %s60
    %s78 = sphi 0, %s78
    %s80 = sphi 0, %s78
    %s81 = sphi 0, %s80
    %s95 = sphi 0, %s81
    %s103 = sphi 0, %s105
    %s106 = sphi 0, %s103
    %s107 = sphi 0, %s106
    %s123 = sphi 0, %s107
  $region4: #{att_ffc_forward.9} parent=0 // loop_header_branch
    %12 = sbr.rel (%p10) target = $region8
  $region5: #{att_ffc_forward.9} parent=0 // loop_body
    %s14 = ssub.s32 %s9, 1
    %s15 = ssub.s32 %s9, 2
    %s22 = sadd.s32 1, %s17
    %p23 = scmp.ge.s32.totalorder %s22, 1
    %s24 = scalar_select %p23, 0, %s22
    %s25 = sadd.s32 1, %s16
    %s26 = scalar_select %p23, %s25, %s16
    %p27 = scmp.ge.s32.totalorder %s26, 2
    %s28 = scalar_select %p27, 0, %s26
    %s29 = ssub.s32 %s16, %s28
    %s30 = ssub.s32 %s17, %s24
    %s31 = sor.u32 %s29, %s30
    %p32 = scmp.eq.s32.totalorder %s31, 0
    %s34 = sadd.s32 %s33, 1
    %s35 = scalar_select %p32, %s33, %s34
    %p38 = pneg %p32
    %p39 = scmp.eq.s32.totalorder %s9, 1
    %p40 = por %p38, %p39
    %p41 = scmp.ne.s32.totalorder %s33, %s36
    %p42 = scmp.eq.s32.totalorder %s9, 0
    %p43 = por %p41, %p42
    %p44 = scmp.ne.s32.totalorder %s33, %s36
    %p45 = scmp.eq.s32.totalorder %s14, 1
    %p46 = por %p44, %p45
    %p47 = scmp.ne.s32.totalorder %s36, %s37
    %p48 = scmp.eq.s32.totalorder %s14, 0
    %p49 = por %p47, %p48
    %p50 = scmp.ne.s32.totalorder %s36, %s37
    %p51 = scmp.eq.s32.totalorder %s15, 1
    %p52 = por %p50, %p51
    %p54 = scmp.ne.s32.totalorder %s37, %s53
    %p55 = scmp.eq.s32.totalorder %s15, 0
    %p56 = por %p54, %p55
    %s58 = sadd.s32 %s57, 1
    %p61 = scmp.eq.s32.totalorder %s9, 1
    %p62 = scmp.ne.s32.totalorder %s57, %s59
    %p63 = scmp.eq.s32.totalorder %s9, 0
    %p64 = por %p62, %p63
    %p65 = scmp.ne.s32.totalorder %s57, %s59
    %p66 = scmp.eq.s32.totalorder %s14, 1
    %p67 = por %p65, %p66
    %p68 = scmp.ne.s32.totalorder %s59, %s60
    %p69 = scmp.eq.s32.totalorder %s14, 0
    %p70 = por %p68, %p69
    %p71 = scmp.ne.s32.totalorder %s59, %s60
    %p72 = scmp.eq.s32.totalorder %s15, 1
    %p73 = por %p71, %p72
    %p75 = scmp.ne.s32.totalorder %s60, %s74
    %p76 = scmp.eq.s32.totalorder %s15, 0
    %p77 = por %p75, %p76
    %s79 = sadd.s32 %s78, 1
    %p82 = scmp.eq.s32.totalorder %s9, 1
    %p83 = scmp.ne.s32.totalorder %s78, %s80
    %p84 = scmp.eq.s32.totalorder %s9, 0
    %p85 = por %p83, %p84
    %p86 = scmp.ne.s32.totalorder %s78, %s80
    %p87 = scmp.eq.s32.totalorder %s14, 1
    %p88 = por %p86, %p87
    %p89 = scmp.ne.s32.totalorder %s80, %s81
    %p90 = scmp.eq.s32.totalorder %s14, 0
    %p91 = por %p89, %p90
    %p92 = scmp.ne.s32.totalorder %s80, %s81
    %p93 = scmp.eq.s32.totalorder %s15, 1
    %p94 = por %p92, %p93
    %p96 = scmp.ne.s32.totalorder %s81, %s95
    %p97 = scmp.eq.s32.totalorder %s15, 0
    %p98 = por %p96, %p97
    %s99 = ssub.s32 %s16, %s28
    %s100 = ssub.s32 %s17, %s24
    %s101 = sor.u32 %s99, %s100
    %p102 = scmp.eq.s32.totalorder %s101, 0
    %s104 = sadd.s32 %s103, 1
    %s105 = scalar_select %p102, %s103, %s104
    %p108 = pneg %p102
    %p109 = scmp.eq.s32.totalorder %s9, 1
    %p110 = por %p108, %p109
    %p111 = scmp.ne.s32.totalorder %s103, %s106
    %p112 = scmp.eq.s32.totalorder %s9, 0
    %p113 = por %p111, %p112
    %p114 = scmp.ne.s32.totalorder %s103, %s106
    %p115 = scmp.eq.s32.totalorder %s14, 1
    %p116 = por %p114, %p115
    %p117 = scmp.ne.s32.totalorder %s106, %s107
    %p118 = scmp.eq.s32.totalorder %s14, 0
    %p119 = por %p117, %p118
    %p120 = scmp.ne.s32.totalorder %s106, %s107
    %p121 = scmp.eq.s32.totalorder %s15, 1
    %p122 = por %p120, %p121
    %p124 = scmp.ne.s32.totalorder %s107, %s123
    %p125 = scmp.eq.s32.totalorder %s15, 0
    %p126 = por %p124, %p125
    %p127 = scmp.le.s32.totalorder 1, %s9
    %p128 = scmp.lt.s32.totalorder %s9, 3
    %p129 = pnand %p127, %p128
    %p130 = pneg %p129
    // Predicated region
    $region9: #{att_ffc_forward.9} parent=5 // pred_check
      _
    $region10: #{att_ffc_forward.9} parent=5 // pred_check_branch
      %132 = sbr.rel (%p129) target = $region12
    $region11: #{att_ffc_forward.9} parent=5 // pred_region
      %s133 = ssub.s32 %s9, 1
      // Predicated region
      $region13: #{att_ffc_forward.9} parent=11 // pred_check
        %p134 = pneg %p70
      $region14: #{att_ffc_forward.9} parent=11 // pred_check_branch
        %136 = sbr.rel (%p134) target = $region16
      $region15: #{att_ffc_forward.9} parent=11 // pred_region
        _
      $region16: #{att_ffc_forward.9} parent=11 // pred_fallthru
        _
      // Predicated region
      $region17: #{att_ffc_forward.9} parent=11 // pred_check
        %p137 = pneg %p91
      $region18: #{att_ffc_forward.9} parent=11 // pred_check_branch
        %139 = sbr.rel (%p137) target = $region20
      $region19: #{att_ffc_forward.9} parent=11 // pred_region
        _
      $region20: #{att_ffc_forward.9} parent=11 // pred_fallthru
        _
    $region12: #{att_ffc_forward.9} parent=5 // pred_fallthru
      _
    %p140 = scmp.lt.s32.totalorder %s9, 2
    // Predicated region
    $region21: #{att_ffc_forward.9} parent=5 // pred_check
      %p141 = pneg %p140
    $region22: #{att_ffc_forward.9} parent=5 // pred_check_branch
      %143 = sbr.rel (%p141) target = $region24
    $region23: #{att_ffc_forward.9} parent=5 // pred_region
      // Predicated region
      $region25: #{att_ffc_forward.9} parent=23 // pred_check
        %p144 = pneg %p43
      $region26: #{att_ffc_forward.9} parent=23 // pred_check_branch
        %146 = sbr.rel (%p144) target = $region28
      $region27: #{att_ffc_forward.9} parent=23 // pred_region
        %s147 = smul.u32 2, %s17
        %p148 = scmp.lt.s32.totalorder %s16, 1
        %s149 = scalar_select %p148, %s16, 1
        %p150 = scmp.lt.s32.totalorder %s147, 1
        %s151 = scalar_select %p150, %s147, 1
        %s152 = smul.addr %s149, 2
        %s153 = sadd.s32 %s151, %s152
        %s154 = smul.addr %s153, 4
        %s155 = scalar_lea.vmem %s0, %s154
        %s156 = smul.u32 2, %s17
      $region28: #{att_ffc_forward.9} parent=23 // pred_fallthru
        _
    $region24: #{att_ffc_forward.9} parent=5 // pred_fallthru
      _
    %p157 = scmp.le.s32.totalorder 1, %s9
    %p158 = scmp.lt.s32.totalorder %s9, 3
    %p159 = pnand %p157, %p158
    %p160 = pneg %p159
    // Predicated region
    $region29: #{att_ffc_forward.9} parent=5 // pred_check
      _
    $region30: #{att_ffc_forward.9} parent=5 // pred_check_branch
      %162 = sbr.rel (%p159) target = $region32
    $region31: #{att_ffc_forward.9} parent=5 // pred_region
      %s163 = ssub.s32 %s9, 1
      %s164 = smul.u32 2, %s19
      %p165 = scmp.lt.s32.totalorder %s18, 1
      %s166 = scalar_select %p165, %s18, 1
      %p167 = scmp.lt.s32.totalorder %s164, 1
      %s168 = scalar_select %p167, %s164, 1
      %s169 = smul.addr %s166, 2
      %s170 = sadd.s32 %s168, %s169
      %s171 = smul.addr %s170, 4
      %s172 = scalar_lea.vmem %s0, %s171
      %p173 = pneg %p49
      %p174 = pneg %p46
      %p175 = pneg %p70
      %p176 = pneg %p67
      %p177 = pneg %p91
      %p178 = pneg %p88
      %p179 = pneg %p119
      %p180 = pneg %p116
      %s181 = smul.u32 2, %s19
      %p182 = scmp.lt.s32.totalorder %s18, 1
      %s183 = scalar_select %p182, %s18, 1
      %p184 = scmp.lt.s32.totalorder %s181, 1
      %s185 = scalar_select %p184, %s181, 1
      %s186 = smul.addr %s183, 2
      %s187 = sadd.s32 %s185, %s186
      %s188 = smul.addr %s187, 2
      %s189 = scalar_lea.vmem %s3, %s188
      %s190 = smul.u32 2, %s19
      %p191 = scmp.lt.s32.totalorder %s18, 1
      %s192 = scalar_select %p191, %s18, 1
      %p193 = scmp.lt.s32.totalorder %s190, 1
      %s194 = scalar_select %p193, %s190, 1
      %s195 = smul.addr %s192, 2
      %s196 = sadd.s32 %s194, %s195
      %s197 = smul.addr %s196, 4
      %s198 = scalar_lea.vmem %s0, %s197
      %s199 = smul.u32 2, %s19
      %s200 = smul.u32 2, %s19
      %p201 = scmp.lt.s32.totalorder %s18, 1
      %s202 = scalar_select %p201, %s18, 1
      %p203 = scmp.lt.s32.totalorder %s200, 1
      %s204 = scalar_select %p203, %s200, 1
      %s205 = smul.addr %s202, 2
      %s206 = sadd.s32 %s204, %s205
      %s207 = smul.addr %s206, 2
      %s208 = scalar_lea.vmem %s3, %s207
      %s209 = smul.u32 2, %s19
      %v211 = vld [vmem:[%s1] sm:$0x3]
      %v212 = vld [vmem:[%s198] sm:$0x77]
      %v213 = vld [vmem:[%s2] sm:$0x7]
      %215 = vset.pattern.permute.xlu0 0
      %216 = vperm.xlu0 %215, %v213
      %v217 = vpop.permute.xlu0 %216
      %v220 = vunpack.c.l.b16 %v212
      %v221 = vunpack.c.h.b16 %v212
      %v222 = vpack.c.b16 %v220, %v220
      %v223 = vpack.c.b16 %v221, %v221
      %vm224 = vcmask 48128
      %v226 = vsel %vm224, %v211, 0
      %vm228 = vcmask 1042432
      %v230 = vsel %vm228, %v222, 0
      %v233 = vsel %vm228, %v223, 0
      %235 = vmatpush.bf16.msra.mxu0 0
      %236 = vmatpush.bf16.msra.mxu0 0
      %237 = vmatpush.bf16.msra.mxu0 0
      %238 = vmatpush.bf16.msra.mxu0 0
      %239 = vmatpush.bf16.msra.mxu0 0
      %240 = vmatpush.bf16.msra.mxu0 0
      %241 = vmatpush.bf16.msra.mxu0 0
      %242 = vmatpush.bf16.msra.mxu0 %v230
      %243 = vmatmul.bf16.gmra.mxu0 %v226
      %v244 = vpop.f32.mrf.mxu0
      %v245 = vadd.f32 %v217, %v244
      %v246 = vpop.f32.mrf.mxu0
      %247 = vdwg.mxu0
      %248 = vmatpush.bf16.msra.mxu0 0
      %249 = vmatpush.bf16.msra.mxu0 0
      %250 = vmatpush.bf16.msra.mxu0 0
      %251 = vmatpush.bf16.msra.mxu0 0
      %252 = vmatpush.bf16.msra.mxu0 0
      %253 = vmatpush.bf16.msra.mxu0 0
      %254 = vmatpush.bf16.msra.mxu0 0
      %255 = vmatpush.bf16.msra.mxu0 %v233
      %256 = vmatmul.bf16.gmra.mxu0 %v226
      %v257 = vpop.f32.mrf.mxu0
      %v258 = vadd.f32 %v217, %v257
      %v259 = vpop.f32.mrf.mxu0
      %260 = vdwg.mxu0
      %v261 = vmax.f32 %v245, 0.0
      %v262 = vmax.f32 %v258, 0.0
      %v263 = vpack.c.bf16 %v262, %v261
      %v265 = vrot.slane %v263, 2
      %vm266 = vcmask 1041408
      %v269 = vsel %vm266, %v263, %v265
      %vm271 = vcmask 1041408
      %vm272 = vsmask.f32 1280
      %vm273 = vmand %vm271, %vm272
      %vm274 = vcmask 1043458
      %vm275 = vsmask.f32 3328
      %vm276 = vmand %vm274, %vm275
      %vm277 = vmor %vm276, %vm273
      %v278 = vld [vmem:[%s208] sm:$0xf]
      %v279 = vsel %vm277, %v269, %v278
      %280 = vst [vmem:[%s208] sm:$0xf] %v279
      %s281 = smul.u32 2, %s19
      %p282 = scmp.lt.s32.totalorder %s18, 1
      %s283 = scalar_select %p282, %s18, 1
      %p284 = scmp.lt.s32.totalorder %s281, 1
      %s285 = scalar_select %p284, %s281, 1
      %s286 = smul.addr %s283, 2
      %s287 = sadd.s32 %s285, %s286
      %s288 = smul.addr %s287, 2
      %s289 = scalar_lea.vmem %s3, %s288
      // Predicated region
      $region33: #{att_ffc_forward.9} parent=31 // pred_check
        %p290 = pneg %p116
      $region34: #{att_ffc_forward.9} parent=31 // pred_check_branch
        %292 = sbr.rel (%p290) target = $region36
      $region35: #{att_ffc_forward.9} parent=31 // pred_region
        %s293 = smul.u32 2, %s19
      $region36: #{att_ffc_forward.9} parent=31 // pred_fallthru
        _
    $region32: #{att_ffc_forward.9} parent=5 // pred_fallthru
      _
    %p294 = scmp.le.s32.totalorder 2, %s9
    // Predicated region
    $region37: #{att_ffc_forward.9} parent=5 // pred_check
      %p295 = pneg %p294
    $region38: #{att_ffc_forward.9} parent=5 // pred_check_branch
      %297 = sbr.rel (%p295) target = $region40
    $region39: #{att_ffc_forward.9} parent=5 // pred_region
      %s298 = ssub.s32 %s9, 2
      // Predicated region
      $region41: #{att_ffc_forward.9} parent=39 // pred_check
        %p299 = pneg %p122
      $region42: #{att_ffc_forward.9} parent=39 // pred_check_branch
        %301 = sbr.rel (%p299) target = $region44
      $region43: #{att_ffc_forward.9} parent=39 // pred_region
        %s302 = smul.u32 2, %s21
        %p303 = scmp.lt.s32.totalorder %s20, 1
        %s304 = scalar_select %p303, %s20, 1
        %p305 = scmp.lt.s32.totalorder %s302, 1
        %s306 = scalar_select %p305, %s302, 1
        %s307 = smul.addr %s304, 2
        %s308 = sadd.s32 %s306, %s307
        %s309 = smul.addr %s308, 2
        %s310 = scalar_lea.vmem %s3, %s309
      $region44: #{att_ffc_forward.9} parent=39 // pred_fallthru
        _
    $region40: #{att_ffc_forward.9} parent=5 // pred_fallthru
      _
  $region6: #{att_ffc_forward.9} parent=0 // loop_footer
    %s13 = sadd.s32 1, %s9
  $region7: #{att_ffc_forward.9} parent=0 // loop_footer_branch
    %8 = sbr.rel target = $region3
  $region8: #{att_ffc_forward.9} parent=0 // loop_exit
    _

// kernel: reverse.0
$region0: #{reverse.0}
  %s0 = inlined_call_operand.vmem [shape: f32[2,3,16,7], index: 0, kind: input, shape index: {}]
  %s1 = inlined_call_operand.vmem [shape: f32[2,3,16,7], index: 1, kind: output, shape index: {}]
  $region1: #{reverse.0} parent=0
    #allocation0 [shape = 'u8[49152]{0}', space=vmem, size = 0xc000, scoped, tag = 'operand span for operand 0']
    #allocation1 [shape = 'u8[24576]{0}', space=vmem, size = 0x6000, scoped, tag = 'operand span for operand 1']
    %s2 = scalar_lea.vmem [#allocation0], 8
    // Predicated region
    $region2: #{reverse.0} parent=1 // pred_check
      _
    $region3: #{reverse.0} parent=1 // pred_check_branch
      %4 = sbr.rel (0) target = $region5
    $region4: #{reverse.0} parent=1 // pred_region
      // Predicated region
      $region6: #{reverse.0} parent=4 // pred_check
        _
      $region7: #{reverse.0} parent=4 // pred_check_branch
        %6 = sbr.rel (0) target = $region9
      $region8: #{reverse.0} parent=4 // pred_region
        // Predicated region
        $region21: #{reverse.0} parent=8 // pred_check
          _
        $region22: #{reverse.0} parent=8 // pred_check_branch
          %32 = sbr.rel (0) target = $region24
        $region23: #{reverse.0} parent=8 // pred_region
          loop: start=0, step=1, limit=1
          $region25: #{reverse.0} parent=23 // loop_pre_header
            _
          $region26: #{reverse.0} parent=23 // loop_header
            %s34 = sphi 0, %s38
            %p35 = scmp.ge.s32.totalorder %s34, 1
            %s39 = sphi %s0, %s0
            %s40 = sphi %s2, %s2
          $region27: #{reverse.0} parent=23 // loop_header_branch
            %37 = sbr.rel (%p35) target = $region31
          $region28: #{reverse.0} parent=23 // loop_body
            %v41 = vld [vmem:[%s39] sm:$0xff]
            %42 = vst [vmem:[%s40] sm:$0xff] %v41
            %v43 = vld [vmem:[%s39 + $0x8] sm:$0xff]
            %44 = vst [vmem:[%s40 + $0x10] sm:$0xff] %v43
            %v45 = vld [vmem:[%s39 + $0x10] sm:$0xff]
            %46 = vst [vmem:[%s40 + $0x20] sm:$0xff] %v45
            %v47 = vld [vmem:[%s39 + $0x18] sm:$0xff]
            %48 = vst [vmem:[%s40 + $0x30] sm:$0xff] %v47
            %v49 = vld [vmem:[%s39 + $0x20] sm:$0xff]
            %50 = vst [vmem:[%s40 + $0x40] sm:$0xff] %v49
            %v51 = vld [vmem:[%s39 + $0x28] sm:$0xff]
            %52 = vst [vmem:[%s40 + $0x50] sm:$0xff] %v51
          $region29: #{reverse.0} parent=23 // loop_footer
            %s38 = sadd.s32 1, %s34
          $region30: #{reverse.0} parent=23 // loop_footer_branch
            %33 = sbr.rel target = $region26
          $region31: #{reverse.0} parent=23 // loop_exit
            _
        $region24: #{reverse.0} parent=8 // pred_fallthru
          _
        // Predicated region
        $region32: #{reverse.0} parent=8 // pred_check
          _
        $region33: #{reverse.0} parent=8 // pred_check_branch
          %54 = sbr.rel target = $region35
        $region34: #{reverse.0} parent=8 // pred_region
          _
        $region35: #{reverse.0} parent=8 // pred_fallthru
          _
      $region9: #{reverse.0} parent=4 // pred_fallthru
        _
      // Predicated region
      $region10: #{reverse.0} parent=4 // pred_check
        _
      $region11: #{reverse.0} parent=4 // pred_check_branch
        %8 = sbr.rel target = $region13
      $region12: #{reverse.0} parent=4 // pred_region
        %s10 = ssub.s32 256, 1
        loop: start=0, step=1, limit=1
        $region14: #{reverse.0} parent=12 // loop_pre_header
          _
        $region15: #{reverse.0} parent=12 // loop_header
          %s12 = sphi 0, %s16
          %p13 = scmp.ge.s32.totalorder %s12, 1
          %s17 = sphi %s0, %s0
          %s18 = sphi %s2, %s2
        $region16: #{reverse.0} parent=12 // loop_header_branch
          %15 = sbr.rel (%p13) target = $region20
        $region17: #{reverse.0} parent=12 // loop_body
          %v19 = vld [vmem:[%s17] sm:%s10]
          %20 = vst [vmem:[%s18] sm:%s10] %v19
          %v21 = vld [vmem:[%s17 + $0x8] sm:%s10]
          %22 = vst [vmem:[%s18 + $0x10] sm:%s10] %v21
          %v23 = vld [vmem:[%s17 + $0x10] sm:%s10]
          %24 = vst [vmem:[%s18 + $0x20] sm:%s10] %v23
          %v25 = vld [vmem:[%s17 + $0x18] sm:%s10]
          %26 = vst [vmem:[%s18 + $0x30] sm:%s10] %v25
          %v27 = vld [vmem:[%s17 + $0x20] sm:%s10]
          %28 = vst [vmem:[%s18 + $0x40] sm:%s10] %v27
          %v29 = vld [vmem:[%s17 + $0x28] sm:%s10]
          %30 = vst [vmem:[%s18 + $0x50] sm:%s10] %v29
        $region18: #{reverse.0} parent=12 // loop_footer
          %s16 = sadd.s32 1, %s12
        $region19: #{reverse.0} parent=12 // loop_footer_branch
          %11 = sbr.rel target = $region15
        $region20: #{reverse.0} parent=12 // loop_exit
          _
      $region13: #{reverse.0} parent=4 // pred_fallthru
        _
    $region5: #{reverse.0} parent=1 // pred_fallthru
      _
    %55 = vnop
    %s56 = scalar_lea.vmem [#allocation0], 7
    %v57 = vld [vmem:[%s56] ss:$-1 sm:$0xff]
    %v58 = vrot.slane %v57, 1
    %59 = vst [vmem:[#allocation1] sm:$0xff] %v58
    %s60 = scalar_lea.vmem [#allocation0], 8
    %s61 = scalar_lea.vmem %s60, 7 [#allocation0]
    %v62 = vld [vmem:[%s61] ss:$-1 sm:$0xff]
    %v63 = vrot.slane %v62, 1
    %v64 = vlaneseq
    %v65 = vshrl.u32 %v64, 7
    %vm66 = vcmp.lt.s32.totalorder %v65, 7
    %67 = vst.msk [vmem:[#allocation1] sm:$0xff] %vm66, %v63
    %s68 = scalar_lea.vmem [#allocation1], 8
    %s69 = scalar_lea.vmem [#allocation0], 16
    %s70 = scalar_lea.vmem %s69, 7 [#allocation0]
    %v71 = vld [vmem:[%s70] ss:$-1 sm:$0xff]
    %v72 = vrot.slane %v71, 1
    %73 = vst [vmem:[%s68] sm:$0xff] %v72
    %s74 = scalar_lea.vmem %s69, 8 [#allocation0]
    %s75 = scalar_lea.vmem %s74, 7 [#allocation0]
    %v76 = vld [vmem:[%s75] ss:$-1 sm:$0xff]
    %v77 = vrot.slane %v76, 1
    %v78 = vlaneseq
    %v79 = vshrl.u32 %v78, 7
    %vm80 = vcmp.lt.s32.totalorder %v79, 7
    %81 = vst.msk [vmem:[%s68] sm:$0xff] %vm80, %v77
    %s82 = scalar_lea.vmem [#allocation1], 16
    %s83 = scalar_lea.vmem [#allocation0], 32
    %s84 = scalar_lea.vmem %s83, 7 [#allocation0]
    %v85 = vld [vmem:[%s84] ss:$-1 sm:$0xff]
    %v86 = vrot.slane %v85, 1
    %87 = vst [vmem:[%s82] sm:$0xff] %v86
    %s88 = scalar_lea.vmem %s83, 8 [#allocation0]
    %s89 = scalar_lea.vmem %s88, 7 [#allocation0]
    %v90 = vld [vmem:[%s89] ss:$-1 sm:$0xff]
    %v91 = vrot.slane %v90, 1
    %v92 = vlaneseq
    %v93 = vshrl.u32 %v92, 7
    %vm94 = vcmp.lt.s32.totalorder %v93, 7
    %95 = vst.msk [vmem:[%s82] sm:$0xff] %vm94, %v91
    %s96 = scalar_lea.vmem [#allocation1], 24
    %s97 = scalar_lea.vmem [#allocation0], 48
    %s98 = scalar_lea.vmem %s97, 7 [#allocation0]
    %v99 = vld [vmem:[%s98] ss:$-1 sm:$0xff]
    %v100 = vrot.slane %v99, 1
    %101 = vst [vmem:[%s96] sm:$0xff] %v100
    %s102 = scalar_lea.vmem %s97, 8 [#allocation0]
    %s103 = scalar_lea.vmem %s102, 7 [#allocation0]
    %v104 = vld [vmem:[%s103] ss:$-1 sm:$0xff]
    %v105 = vrot.slane %v104, 1
    %v106 = vlaneseq
    %v107 = vshrl.u32 %v106, 7
    %vm108 = vcmp.lt.s32.totalorder %v107, 7
    %109 = vst.msk [vmem:[%s96] sm:$0xff] %vm108, %v105
    %s110 = scalar_lea.vmem [#allocation1], 32
    %s111 = scalar_lea.vmem [#allocation0], 64
    %s112 = scalar_lea.vmem %s111, 7 [#allocation0]
    %v113 = vld [vmem:[%s112] ss:$-1 sm:$0xff]
    %v114 = vrot.slane %v113, 1
    %115 = vst [vmem:[%s110] sm:$0xff] %v114
    %s116 = scalar_lea.vmem %s111, 8 [#allocation0]
    %s117 = scalar_lea.vmem %s116, 7 [#allocation0]
    %v118 = vld [vmem:[%s117] ss:$-1 sm:$0xff]
    %v119 = vrot.slane %v118, 1
    %v120 = vlaneseq
    %v121 = vshrl.u32 %v120, 7
    %vm122 = vcmp.lt.s32.totalorder %v121, 7
    %123 = vst.msk [vmem:[%s110] sm:$0xff] %vm122, %v119
    %s124 = scalar_lea.vmem [#allocation1], 40
    %s125 = scalar_lea.vmem [#allocation0], 80
    %s126 = scalar_lea.vmem %s125, 7 [#allocation0]
    %v127 = vld [vmem:[%s126] ss:$-1 sm:$0xff]
    %v128 = vrot.slane %v127, 1
    %129 = vst [vmem:[%s124] sm:$0xff] %v128
    %s130 = scalar_lea.vmem %s125, 8 [#allocation0]
    %s131 = scalar_lea.vmem %s130, 7 [#allocation0]
    %v132 = vld [vmem:[%s131] ss:$-1 sm:$0xff]
    %v133 = vrot.slane %v132, 1
    %v134 = vlaneseq
    %v135 = vshrl.u32 %v134, 7
    %vm136 = vcmp.lt.s32.totalorder %v135, 7
    %137 = vst.msk [vmem:[%s124] sm:$0xff] %vm136, %v133
    // Predicated region
    $region36: #{reverse.0} parent=1 // pred_check
      _
    $region37: #{reverse.0} parent=1 // pred_check_branch
      %139 = sbr.rel (0) target = $region39
    $region38: #{reverse.0} parent=1 // pred_region
      // Predicated region
      $region40: #{reverse.0} parent=38 // pred_check
        _
      $region41: #{reverse.0} parent=38 // pred_check_branch
        %141 = sbr.rel (0) target = $region43
      $region42: #{reverse.0} parent=38 // pred_region
        // Predicated region
        $region55: #{reverse.0} parent=42 // pred_check
          _
        $region56: #{reverse.0} parent=42 // pred_check_branch
          %167 = sbr.rel (0) target = $region58
        $region57: #{reverse.0} parent=42 // pred_region
          loop: start=0, step=1, limit=1
          $region59: #{reverse.0} parent=57 // loop_pre_header
            _
          $region60: #{reverse.0} parent=57 // loop_header
            %s169 = sphi 0, %s173
            %p170 = scmp.ge.s32.totalorder %s169, 1
            %s174 = sphi [#allocation1], [#allocation1]
            %s175 = sphi %s1, %s1
          $region61: #{reverse.0} parent=57 // loop_header_branch
            %172 = sbr.rel (%p170) target = $region65
          $region62: #{reverse.0} parent=57 // loop_body
            %v176 = vld [vmem:[%s174] sm:$0xff]
            %177 = vst [vmem:[%s175] sm:$0xff] %v176
            %v178 = vld [vmem:[%s174 + $0x8] sm:$0xff]
            %179 = vst [vmem:[%s175 + $0x8] sm:$0xff] %v178
            %v180 = vld [vmem:[%s174 + $0x10] sm:$0xff]
            %181 = vst [vmem:[%s175 + $0x10] sm:$0xff] %v180
            %v182 = vld [vmem:[%s174 + $0x18] sm:$0xff]
            %183 = vst [vmem:[%s175 + $0x18] sm:$0xff] %v182
            %v184 = vld [vmem:[%s174 + $0x20] sm:$0xff]
            %185 = vst [vmem:[%s175 + $0x20] sm:$0xff] %v184
            %v186 = vld [vmem:[%s174 + $0x28] sm:$0xff]
            %187 = vst [vmem:[%s175 + $0x28] sm:$0xff] %v186
          $region63: #{reverse.0} parent=57 // loop_footer
            %s173 = sadd.s32 1, %s169
          $region64: #{reverse.0} parent=57 // loop_footer_branch
            %168 = sbr.rel target = $region60
          $region65: #{reverse.0} parent=57 // loop_exit
            _
        $region58: #{reverse.0} parent=42 // pred_fallthru
          _
        // Predicated region
        $region66: #{reverse.0} parent=42 // pred_check
          _
        $region67: #{reverse.0} parent=42 // pred_check_branch
          %189 = sbr.rel target = $region69
        $region68: #{reverse.0} parent=42 // pred_region
          _
        $region69: #{reverse.0} parent=42 // pred_fallthru
          _
      $region43: #{reverse.0} parent=38 // pred_fallthru
        _
      // Predicated region
      $region44: #{reverse.0} parent=38 // pred_check
        _
      $region45: #{reverse.0} parent=38 // pred_check_branch
        %143 = sbr.rel target = $region47
      $region46: #{reverse.0} parent=38 // pred_region
        %s145 = ssub.s32 256, 1
        loop: start=0, step=1, limit=1
        $region48: #{reverse.0} parent=46 // loop_pre_header
          _
        $region49: #{reverse.0} parent=46 // loop_header
          %s147 = sphi 0, %s151
          %p148 = scmp.ge.s32.totalorder %s147, 1
          %s152 = sphi [#allocation1], [#allocation1]
          %s153 = sphi %s1, %s1
        $region50: #{reverse.0} parent=46 // loop_header_branch
          %150 = sbr.rel (%p148) target = $region54
        $region51: #{reverse.0} parent=46 // loop_body
          %v154 = vld [vmem:[%s152] sm:%s145]
          %155 = vst [vmem:[%s153] sm:%s145] %v154
          %v156 = vld [vmem:[%s152 + $0x8] sm:%s145]
          %157 = vst [vmem:[%s153 + $0x8] sm:%s145] %v156
          %v158 = vld [vmem:[%s152 + $0x10] sm:%s145]
          %159 = vst [vmem:[%s153 + $0x10] sm:%s145] %v158
          %v160 = vld [vmem:[%s152 + $0x18] sm:%s145]
          %161 = vst [vmem:[%s153 + $0x18] sm:%s145] %v160
          %v162 = vld [vmem:[%s152 + $0x20] sm:%s145]
          %163 = vst [vmem:[%s153 + $0x20] sm:%s145] %v162
          %v164 = vld [vmem:[%s152 + $0x28] sm:%s145]
          %165 = vst [vmem:[%s153 + $0x28] sm:%s145] %v164
        $region52: #{reverse.0} parent=46 // loop_footer
          %s151 = sadd.s32 1, %s147
        $region53: #{reverse.0} parent=46 // loop_footer_branch
          %146 = sbr.rel target = $region49
        $region54: #{reverse.0} parent=46 // loop_exit
          _
      $region47: #{reverse.0} parent=38 // pred_fallthru
        _
    $region39: #{reverse.0} parent=1 // pred_fallthru
      _
    %190 = vnop

// kernel: att_ffc_forward.10
$region0: #{att_ffc_forward.10}
  #allocation0 [shape = 'u32[]', space=smem, size = 0x4, offset = 0x4, fixed_abs, tag = 'smem constant byte address 0x4 - core index']
  #allocation1 [shape = 'u32[72,128]{1,0:T(1,128)}', space=vmem, size = 0x9000, scoped, tag = 'internal scratch']
  %s0 = inlined_call_operand.vmem [shape: bf16[2,6,256], index: 0, kind: input, shape index: {}]
  %s1 = inlined_call_operand.vmem [shape: bf16[6,6], index: 1, kind: input, shape index: {}]
  %s2 = inlined_call_operand.vmem [shape: f32[6,1], index: 2, kind: input, shape index: {}]
  %s3 = inlined_call_operand.vmem [shape: f32[2,6,256], index: 3, kind: output, shape index: {}]
  %s4 = sld [smem:[#allocation0]]
  $region45: #{att_ffc_forward.10} parent=0
    _
  %s6 = ssub.s32 1, %s4
  %s7 = scalar_select 0, %s6, %s4
  loop: start=0, step=1, limit=4
  $region2: #{att_ffc_forward.10} parent=0 // loop_pre_header
    _
  $region3: #{att_ffc_forward.10} parent=0 // loop_header
    %s9 = sphi 0, %s13
    %p10 = scmp.ge.s32.totalorder %s9, 4
    %s16 = sphi 0, %s28
    %s17 = sphi 0, %s24
    %s18 = sphi 0, %s16
    %s19 = sphi 0, %s17
    %s20 = sphi 0, %s18
    %s21 = sphi 0, %s19
    %s33 = sphi 0, %s35
    %s36 = sphi 0, %s33
    %s37 = sphi 0, %s36
    %s53 = sphi 0, %s37
    %s57 = sphi 0, %s57
    %s59 = sphi 0, %s57
    %s60 = sphi 0, %s59
    %s74 = sphi 0, %s60
    %s78 = sphi 0, %s78
    %s80 = sphi 0, %s78
    %s81 = sphi 0, %s80
    %s95 = sphi 0, %s81
    %s103 = sphi 0, %s105
    %s106 = sphi 0, %s103
    %s107 = sphi 0, %s106
    %s123 = sphi 0, %s107
  $region4: #{att_ffc_forward.10} parent=0 // loop_header_branch
    %12 = sbr.rel (%p10) target = $region8
  $region5: #{att_ffc_forward.10} parent=0 // loop_body
    %s14 = ssub.s32 %s9, 1
    %s15 = ssub.s32 %s9, 2
    %s22 = sadd.s32 1, %s17
    %p23 = scmp.ge.s32.totalorder %s22, 1
    %s24 = scalar_select %p23, 0, %s22
    %s25 = sadd.s32 1, %s16
    %s26 = scalar_select %p23, %s25, %s16
    %p27 = scmp.ge.s32.totalorder %s26, 2
    %s28 = scalar_select %p27, 0, %s26
    %s29 = ssub.s32 %s16, %s28
    %s30 = ssub.s32 %s17, %s24
    %s31 = sor.u32 %s29, %s30
    %p32 = scmp.eq.s32.totalorder %s31, 0
    %s34 = sadd.s32 %s33, 1
    %s35 = scalar_select %p32, %s33, %s34
    %p38 = pneg %p32
    %p39 = scmp.eq.s32.totalorder %s9, 1
    %p40 = por %p38, %p39
    %p41 = scmp.ne.s32.totalorder %s33, %s36
    %p42 = scmp.eq.s32.totalorder %s9, 0
    %p43 = por %p41, %p42
    %p44 = scmp.ne.s32.totalorder %s33, %s36
    %p45 = scmp.eq.s32.totalorder %s14, 1
    %p46 = por %p44, %p45
    %p47 = scmp.ne.s32.totalorder %s36, %s37
    %p48 = scmp.eq.s32.totalorder %s14, 0
    %p49 = por %p47, %p48
    %p50 = scmp.ne.s32.totalorder %s36, %s37
    %p51 = scmp.eq.s32.totalorder %s15, 1
    %p52 = por %p50, %p51
    %p54 = scmp.ne.s32.totalorder %s37, %s53
    %p55 = scmp.eq.s32.totalorder %s15, 0
    %p56 = por %p54, %p55
    %s58 = sadd.s32 %s57, 1
    %p61 = scmp.eq.s32.totalorder %s9, 1
    %p62 = scmp.ne.s32.totalorder %s57, %s59
    %p63 = scmp.eq.s32.totalorder %s9, 0
    %p64 = por %p62, %p63
    %p65 = scmp.ne.s32.totalorder %s57, %s59
    %p66 = scmp.eq.s32.totalorder %s14, 1
    %p67 = por %p65, %p66
    %p68 = scmp.ne.s32.totalorder %s59, %s60
    %p69 = scmp.eq.s32.totalorder %s14, 0
    %p70 = por %p68, %p69
    %p71 = scmp.ne.s32.totalorder %s59, %s60
    %p72 = scmp.eq.s32.totalorder %s15, 1
    %p73 = por %p71, %p72
    %p75 = scmp.ne.s32.totalorder %s60, %s74
    %p76 = scmp.eq.s32.totalorder %s15, 0
    %p77 = por %p75, %p76
    %s79 = sadd.s32 %s78, 1
    %p82 = scmp.eq.s32.totalorder %s9, 1
    %p83 = scmp.ne.s32.totalorder %s78, %s80
    %p84 = scmp.eq.s32.totalorder %s9, 0
    %p85 = por %p83, %p84
    %p86 = scmp.ne.s32.totalorder %s78, %s80
    %p87 = scmp.eq.s32.totalorder %s14, 1
    %p88 = por %p86, %p87
    %p89 = scmp.ne.s32.totalorder %s80, %s81
    %p90 = scmp.eq.s32.totalorder %s14, 0
    %p91 = por %p89, %p90
    %p92 = scmp.ne.s32.totalorder %s80, %s81
    %p93 = scmp.eq.s32.totalorder %s15, 1
    %p94 = por %p92, %p93
    %p96 = scmp.ne.s32.totalorder %s81, %s95
    %p97 = scmp.eq.s32.totalorder %s15, 0
    %p98 = por %p96, %p97
    %s99 = ssub.s32 %s16, %s28
    %s100 = ssub.s32 %s17, %s24
    %s101 = sor.u32 %s99, %s100
    %p102 = scmp.eq.s32.totalorder %s101, 0
    %s104 = sadd.s32 %s103, 1
    %s105 = scalar_select %p102, %s103, %s104
    %p108 = pneg %p102
    %p109 = scmp.eq.s32.totalorder %s9, 1
    %p110 = por %p108, %p109
    %p111 = scmp.ne.s32.totalorder %s103, %s106
    %p112 = scmp.eq.s32.totalorder %s9, 0
    %p113 = por %p111, %p112
    %p114 = scmp.ne.s32.totalorder %s103, %s106
    %p115 = scmp.eq.s32.totalorder %s14, 1
    %p116 = por %p114, %p115
    %p117 = scmp.ne.s32.totalorder %s106, %s107
    %p118 = scmp.eq.s32.totalorder %s14, 0
    %p119 = por %p117, %p118
    %p120 = scmp.ne.s32.totalorder %s106, %s107
    %p121 = scmp.eq.s32.totalorder %s15, 1
    %p122 = por %p120, %p121
    %p124 = scmp.ne.s32.totalorder %s107, %s123
    %p125 = scmp.eq.s32.totalorder %s15, 0
    %p126 = por %p124, %p125
    %p127 = scmp.le.s32.totalorder 1, %s9
    %p128 = scmp.lt.s32.totalorder %s9, 3
    %p129 = pnand %p127, %p128
    %p130 = pneg %p129
    // Predicated region
    $region9: #{att_ffc_forward.10} parent=5 // pred_check
      _
    $region10: #{att_ffc_forward.10} parent=5 // pred_check_branch
      %132 = sbr.rel (%p129) target = $region12
    $region11: #{att_ffc_forward.10} parent=5 // pred_region
      %s133 = ssub.s32 %s9, 1
      // Predicated region
      $region13: #{att_ffc_forward.10} parent=11 // pred_check
        %p134 = pneg %p70
      $region14: #{att_ffc_forward.10} parent=11 // pred_check_branch
        %136 = sbr.rel (%p134) target = $region16
      $region15: #{att_ffc_forward.10} parent=11 // pred_region
        _
      $region16: #{att_ffc_forward.10} parent=11 // pred_fallthru
        _
      // Predicated region
      $region17: #{att_ffc_forward.10} parent=11 // pred_check
        %p137 = pneg %p91
      $region18: #{att_ffc_forward.10} parent=11 // pred_check_branch
        %139 = sbr.rel (%p137) target = $region20
      $region19: #{att_ffc_forward.10} parent=11 // pred_region
        _
      $region20: #{att_ffc_forward.10} parent=11 // pred_fallthru
        _
    $region12: #{att_ffc_forward.10} parent=5 // pred_fallthru
      _
    %p140 = scmp.lt.s32.totalorder %s9, 2
    // Predicated region
    $region21: #{att_ffc_forward.10} parent=5 // pred_check
      %p141 = pneg %p140
    $region22: #{att_ffc_forward.10} parent=5 // pred_check_branch
      %143 = sbr.rel (%p141) target = $region24
    $region23: #{att_ffc_forward.10} parent=5 // pred_region
      // Predicated region
      $region25: #{att_ffc_forward.10} parent=23 // pred_check
        %p144 = pneg %p43
      $region26: #{att_ffc_forward.10} parent=23 // pred_check_branch
        %146 = sbr.rel (%p144) target = $region28
      $region27: #{att_ffc_forward.10} parent=23 // pred_region
        %s147 = smul.u32 2, %s17
        %p148 = scmp.lt.s32.totalorder %s16, 1
        %s149 = scalar_select %p148, %s16, 1
        %p150 = scmp.lt.s32.totalorder %s147, 1
        %s151 = scalar_select %p150, %s147, 1
        %s152 = smul.addr %s149, 2
        %s153 = sadd.s32 %s151, %s152
        %s154 = smul.addr %s153, 4
        %s155 = scalar_lea.vmem %s0, %s154
        %s156 = smul.u32 2, %s17
      $region28: #{att_ffc_forward.10} parent=23 // pred_fallthru
        _
    $region24: #{att_ffc_forward.10} parent=5 // pred_fallthru
      _
    %p157 = scmp.le.s32.totalorder 1, %s9
    %p158 = scmp.lt.s32.totalorder %s9, 3
    %p159 = pnand %p157, %p158
    %p160 = pneg %p159
    // Predicated region
    $region29: #{att_ffc_forward.10} parent=5 // pred_check
      _
    $region30: #{att_ffc_forward.10} parent=5 // pred_check_branch
      %162 = sbr.rel (%p159) target = $region32
    $region31: #{att_ffc_forward.10} parent=5 // pred_region
      %s163 = ssub.s32 %s9, 1
      %s164 = smul.u32 2, %s19
      %p165 = scmp.lt.s32.totalorder %s18, 1
      %s166 = scalar_select %p165, %s18, 1
      %p167 = scmp.lt.s32.totalorder %s164, 1
      %s168 = scalar_select %p167, %s164, 1
      %s169 = smul.addr %s166, 2
      %s170 = sadd.s32 %s168, %s169
      %s171 = smul.addr %s170, 4
      %s172 = scalar_lea.vmem %s0, %s171
      %p173 = pneg %p49
      %p174 = pneg %p46
      %p175 = pneg %p70
      %p176 = pneg %p67
      %p177 = pneg %p91
      %p178 = pneg %p88
      %p179 = pneg %p119
      %p180 = pneg %p116
      %s181 = smul.u32 2, %s19
      %p182 = scmp.lt.s32.totalorder %s18, 1
      %s183 = scalar_select %p182, %s18, 1
      %p184 = scmp.lt.s32.totalorder %s181, 1
      %s185 = scalar_select %p184, %s181, 1
      %s186 = smul.addr %s183, 2
      %s187 = sadd.s32 %s185, %s186
      %s188 = smul.addr %s187, 8
      %s189 = scalar_lea.vmem %s3, %s188
      %s190 = smul.u32 2, %s19
      %p191 = scmp.lt.s32.totalorder %s18, 1
      %s192 = scalar_select %p191, %s18, 1
      %p193 = scmp.lt.s32.totalorder %s190, 1
      %s194 = scalar_select %p193, %s190, 1
      %s195 = smul.addr %s192, 2
      %s196 = sadd.s32 %s194, %s195
      %s197 = smul.addr %s196, 4
      %s198 = scalar_lea.vmem %s0, %s197
      %s199 = smul.u32 2, %s19
      %s200 = smul.u32 2, %s19
      %p201 = scmp.lt.s32.totalorder %s18, 1
      %s202 = scalar_select %p201, %s18, 1
      %p203 = scmp.lt.s32.totalorder %s200, 1
      %s204 = scalar_select %p203, %s200, 1
      %s205 = smul.addr %s202, 2
      %s206 = sadd.s32 %s204, %s205
      %s207 = smul.addr %s206, 8
      %s208 = scalar_lea.vmem %s3, %s207
      %s209 = smul.u32 2, %s19
      %v211 = vld [vmem:[%s1] sm:$0x7]
      %v212 = vld [vmem:[%s198] sm:$0x77]
      %v213 = vld [vmem:[%s2] sm:$0x3f]
      %215 = vset.pattern.permute.xlu0 0
      %216 = vperm.xlu0 %215, %v213
      %v217 = vpop.permute.xlu0 %216
      %v220 = vunpack.c.l.b16 %v212
      %v221 = vunpack.c.h.b16 %v212
      %v222 = vpack.c.b16 %v220, %v220
      %v223 = vpack.c.b16 %v221, %v221
      %vm224 = vcmask 48128
      %v226 = vsel %vm224, %v211, 0
      %vm228 = vcmask 1042432
      %v230 = vsel %vm228, %v222, 0
      %v233 = vsel %vm228, %v223, 0
      %235 = vmatpush.bf16.msra.mxu0 0
      %236 = vmatpush.bf16.msra.mxu0 0
      %237 = vmatpush.bf16.msra.mxu0 0
      %238 = vmatpush.bf16.msra.mxu0 0
      %239 = vmatpush.bf16.msra.mxu0 0
      %240 = vmatpush.bf16.msra.mxu0 0
      %241 = vmatpush.bf16.msra.mxu0 0
      %242 = vmatpush.bf16.msra.mxu0 %v230
      %243 = vmatmul.bf16.gmra.mxu0 %v226
      %v244 = vpop.f32.mrf.mxu0
      %v245 = vadd.f32 %v217, %v244
      %v246 = vpop.f32.mrf.mxu0
      %247 = vdwg.mxu0
      %248 = vmatpush.bf16.msra.mxu0 0
      %249 = vmatpush.bf16.msra.mxu0 0
      %250 = vmatpush.bf16.msra.mxu0 0
      %251 = vmatpush.bf16.msra.mxu0 0
      %252 = vmatpush.bf16.msra.mxu0 0
      %253 = vmatpush.bf16.msra.mxu0 0
      %254 = vmatpush.bf16.msra.mxu0 0
      %255 = vmatpush.bf16.msra.mxu0 %v233
      %256 = vmatmul.bf16.gmra.mxu0 %v226
      %v257 = vpop.f32.mrf.mxu0
      %v258 = vadd.f32 %v217, %v257
      %v259 = vpop.f32.mrf.mxu0
      %260 = vdwg.mxu0
      %v261 = vmax.f32 %v245, 0.0
      %v262 = vmax.f32 %v258, 0.0
      %263 = vst [vmem:[%s208] sm:$0x3f] %v261
      %264 = vst [vmem:[%s208 + $0x8] sm:$0x3f] %v262
      %s265 = smul.u32 2, %s19
      %p266 = scmp.lt.s32.totalorder %s18, 1
      %s267 = scalar_select %p266, %s18, 1
      %p268 = scmp.lt.s32.totalorder %s265, 1
      %s269 = scalar_select %p268, %s265, 1
      %s270 = smul.addr %s267, 2
      %s271 = sadd.s32 %s269, %s270
      %s272 = smul.addr %s271, 8
      %s273 = scalar_lea.vmem %s3, %s272
      // Predicated region
      $region33: #{att_ffc_forward.10} parent=31 // pred_check
        %p274 = pneg %p116
      $region34: #{att_ffc_forward.10} parent=31 // pred_check_branch
        %276 = sbr.rel (%p274) target = $region36
      $region35: #{att_ffc_forward.10} parent=31 // pred_region
        %s277 = smul.u32 2, %s19
      $region36: #{att_ffc_forward.10} parent=31 // pred_fallthru
        _
    $region32: #{att_ffc_forward.10} parent=5 // pred_fallthru
      _
    %p278 = scmp.le.s32.totalorder 2, %s9
    // Predicated region
    $region37: #{att_ffc_forward.10} parent=5 // pred_check
      %p279 = pneg %p278
    $region38: #{att_ffc_forward.10} parent=5 // pred_check_branch
      %281 = sbr.rel (%p279) target = $region40
    $region39: #{att_ffc_forward.10} parent=5 // pred_region
      %s282 = ssub.s32 %s9, 2
      // Predicated region
      $region41: #{att_ffc_forward.10} parent=39 // pred_check
        %p283 = pneg %p122
      $region42: #{att_ffc_forward.10} parent=39 // pred_check_branch
        %285 = sbr.rel (%p283) target = $region44
      $region43: #{att_ffc_forward.10} parent=39 // pred_region
        %s286 = smul.u32 2, %s21
        %p287 = scmp.lt.s32.totalorder %s20, 1
        %s288 = scalar_select %p287, %s20, 1
        %p289 = scmp.lt.s32.totalorder %s286, 1
        %s290 = scalar_select %p289, %s286, 1
        %s291 = smul.addr %s288, 2
        %s292 = sadd.s32 %s290, %s291
        %s293 = smul.addr %s292, 8
        %s294 = scalar_lea.vmem %s3, %s293
      $region44: #{att_ffc_forward.10} parent=39 // pred_fallthru
        _
    $region40: #{att_ffc_forward.10} parent=5 // pred_fallthru
      _
  $region6: #{att_ffc_forward.10} parent=0 // loop_footer
    %s13 = sadd.s32 1, %s9
  $region7: #{att_ffc_forward.10} parent=0 // loop_footer_branch
    %8 = sbr.rel target = $region3
  $region8: #{att_ffc_forward.10} parent=0 // loop_exit
    _

// kernel: att_ffc_forward.11
$region0: #{att_ffc_forward.11}
  #allocation0 [shape = 'u32[]', space=smem, size = 0x4, offset = 0x4, fixed_abs, tag = 'smem constant byte address 0x4 - core index']
  #allocation1 [shape = 'u32[72,128]{1,0:T(1,128)}', space=vmem, size = 0x9000, scoped, tag = 'internal scratch']
  %s0 = inlined_call_operand.vmem [shape: bf16[2,2,512], index: 0, kind: input, shape index: {}, may-alias: {0,1}]
  %s1 = inlined_call_operand.vmem [shape: bf16[2,2,512], index: 1, kind: input, shape index: {}, may-alias: {0,1}]
  %s2 = inlined_call_operand.vmem [shape: bf16[9,6,2], index: 2, kind: input, shape index: {}]
  %s3 = inlined_call_operand.vmem [shape: f32[6,1], index: 3, kind: input, shape index: {}]
  %s4 = inlined_call_operand.vmem [shape: bf16[2,3,384], index: 4, kind: input, shape index: {}]
  %s5 = inlined_call_operand.vmem [shape: bf16[6,3], index: 5, kind: input, shape index: {}]
  %s6 = inlined_call_operand.vmem [shape: bf16[2,6,384], index: 6, kind: input, shape index: {}]
  %s7 = inlined_call_operand.vmem [shape: f32[2,6,384], index: 7, kind: output, shape index: {}]
  %s8 = sld [smem:[#allocation0]]
  $region61: #{att_ffc_forward.11} parent=0
    _
  %s10 = ssub.s32 1, %s8
  %s11 = scalar_select 0, %s10, %s8
  loop: start=0, step=1, limit=4
  $region2: #{att_ffc_forward.11} parent=0 // loop_pre_header
    _
  $region3: #{att_ffc_forward.11} parent=0 // loop_header
    %s13 = sphi 0, %s17
    %p14 = scmp.ge.s32.totalorder %s13, 4
    %s20 = sphi 0, %s32
    %s21 = sphi 0, %s28
    %s22 = sphi 0, %s20
    %s23 = sphi 0, %s21
    %s24 = sphi 0, %s22
    %s25 = sphi 0, %s23
    %s37 = sphi 0, %s39
    %s40 = sphi 0, %s37
    %s41 = sphi 0, %s40
    %s57 = sphi 0, %s41
    %s69 = sphi 0, %s71
    %s72 = sphi 0, %s69
    %s73 = sphi 0, %s72
    %s89 = sphi 0, %s73
    %s93 = sphi 0, %s93
    %s95 = sphi 0, %s93
    %s96 = sphi 0, %s95
    %s110 = sphi 0, %s96
    %s114 = sphi 0, %s114
    %s116 = sphi 0, %s114
    %s117 = sphi 0, %s116
    %s131 = sphi 0, %s117
    %s139 = sphi 0, %s141
    %s142 = sphi 0, %s139
    %s143 = sphi 0, %s142
    %s159 = sphi 0, %s143
    %s163 = sphi 0, %s163
    %s165 = sphi 0, %s163
    %s166 = sphi 0, %s165
    %s180 = sphi 0, %s166
    %s188 = sphi 0, %s190
    %s191 = sphi 0, %s188
    %s192 = sphi 0, %s191
    %s208 = sphi 0, %s192
    %s216 = sphi 0, %s218
    %s219 = sphi 0, %s216
    %s220 = sphi 0, %s219
    %s236 = sphi 0, %s220
  $region4: #{att_ffc_forward.11} parent=0 // loop_header_branch
    %16 = sbr.rel (%p14) target = $region8
  $region5: #{att_ffc_forward.11} parent=0 // loop_body
    %s18 = ssub.s32 %s13, 1
    %s19 = ssub.s32 %s13, 2
    %s26 = sadd.s32 1, %s21
    %p27 = scmp.ge.s32.totalorder %s26, 1
    %s28 = scalar_select %p27, 0, %s26
    %s29 = sadd.s32 1, %s20
    %s30 = scalar_select %p27, %s29, %s20
    %p31 = scmp.ge.s32.totalorder %s30, 2
    %s32 = scalar_select %p31, 0, %s30
    %s33 = ssub.s32 %s20, %s32
    %s34 = ssub.s32 %s21, %s28
    %s35 = sor.u32 %s33, %s34
    %p36 = scmp.eq.s32.totalorder %s35, 0
    %s38 = sadd.s32 %s37, 1
    %s39 = scalar_select %p36, %s37, %s38
    %p42 = pneg %p36
    %p43 = scmp.eq.s32.totalorder %s13, 1
    %p44 = por %p42, %p43
    %p45 = scmp.ne.s32.totalorder %s37, %s40
    %p46 = scmp.eq.s32.totalorder %s13, 0
    %p47 = por %p45, %p46
    %p48 = scmp.ne.s32.totalorder %s37, %s40
    %p49 = scmp.eq.s32.totalorder %s18, 1
    %p50 = por %p48, %p49
    %p51 = scmp.ne.s32.totalorder %s40, %s41
    %p52 = scmp.eq.s32.totalorder %s18, 0
    %p53 = por %p51, %p52
    %p54 = scmp.ne.s32.totalorder %s40, %s41
    %p55 = scmp.eq.s32.totalorder %s19, 1
    %p56 = por %p54, %p55
    %p58 = scmp.ne.s32.totalorder %s41, %s57
    %p59 = scmp.eq.s32.totalorder %s19, 0
    %p60 = por %p58, %p59
    %s61 = sadd.s32 %s21, 1
    %s62 = smul.u32 %s61, 3
    %s63 = sadd.s32 %s28, 1
    %s64 = smul.u32 %s63, 3
    %s65 = ssub.s32 %s20, %s32
    %s66 = ssub.s32 %s62, %s64
    %s67 = sor.u32 %s65, %s66
    %p68 = scmp.eq.s32.totalorder %s67, 0
    %s70 = sadd.s32 %s69, 1
    %s71 = scalar_select %p68, %s69, %s70
    %p74 = pneg %p68
    %p75 = scmp.eq.s32.totalorder %s13, 1
    %p76 = por %p74, %p75
    %p77 = scmp.ne.s32.totalorder %s69, %s72
    %p78 = scmp.eq.s32.totalorder %s13, 0
    %p79 = por %p77, %p78
    %p80 = scmp.ne.s32.totalorder %s69, %s72
    %p81 = scmp.eq.s32.totalorder %s18, 1
    %p82 = por %p80, %p81
    %p83 = scmp.ne.s32.totalorder %s72, %s73
    %p84 = scmp.eq.s32.totalorder %s18, 0
    %p85 = por %p83, %p84
    %p86 = scmp.ne.s32.totalorder %s72, %s73
    %p87 = scmp.eq.s32.totalorder %s19, 1
    %p88 = por %p86, %p87
    %p90 = scmp.ne.s32.totalorder %s73, %s89
    %p91 = scmp.eq.s32.totalorder %s19, 0
    %p92 = por %p90, %p91
    %s94 = sadd.s32 %s93, 1
    %p97 = scmp.eq.s32.totalorder %s13, 1
    %p98 = scmp.ne.s32.totalorder %s93, %s95
    %p99 = scmp.eq.s32.totalorder %s13, 0
    %p100 = por %p98, %p99
    %p101 = scmp.ne.s32.totalorder %s93, %s95
    %p102 = scmp.eq.s32.totalorder %s18, 1
    %p103 = por %p101, %p102
    %p104 = scmp.ne.s32.totalorder %s95, %s96
    %p105 = scmp.eq.s32.totalorder %s18, 0
    %p106 = por %p104, %p105
    %p107 = scmp.ne.s32.totalorder %s95, %s96
    %p108 = scmp.eq.s32.totalorder %s19, 1
    %p109 = por %p107, %p108
    %p111 = scmp.ne.s32.totalorder %s96, %s110
    %p112 = scmp.eq.s32.totalorder %s19, 0
    %p113 = por %p111, %p112
    %s115 = sadd.s32 %s114, 1
    %p118 = scmp.eq.s32.totalorder %s13, 1
    %p119 = scmp.ne.s32.totalorder %s114, %s116
    %p120 = scmp.eq.s32.totalorder %s13, 0
    %p121 = por %p119, %p120
    %p122 = scmp.ne.s32.totalorder %s114, %s116
    %p123 = scmp.eq.s32.totalorder %s18, 1
    %p124 = por %p122, %p123
    %p125 = scmp.ne.s32.totalorder %s116, %s117
    %p126 = scmp.eq.s32.totalorder %s18, 0
    %p127 = por %p125, %p126
    %p128 = scmp.ne.s32.totalorder %s116, %s117
    %p129 = scmp.eq.s32.totalorder %s19, 1
    %p130 = por %p128, %p129
    %p132 = scmp.ne.s32.totalorder %s117, %s131
    %p133 = scmp.eq.s32.totalorder %s19, 0
    %p134 = por %p132, %p133
    %s135 = ssub.s32 %s20, %s32
    %s136 = ssub.s32 %s21, %s28
    %s137 = sor.u32 %s135, %s136
    %p138 = scmp.eq.s32.totalorder %s137, 0
    %s140 = sadd.s32 %s139, 1
    %s141 = scalar_select %p138, %s139, %s140
    %p144 = pneg %p138
    %p145 = scmp.eq.s32.totalorder %s13, 1
    %p146 = por %p144, %p145
    %p147 = scmp.ne.s32.totalorder %s139, %s142
    %p148 = scmp.eq.s32.totalorder %s13, 0
    %p149 = por %p147, %p148
    %p150 = scmp.ne.s32.totalorder %s139, %s142
    %p151 = scmp.eq.s32.totalorder %s18, 1
    %p152 = por %p150, %p151
    %p153 = scmp.ne.s32.totalorder %s142, %s143
    %p154 = scmp.eq.s32.totalorder %s18, 0
    %p155 = por %p153, %p154
    %p156 = scmp.ne.s32.totalorder %s142, %s143
    %p157 = scmp.eq.s32.totalorder %s19, 1
    %p158 = por %p156, %p157
    %p160 = scmp.ne.s32.totalorder %s143, %s159
    %p161 = scmp.eq.s32.totalorder %s19, 0
    %p162 = por %p160, %p161
    %s164 = sadd.s32 %s163, 1
    %p167 = scmp.eq.s32.totalorder %s13, 1
    %p168 = scmp.ne.s32.totalorder %s163, %s165
    %p169 = scmp.eq.s32.totalorder %s13, 0
    %p170 = por %p168, %p169
    %p171 = scmp.ne.s32.totalorder %s163, %s165
    %p172 = scmp.eq.s32.totalorder %s18, 1
    %p173 = por %p171, %p172
    %p174 = scmp.ne.s32.totalorder %s165, %s166
    %p175 = scmp.eq.s32.totalorder %s18, 0
    %p176 = por %p174, %p175
    %p177 = scmp.ne.s32.totalorder %s165, %s166
    %p178 = scmp.eq.s32.totalorder %s19, 1
    %p179 = por %p177, %p178
    %p181 = scmp.ne.s32.totalorder %s166, %s180
    %p182 = scmp.eq.s32.totalorder %s19, 0
    %p183 = por %p181, %p182
    %s184 = ssub.s32 %s20, %s32
    %s185 = ssub.s32 %s21, %s28
    %s186 = sor.u32 %s184, %s185
    %p187 = scmp.eq.s32.totalorder %s186, 0
    %s189 = sadd.s32 %s188, 1
    %s190 = scalar_select %p187, %s188, %s189
    %p193 = pneg %p187
    %p194 = scmp.eq.s32.totalorder %s13, 1
    %p195 = por %p193, %p194
    %p196 = scmp.ne.s32.totalorder %s188, %s191
    %p197 = scmp.eq.s32.totalorder %s13, 0
    %p198 = por %p196, %p197
    %p199 = scmp.ne.s32.totalorder %s188, %s191
    %p200 = scmp.eq.s32.totalorder %s18, 1
    %p201 = por %p199, %p200
    %p202 = scmp.ne.s32.totalorder %s191, %s192
    %p203 = scmp.eq.s32.totalorder %s18, 0
    %p204 = por %p202, %p203
    %p205 = scmp.ne.s32.totalorder %s191, %s192
    %p206 = scmp.eq.s32.totalorder %s19, 1
    %p207 = por %p205, %p206
    %p209 = scmp.ne.s32.totalorder %s192, %s208
    %p210 = scmp.eq.s32.totalorder %s19, 0
    %p211 = por %p209, %p210
    %s212 = ssub.s32 %s20, %s32
    %s213 = ssub.s32 %s21, %s28
    %s214 = sor.u32 %s212, %s213
    %p215 = scmp.eq.s32.totalorder %s214, 0
    %s217 = sadd.s32 %s216, 1
    %s218 = scalar_select %p215, %s216, %s217
    %p221 = pneg %p215
    %p222 = scmp.eq.s32.totalorder %s13, 1
    %p223 = por %p221, %p222
    %p224 = scmp.ne.s32.totalorder %s216, %s219
    %p225 = scmp.eq.s32.totalorder %s13, 0
    %p226 = por %p224, %p225
    %p227 = scmp.ne.s32.totalorder %s216, %s219
    %p228 = scmp.eq.s32.totalorder %s18, 1
    %p229 = por %p227, %p228
    %p230 = scmp.ne.s32.totalorder %s219, %s220
    %p231 = scmp.eq.s32.totalorder %s18, 0
    %p232 = por %p230, %p231
    %p233 = scmp.ne.s32.totalorder %s219, %s220
    %p234 = scmp.eq.s32.totalorder %s19, 1
    %p235 = por %p233, %p234
    %p237 = scmp.ne.s32.totalorder %s220, %s236
    %p238 = scmp.eq.s32.totalorder %s19, 0
    %p239 = por %p237, %p238
    %p240 = scmp.le.s32.totalorder 1, %s13
    %p241 = scmp.lt.s32.totalorder %s13, 3
    %p242 = pnand %p240, %p241
    %p243 = pneg %p242
    // Predicated region
    $region9: #{att_ffc_forward.11} parent=5 // pred_check
      _
    $region10: #{att_ffc_forward.11} parent=5 // pred_check_branch
      %245 = sbr.rel (%p242) target = $region12
    $region11: #{att_ffc_forward.11} parent=5 // pred_region
      %s246 = ssub.s32 %s13, 1
      // Predicated region
      $region13: #{att_ffc_forward.11} parent=11 // pred_check
        %p247 = pneg %p106
      $region14: #{att_ffc_forward.11} parent=11 // pred_check_branch
        %249 = sbr.rel (%p247) target = $region16
      $region15: #{att_ffc_forward.11} parent=11 // pred_region
        _
      $region16: #{att_ffc_forward.11} parent=11 // pred_fallthru
        _
      // Predicated region
      $region17: #{att_ffc_forward.11} parent=11 // pred_check
        %p250 = pneg %p127
      $region18: #{att_ffc_forward.11} parent=11 // pred_check_branch
        %252 = sbr.rel (%p250) target = $region20
      $region19: #{att_ffc_forward.11} parent=11 // pred_region
        _
      $region20: #{att_ffc_forward.11} parent=11 // pred_fallthru
        _
      // Predicated region
      $region21: #{att_ffc_forward.11} parent=11 // pred_check
        %p253 = pneg %p176
      $region22: #{att_ffc_forward.11} parent=11 // pred_check_branch
        %255 = sbr.rel (%p253) target = $region24
      $region23: #{att_ffc_forward.11} parent=11 // pred_region
        _
      $region24: #{att_ffc_forward.11} parent=11 // pred_fallthru
        _
    $region12: #{att_ffc_forward.11} parent=5 // pred_fallthru
      _
    %p256 = scmp.lt.s32.totalorder %s13, 2
    // Predicated region
    $region25: #{att_ffc_forward.11} parent=5 // pred_check
      %p257 = pneg %p256
    $region26: #{att_ffc_forward.11} parent=5 // pred_check_branch
      %259 = sbr.rel (%p257) target = $region28
    $region27: #{att_ffc_forward.11} parent=5 // pred_region
      // Predicated region
      $region29: #{att_ffc_forward.11} parent=27 // pred_check
        %p260 = pneg %p47
      $region30: #{att_ffc_forward.11} parent=27 // pred_check_branch
        %262 = sbr.rel (%p260) target = $region32
      $region31: #{att_ffc_forward.11} parent=27 // pred_region
        %s263 = smul.u32 3, %s21
        %s264 = ssub.s32 4, %s263
        %p265 = scmp.lt.s32.totalorder %s264, 3
        %s266 = scalar_select %p265, %s264, 3
        %p267 = scmp.lt.s32.totalorder %s20, 1
        %s268 = scalar_select %p267, %s20, 1
        %p269 = scmp.lt.s32.totalorder %s263, 3
        %s270 = scalar_select %p269, %s263, 3
        %s271 = smul.addr %s268, 4
        %s272 = sadd.s32 %s270, %s271
        %s273 = scalar_lea.vmem %s0, %s272
        %s274 = smul.u32 3, %s21
        %s275 = ssub.s32 4, %s274
        %p276 = scmp.lt.s32.totalorder %s275, 3
        %s277 = scalar_select %p276, %s275, 3
      $region32: #{att_ffc_forward.11} parent=27 // pred_fallthru
        _
      // Predicated region
      $region33: #{att_ffc_forward.11} parent=27 // pred_check
        %p278 = pneg %p79
      $region34: #{att_ffc_forward.11} parent=27 // pred_check_branch
        %280 = sbr.rel (%p278) target = $region36
      $region35: #{att_ffc_forward.11} parent=27 // pred_region
        %s281 = sadd.s32 %s21, 1
        %s282 = smul.u32 %s281, 3
        %p283 = scmp.lt.s32.totalorder %s20, 1
        %s284 = scalar_select %p283, %s20, 1
        %p285 = scmp.lt.s32.totalorder %s282, 3
        %s286 = scalar_select %p285, %s282, 3
        %s287 = smul.addr %s284, 4
        %s288 = sadd.s32 %s286, %s287
        %s289 = scalar_lea.vmem %s1, %s288
        %s290 = sadd.s32 %s21, 1
        %s291 = smul.u32 %s290, 3
      $region36: #{att_ffc_forward.11} parent=27 // pred_fallthru
        _
      // Predicated region
      $region37: #{att_ffc_forward.11} parent=27 // pred_check
        %p292 = pneg %p149
      $region38: #{att_ffc_forward.11} parent=27 // pred_check_branch
        %294 = sbr.rel (%p292) target = $region40
      $region39: #{att_ffc_forward.11} parent=27 // pred_region
        %s295 = smul.u32 3, %s21
        %p296 = scmp.lt.s32.totalorder %s20, 1
        %s297 = scalar_select %p296, %s20, 1
        %p298 = scmp.lt.s32.totalorder %s295, 2
        %s299 = scalar_select %p298, %s295, 2
        %s300 = smul.addr %s297, 3
        %s301 = sadd.s32 %s299, %s300
        %s302 = smul.addr %s301, 2
        %s303 = scalar_lea.vmem %s4, %s302
        %s304 = smul.u32 3, %s21
      $region40: #{att_ffc_forward.11} parent=27 // pred_fallthru
        _
      // Predicated region
      $region41: #{att_ffc_forward.11} parent=27 // pred_check
        %p305 = pneg %p198
      $region42: #{att_ffc_forward.11} parent=27 // pred_check_branch
        %307 = sbr.rel (%p305) target = $region44
      $region43: #{att_ffc_forward.11} parent=27 // pred_region
        %s308 = smul.u32 3, %s21
        %p309 = scmp.lt.s32.totalorder %s20, 1
        %s310 = scalar_select %p309, %s20, 1
        %p311 = scmp.lt.s32.totalorder %s308, 2
        %s312 = scalar_select %p311, %s308, 2
        %s313 = smul.addr %s310, 3
        %s314 = sadd.s32 %s312, %s313
        %s315 = smul.addr %s314, 4
        %s316 = scalar_lea.vmem %s6, %s315
        %s317 = smul.u32 3, %s21
      $region44: #{att_ffc_forward.11} parent=27 // pred_fallthru
        _
    $region28: #{att_ffc_forward.11} parent=5 // pred_fallthru
      _
    %p318 = scmp.le.s32.totalorder 1, %s13
    %p319 = scmp.lt.s32.totalorder %s13, 3
    %p320 = pnand %p318, %p319
    %p321 = pneg %p320
    // Predicated region
    $region45: #{att_ffc_forward.11} parent=5 // pred_check
      _
    $region46: #{att_ffc_forward.11} parent=5 // pred_check_branch
      %323 = sbr.rel (%p320) target = $region48
    $region47: #{att_ffc_forward.11} parent=5 // pred_region
      %s324 = ssub.s32 %s13, 1
      %s325 = smul.u32 3, %s23
      %s326 = ssub.s32 4, %s325
      %p327 = scmp.lt.s32.totalorder %s326, 3
      %s328 = scalar_select %p327, %s326, 3
      %p329 = scmp.lt.s32.totalorder %s22, 1
      %s330 = scalar_select %p329, %s22, 1
      %p331 = scmp.lt.s32.totalorder %s325, 3
      %s332 = scalar_select %p331, %s325, 3
      %s333 = smul.addr %s330, 4
      %s334 = sadd.s32 %s332, %s333
      %s335 = scalar_lea.vmem %s0, %s334
      %p336 = pneg %p53
      %p337 = pneg %p50
      %s338 = sadd.s32 %s23, 1
      %s339 = smul.u32 %s338, 3
      %p340 = scmp.lt.s32.totalorder %s22, 1
      %s341 = scalar_select %p340, %s22, 1
      %p342 = scmp.lt.s32.totalorder %s339, 3
      %s343 = scalar_select %p342, %s339, 3
      %s344 = smul.addr %s341, 4
      %s345 = sadd.s32 %s343, %s344
      %s346 = scalar_lea.vmem %s1, %s345
      %p347 = pneg %p85
      %p348 = pneg %p82
      %p349 = pneg %p106
      %p350 = pneg %p103
      %p351 = pneg %p127
      %p352 = pneg %p124
      %s353 = smul.u32 3, %s23
      %p354 = scmp.lt.s32.totalorder %s22, 1
      %s355 = scalar_select %p354, %s22, 1
      %p356 = scmp.lt.s32.totalorder %s353, 2
      %s357 = scalar_select %p356, %s353, 2
      %s358 = smul.addr %s355, 3
      %s359 = sadd.s32 %s357, %s358
      %s360 = smul.addr %s359, 2
      %s361 = scalar_lea.vmem %s4, %s360
      %p362 = pneg %p155
      %p363 = pneg %p152
      %p364 = pneg %p176
      %p365 = pneg %p173
      %s366 = smul.u32 3, %s23
      %p367 = scmp.lt.s32.totalorder %s22, 1
      %s368 = scalar_select %p367, %s22, 1
      %p369 = scmp.lt.s32.totalorder %s366, 2
      %s370 = scalar_select %p369, %s366, 2
      %s371 = smul.addr %s368, 3
      %s372 = sadd.s32 %s370, %s371
      %s373 = smul.addr %s372, 4
      %s374 = scalar_lea.vmem %s6, %s373
      %p375 = pneg %p204
      %p376 = pneg %p201
      %p377 = pneg %p232
      %p378 = pneg %p229
      %s379 = smul.u32 3, %s23
      %p380 = scmp.lt.s32.totalorder %s22, 1
      %s381 = scalar_select %p380, %s22, 1
      %p382 = scmp.lt.s32.totalorder %s379, 2
      %s383 = scalar_select %p382, %s379, 2
      %s384 = smul.addr %s381, 3
      %s385 = sadd.s32 %s383, %s384
      %s386 = smul.addr %s385, 8
      %s387 = scalar_lea.vmem %s7, %s386
      %s388 = smul.u32 3, %s23
      %s389 = ssub.s32 4, %s388
      %p390 = scmp.lt.s32.totalorder %s389, 3
      %s391 = scalar_select %p390, %s389, 3
      %p392 = scmp.lt.s32.totalorder %s22, 1
      %s393 = scalar_select %p392, %s22, 1
      %p394 = scmp.lt.s32.totalorder %s388, 3
      %s395 = scalar_select %p394, %s388, 3
      %s396 = smul.addr %s393, 4
      %s397 = sadd.s32 %s395, %s396
      %s398 = scalar_lea.vmem %s0, %s397
      %s399 = smul.u32 3, %s23
      %s400 = ssub.s32 4, %s399
      %p401 = scmp.lt.s32.totalorder %s400, 3
      %s402 = scalar_select %p401, %s400, 3
      %s403 = sadd.s32 %s23, 1
      %s404 = smul.u32 %s403, 3
      %p405 = scmp.lt.s32.totalorder %s22, 1
      %s406 = scalar_select %p405, %s22, 1
      %p407 = scmp.lt.s32.totalorder %s404, 3
      %s408 = scalar_select %p407, %s404, 3
      %s409 = smul.addr %s406, 4
      %s410 = sadd.s32 %s408, %s409
      %s411 = scalar_lea.vmem %s1, %s410
      %s412 = sadd.s32 %s23, 1
      %s413 = smul.u32 %s412, 3
      %s414 = smul.u32 3, %s23
      %p415 = scmp.lt.s32.totalorder %s22, 1
      %s416 = scalar_select %p415, %s22, 1
      %p417 = scmp.lt.s32.totalorder %s414, 2
      %s418 = scalar_select %p417, %s414, 2
      %s419 = smul.addr %s416, 3
      %s420 = sadd.s32 %s418, %s419
      %s421 = smul.addr %s420, 2
      %s422 = scalar_lea.vmem %s4, %s421
      %s423 = smul.u32 3, %s23
      %s424 = smul.u32 3, %s23
      %p425 = scmp.lt.s32.totalorder %s22, 1
      %s426 = scalar_select %p425, %s22, 1
      %p427 = scmp.lt.s32.totalorder %s424, 2
      %s428 = scalar_select %p427, %s424, 2
      %s429 = smul.addr %s426, 3
      %s430 = sadd.s32 %s428, %s429
      %s431 = smul.addr %s430, 4
      %s432 = scalar_lea.vmem %s6, %s431
      %s433 = smul.u32 3, %s23
      %s434 = smul.u32 3, %s23
      %p435 = scmp.lt.s32.totalorder %s22, 1
      %s436 = scalar_select %p435, %s22, 1
      %p437 = scmp.lt.s32.totalorder %s434, 2
      %s438 = scalar_select %p437, %s434, 2
      %s439 = smul.addr %s436, 3
      %s440 = sadd.s32 %s438, %s439
      %s441 = smul.addr %s440, 8
      %s442 = scalar_lea.vmem %s7, %s441
      %s443 = smul.u32 3, %s23
      %v445 = vld [vmem:[%s398] sm:$0x7]
      %v446 = vld [vmem:[%s411] sm:$0x1]
      %448 = vst [vmem:[#allocation1] ss:$9 sm:$0xff] %v445
      %v449 = vld [vmem:[#allocation1] sm:$0xff]
      %v451 = vld [vmem:[#allocation1 + $0x9] sm:$0xff]
      %v453 = vld [vmem:[#allocation1 + $0x12] sm:$0xff]
      %v455 = vld [vmem:[%s2] sm:$0x7]
      %s456 = scalar_lea.vmem %s2, 4
      %v457 = vld [vmem:[%s456] sm:$0x7]
      %459 = vrot.lane.b32.xlu0 %v449, 127
      %v460 = vpop.permute.xlu0 %459
      %461 = vrot.lane.b32.xlu0 %v451, 127
      %v462 = vpop.permute.xlu0 %461
      %463 = vrot.lane.b32.xlu0 %v453, 127
      %v464 = vpop.permute.xlu0 %463
      %465 = vrot.lane.b32.xlu0 %v446, 127
      %v466 = vpop.permute.xlu0 %465
      %vm467 = vcmask 1039360
      %v468 = vsel %vm467, %v460, %v462
      %v469 = vsel %vm467, %v462, %v464
      %v470 = vsel %vm467, %v464, %v466
      %vm471 = vcmask 15360
      %v473 = vsel %vm471, %v457, 0
      %vm475 = vcmask 1040384
      %v477 = vsel %vm475, %v468, 0
      %v480 = vsel %vm475, %v469, 0
      %v483 = vsel %vm475, %v470, 0
      %485 = vmatpush.bf16.msra.mxu0 0
      %486 = vmatpush.bf16.msra.mxu0 0
      %487 = vmatpush.bf16.msra.mxu0 0
      %488 = vmatpush.bf16.msra.mxu0 0
      %489 = vmatpush.bf16.msra.mxu0 0
      %490 = vmatpush.bf16.msra.mxu0 0
      %491 = vmatpush.bf16.msra.mxu0 0
      %492 = vmatpush.bf16.msra.mxu0 %v477
      %493 = vmatmul.bf16.gmra.mxu0 %v473
      %v494 = vpop.f32.mrf.mxu0
      %v495 = vadd.f32 0.0, %v494
      %v496 = vpop.f32.mrf.mxu0
      %497 = vdwg.mxu0
      %498 = vmatpush.bf16.msra.mxu0 0
      %499 = vmatpush.bf16.msra.mxu0 0
      %500 = vmatpush.bf16.msra.mxu0 0
      %501 = vmatpush.bf16.msra.mxu0 0
      %502 = vmatpush.bf16.msra.mxu0 0
      %503 = vmatpush.bf16.msra.mxu0 0
      %504 = vmatpush.bf16.msra.mxu0 0
      %505 = vmatpush.bf16.msra.mxu0 %v480
      %506 = vmatmul.bf16.gmra.mxu0 %v473
      %v507 = vpop.f32.mrf.mxu0
      %v508 = vadd.f32 0.0, %v507
      %v509 = vpop.f32.mrf.mxu0
      %510 = vdwg.mxu0
      %511 = vmatpush.bf16.msra.mxu0 0
      %512 = vmatpush.bf16.msra.mxu0 0
      %513 = vmatpush.bf16.msra.mxu0 0
      %514 = vmatpush.bf16.msra.mxu0 0
      %515 = vmatpush.bf16.msra.mxu0 0
      %516 = vmatpush.bf16.msra.mxu0 0
      %517 = vmatpush.bf16.msra.mxu0 0
      %518 = vmatpush.bf16.msra.mxu0 %v483
      %519 = vmatmul.bf16.gmra.mxu0 %v473
      %v520 = vpop.f32.mrf.mxu0
      %v521 = vadd.f32 0.0, %v520
      %v522 = vpop.f32.mrf.mxu0
      %523 = vdwg.mxu0
      %v525 = vsel %vm471, %v455, 0
      %v527 = vsel %vm475, %v449, 0
      %v529 = vsel %vm475, %v451, 0
      %v531 = vsel %vm475, %v453, 0
      %533 = vmatpush.bf16.msra.mxu0 0
      %534 = vmatpush.bf16.msra.mxu0 0
      %535 = vmatpush.bf16.msra.mxu0 0
      %536 = vmatpush.bf16.msra.mxu0 0
      %537 = vmatpush.bf16.msra.mxu0 0
      %538 = vmatpush.bf16.msra.mxu0 0
      %539 = vmatpush.bf16.msra.mxu0 0
      %540 = vmatpush.bf16.msra.mxu0 %v527
      %541 = vmatmul.bf16.gmra.mxu0 %v525
      %v542 = vpop.f32.mrf.mxu0
      %v543 = vadd.f32 %v495, %v542
      %v544 = vpop.f32.mrf.mxu0
      %545 = vdwg.mxu0
      %546 = vmatpush.bf16.msra.mxu0 0
      %547 = vmatpush.bf16.msra.mxu0 0
      %548 = vmatpush.bf16.msra.mxu0 0
      %549 = vmatpush.bf16.msra.mxu0 0
      %550 = vmatpush.bf16.msra.mxu0 0
      %551 = vmatpush.bf16.msra.mxu0 0
      %552 = vmatpush.bf16.msra.mxu0 0
      %553 = vmatpush.bf16.msra.mxu0 %v529
      %554 = vmatmul.bf16.gmra.mxu0 %v525
      %v555 = vpop.f32.mrf.mxu0
      %v556 = vadd.f32 %v508, %v555
      %v557 = vpop.f32.mrf.mxu0
      %558 = vdwg.mxu0
      %559 = vmatpush.bf16.msra.mxu0 0
      %560 = vmatpush.bf16.msra.mxu0 0
      %561 = vmatpush.bf16.msra.mxu0 0
      %562 = vmatpush.bf16.msra.mxu0 0
      %563 = vmatpush.bf16.msra.mxu0 0
      %564 = vmatpush.bf16.msra.mxu0 0
      %565 = vmatpush.bf16.msra.mxu0 0
      %566 = vmatpush.bf16.msra.mxu0 %v531
      %567 = vmatmul.bf16.gmra.mxu0 %v525
      %v568 = vpop.f32.mrf.mxu0
      %v569 = vadd.f32 %v521, %v568
      %v570 = vpop.f32.mrf.mxu0
      %571 = vdwg.mxu0
      %s572 = scalar_lea.vmem %s2, 8
      %v573 = vld [vmem:[%s572] sm:$0x7]
      %574 = vrot.lane.b32.xlu0 %v449, 126
      %v575 = vpop.permute.xlu0 %574
      %576 = vrot.lane.b32.xlu0 %v451, 126
      %v577 = vpop.permute.xlu0 %576
      %578 = vrot.lane.b32.xlu0 %v453, 126
      %v579 = vpop.permute.xlu0 %578
      %580 = vrot.lane.b32.xlu0 %v446, 126
      %v581 = vpop.permute.xlu0 %580
      %vm582 = vcmask 1031168
      %v583 = vsel %vm582, %v575, %v577
      %v584 = vsel %vm582, %v577, %v579
      %v585 = vsel %vm582, %v579, %v581
      %v587 = vsel %vm471, %v573, 0
      %v590 = vsel %vm475, %v583, 0
      %v593 = vsel %vm475, %v584, 0
      %v596 = vsel %vm475, %v585, 0
      %598 = vmatpush.bf16.msra.mxu0 0
      %599 = vmatpush.bf16.msra.mxu0 0
      %600 = vmatpush.bf16.msra.mxu0 0
      %601 = vmatpush.bf16.msra.mxu0 0
      %602 = vmatpush.bf16.msra.mxu0 0
      %603 = vmatpush.bf16.msra.mxu0 0
      %604 = vmatpush.bf16.msra.mxu0 0
      %605 = vmatpush.bf16.msra.mxu0 %v590
      %606 = vmatmul.bf16.gmra.mxu0 %v587
      %v607 = vpop.f32.mrf.mxu0
      %v608 = vadd.f32 0.0, %v607
      %v609 = vpop.f32.mrf.mxu0
      %610 = vdwg.mxu0
      %611 = vmatpush.bf16.msra.mxu0 0
      %612 = vmatpush.bf16.msra.mxu0 0
      %613 = vmatpush.bf16.msra.mxu0 0
      %614 = vmatpush.bf16.msra.mxu0 0
      %615 = vmatpush.bf16.msra.mxu0 0
      %616 = vmatpush.bf16.msra.mxu0 0
      %617 = vmatpush.bf16.msra.mxu0 0
      %618 = vmatpush.bf16.msra.mxu0 %v593
      %619 = vmatmul.bf16.gmra.mxu0 %v587
      %v620 = vpop.f32.mrf.mxu0
      %v621 = vadd.f32 0.0, %v620
      %v622 = vpop.f32.mrf.mxu0
      %623 = vdwg.mxu0
      %624 = vmatpush.bf16.msra.mxu0 0
      %625 = vmatpush.bf16.msra.mxu0 0
      %626 = vmatpush.bf16.msra.mxu0 0
      %627 = vmatpush.bf16.msra.mxu0 0
      %628 = vmatpush.bf16.msra.mxu0 0
      %629 = vmatpush.bf16.msra.mxu0 0
      %630 = vmatpush.bf16.msra.mxu0 0
      %631 = vmatpush.bf16.msra.mxu0 %v596
      %632 = vmatmul.bf16.gmra.mxu0 %v587
      %v633 = vpop.f32.mrf.mxu0
      %v634 = vadd.f32 0.0, %v633
      %v635 = vpop.f32.mrf.mxu0
      %636 = vdwg.mxu0
      %v637 = vadd.f32 %v543, %v608
      %v638 = vadd.f32 %v556, %v621
      %v639 = vadd.f32 %v569, %v634
      %s640 = scalar_lea.vmem %s2, 12
      %v641 = vld [vmem:[%s640] sm:$0x7]
      %642 = vrot.lane.b32.xlu0 %v449, 110
      %v643 = vpop.permute.xlu0 %642
      %644 = vrot.lane.b32.xlu0 %v451, 110
      %v645 = vpop.permute.xlu0 %644
      %646 = vrot.lane.b32.xlu0 %v453, 110
      %v647 = vpop.permute.xlu0 %646
      %648 = vrot.lane.b32.xlu0 %v446, 110
      %v649 = vpop.permute.xlu0 %648
      %vm650 = vcmask 900096
      %v651 = vsel %vm650, %v643, %v645
      %v652 = vsel %vm650, %v645, %v647
      %v653 = vsel %vm650, %v647, %v649
      %v655 = vsel %vm471, %v641, 0
      %v658 = vsel %vm475, %v651, 0
      %v661 = vsel %vm475, %v652, 0
      %v664 = vsel %vm475, %v653, 0
      %666 = vmatpush.bf16.msra.mxu0 0
      %667 = vmatpush.bf16.msra.mxu0 0
      %668 = vmatpush.bf16.msra.mxu0 0
      %669 = vmatpush.bf16.msra.mxu0 0
      %670 = vmatpush.bf16.msra.mxu0 0
      %671 = vmatpush.bf16.msra.mxu0 0
      %672 = vmatpush.bf16.msra.mxu0 0
      %673 = vmatpush.bf16.msra.mxu0 %v658
      %674 = vmatmul.bf16.gmra.mxu0 %v655
      %v675 = vpop.f32.mrf.mxu0
      %v676 = vadd.f32 0.0, %v675
      %v677 = vpop.f32.mrf.mxu0
      %678 = vdwg.mxu0
      %679 = vmatpush.bf16.msra.mxu0 0
      %680 = vmatpush.bf16.msra.mxu0 0
      %681 = vmatpush.bf16.msra.mxu0 0
      %682 = vmatpush.bf16.msra.mxu0 0
      %683 = vmatpush.bf16.msra.mxu0 0
      %684 = vmatpush.bf16.msra.mxu0 0
      %685 = vmatpush.bf16.msra.mxu0 0
      %686 = vmatpush.bf16.msra.mxu0 %v661
      %687 = vmatmul.bf16.gmra.mxu0 %v655
      %v688 = vpop.f32.mrf.mxu0
      %v689 = vadd.f32 0.0, %v688
      %v690 = vpop.f32.mrf.mxu0
      %691 = vdwg.mxu0
      %692 = vmatpush.bf16.msra.mxu0 0
      %693 = vmatpush.bf16.msra.mxu0 0
      %694 = vmatpush.bf16.msra.mxu0 0
      %695 = vmatpush.bf16.msra.mxu0 0
      %696 = vmatpush.bf16.msra.mxu0 0
      %697 = vmatpush.bf16.msra.mxu0 0
      %698 = vmatpush.bf16.msra.mxu0 0
      %699 = vmatpush.bf16.msra.mxu0 %v664
      %700 = vmatmul.bf16.gmra.mxu0 %v655
      %v701 = vpop.f32.mrf.mxu0
      %v702 = vadd.f32 0.0, %v701
      %v703 = vpop.f32.mrf.mxu0
      %704 = vdwg.mxu0
      %v705 = vadd.f32 %v637, %v676
      %v706 = vadd.f32 %v638, %v689
      %v707 = vadd.f32 %v639, %v702
      %s708 = scalar_lea.vmem %s2, 16
      %v709 = vld [vmem:[%s708] sm:$0x7]
      %710 = vrot.lane.b32.xlu0 %v449, 109
      %v711 = vpop.permute.xlu0 %710
      %712 = vrot.lane.b32.xlu0 %v451, 109
      %v713 = vpop.permute.xlu0 %712
      %714 = vrot.lane.b32.xlu0 %v453, 109
      %v715 = vpop.permute.xlu0 %714
      %716 = vrot.lane.b32.xlu0 %v446, 109
      %v717 = vpop.permute.xlu0 %716
      %vm718 = vcmask 891904
      %v719 = vsel %vm718, %v711, %v713
      %v720 = vsel %vm718, %v713, %v715
      %v721 = vsel %vm718, %v715, %v717
      %v723 = vsel %vm471, %v709, 0
      %v726 = vsel %vm475, %v719, 0
      %v729 = vsel %vm475, %v720, 0
      %v732 = vsel %vm475, %v721, 0
      %734 = vmatpush.bf16.msra.mxu0 0
      %735 = vmatpush.bf16.msra.mxu0 0
      %736 = vmatpush.bf16.msra.mxu0 0
      %737 = vmatpush.bf16.msra.mxu0 0
      %738 = vmatpush.bf16.msra.mxu0 0
      %739 = vmatpush.bf16.msra.mxu0 0
      %740 = vmatpush.bf16.msra.mxu0 0
      %741 = vmatpush.bf16.msra.mxu0 %v726
      %742 = vmatmul.bf16.gmra.mxu0 %v723
      %v743 = vpop.f32.mrf.mxu0
      %v744 = vadd.f32 0.0, %v743
      %v745 = vpop.f32.mrf.mxu0
      %746 = vdwg.mxu0
      %747 = vmatpush.bf16.msra.mxu0 0
      %748 = vmatpush.bf16.msra.mxu0 0
      %749 = vmatpush.bf16.msra.mxu0 0
      %750 = vmatpush.bf16.msra.mxu0 0
      %751 = vmatpush.bf16.msra.mxu0 0
      %752 = vmatpush.bf16.msra.mxu0 0
      %753 = vmatpush.bf16.msra.mxu0 0
      %754 = vmatpush.bf16.msra.mxu0 %v729
      %755 = vmatmul.bf16.gmra.mxu0 %v723
      %v756 = vpop.f32.mrf.mxu0
      %v757 = vadd.f32 0.0, %v756
      %v758 = vpop.f32.mrf.mxu0
      %759 = vdwg.mxu0
      %760 = vmatpush.bf16.msra.mxu0 0
      %761 = vmatpush.bf16.msra.mxu0 0
      %762 = vmatpush.bf16.msra.mxu0 0
      %763 = vmatpush.bf16.msra.mxu0 0
      %764 = vmatpush.bf16.msra.mxu0 0
      %765 = vmatpush.bf16.msra.mxu0 0
      %766 = vmatpush.bf16.msra.mxu0 0
      %767 = vmatpush.bf16.msra.mxu0 %v732
      %768 = vmatmul.bf16.gmra.mxu0 %v723
      %v769 = vpop.f32.mrf.mxu0
      %v770 = vadd.f32 0.0, %v769
      %v771 = vpop.f32.mrf.mxu0
      %772 = vdwg.mxu0
      %v773 = vadd.f32 %v705, %v744
      %v774 = vadd.f32 %v706, %v757
      %v775 = vadd.f32 %v707, %v770
      %s776 = scalar_lea.vmem %s2, 20
      %v777 = vld [vmem:[%s776] sm:$0x7]
      %778 = vrot.lane.b32.xlu0 %v449, 108
      %v779 = vpop.permute.xlu0 %778
      %780 = vrot.lane.b32.xlu0 %v451, 108
      %v781 = vpop.permute.xlu0 %780
      %782 = vrot.lane.b32.xlu0 %v453, 108
      %v783 = vpop.permute.xlu0 %782
      %784 = vrot.lane.b32.xlu0 %v446, 108
      %v785 = vpop.permute.xlu0 %784
      %vm786 = vcmask 883712
      %v787 = vsel %vm786, %v779, %v781
      %v788 = vsel %vm786, %v781, %v783
      %v789 = vsel %vm786, %v783, %v785
      %v791 = vsel %vm471, %v777, 0
      %v794 = vsel %vm475, %v787, 0
      %v797 = vsel %vm475, %v788, 0
      %v800 = vsel %vm475, %v789, 0
      %802 = vmatpush.bf16.msra.mxu0 0
      %803 = vmatpush.bf16.msra.mxu0 0
      %804 = vmatpush.bf16.msra.mxu0 0
      %805 = vmatpush.bf16.msra.mxu0 0
      %806 = vmatpush.bf16.msra.mxu0 0
      %807 = vmatpush.bf16.msra.mxu0 0
      %808 = vmatpush.bf16.msra.mxu0 0
      %809 = vmatpush.bf16.msra.mxu0 %v794
      %810 = vmatmul.bf16.gmra.mxu0 %v791
      %v811 = vpop.f32.mrf.mxu0
      %v812 = vadd.f32 0.0, %v811
      %v813 = vpop.f32.mrf.mxu0
      %814 = vdwg.mxu0
      %815 = vmatpush.bf16.msra.mxu0 0
      %816 = vmatpush.bf16.msra.mxu0 0
      %817 = vmatpush.bf16.msra.mxu0 0
      %818 = vmatpush.bf16.msra.mxu0 0
      %819 = vmatpush.bf16.msra.mxu0 0
      %820 = vmatpush.bf16.msra.mxu0 0
      %821 = vmatpush.bf16.msra.mxu0 0
      %822 = vmatpush.bf16.msra.mxu0 %v797
      %823 = vmatmul.bf16.gmra.mxu0 %v791
      %v824 = vpop.f32.mrf.mxu0
      %v825 = vadd.f32 0.0, %v824
      %v826 = vpop.f32.mrf.mxu0
      %827 = vdwg.mxu0
      %828 = vmatpush.bf16.msra.mxu0 0
      %829 = vmatpush.bf16.msra.mxu0 0
      %830 = vmatpush.bf16.msra.mxu0 0
      %831 = vmatpush.bf16.msra.mxu0 0
      %832 = vmatpush.bf16.msra.mxu0 0
      %833 = vmatpush.bf16.msra.mxu0 0
      %834 = vmatpush.bf16.msra.mxu0 0
      %835 = vmatpush.bf16.msra.mxu0 %v800
      %836 = vmatmul.bf16.gmra.mxu0 %v791
      %v837 = vpop.f32.mrf.mxu0
      %v838 = vadd.f32 0.0, %v837
      %v839 = vpop.f32.mrf.mxu0
      %840 = vdwg.mxu0
      %v841 = vadd.f32 %v773, %v812
      %v842 = vadd.f32 %v774, %v825
      %v843 = vadd.f32 %v775, %v838
      %s844 = scalar_lea.vmem %s2, 24
      %v845 = vld [vmem:[%s844] sm:$0x7]
      %846 = vrot.lane.b32.xlu0 %v449, 92
      %v847 = vpop.permute.xlu0 %846
      %848 = vrot.lane.b32.xlu0 %v451, 92
      %v849 = vpop.permute.xlu0 %848
      %850 = vrot.lane.b32.xlu0 %v453, 92
      %v851 = vpop.permute.xlu0 %850
      %852 = vrot.lane.b32.xlu0 %v446, 92
      %v853 = vpop.permute.xlu0 %852
      %vm854 = vcmask 752640
      %v855 = vsel %vm854, %v847, %v849
      %v856 = vsel %vm854, %v849, %v851
      %v857 = vsel %vm854, %v851, %v853
      %v859 = vsel %vm471, %v845, 0
      %v862 = vsel %vm475, %v855, 0
      %v865 = vsel %vm475, %v856, 0
      %v868 = vsel %vm475, %v857, 0
      %870 = vmatpush.bf16.msra.mxu0 0
      %871 = vmatpush.bf16.msra.mxu0 0
      %872 = vmatpush.bf16.msra.mxu0 0
      %873 = vmatpush.bf16.msra.mxu0 0
      %874 = vmatpush.bf16.msra.mxu0 0
      %875 = vmatpush.bf16.msra.mxu0 0
      %876 = vmatpush.bf16.msra.mxu0 0
      %877 = vmatpush.bf16.msra.mxu0 %v862
      %878 = vmatmul.bf16.gmra.mxu0 %v859
      %v879 = vpop.f32.mrf.mxu0
      %v880 = vadd.f32 0.0, %v879
      %v881 = vpop.f32.mrf.mxu0
      %882 = vdwg.mxu0
      %883 = vmatpush.bf16.msra.mxu0 0
      %884 = vmatpush.bf16.msra.mxu0 0
      %885 = vmatpush.bf16.msra.mxu0 0
      %886 = vmatpush.bf16.msra.mxu0 0
      %887 = vmatpush.bf16.msra.mxu0 0
      %888 = vmatpush.bf16.msra.mxu0 0
      %889 = vmatpush.bf16.msra.mxu0 0
      %890 = vmatpush.bf16.msra.mxu0 %v865
      %891 = vmatmul.bf16.gmra.mxu0 %v859
      %v892 = vpop.f32.mrf.mxu0
      %v893 = vadd.f32 0.0, %v892
      %v894 = vpop.f32.mrf.mxu0
      %895 = vdwg.mxu0
      %896 = vmatpush.bf16.msra.mxu0 0
      %897 = vmatpush.bf16.msra.mxu0 0
      %898 = vmatpush.bf16.msra.mxu0 0
      %899 = vmatpush.bf16.msra.mxu0 0
      %900 = vmatpush.bf16.msra.mxu0 0
      %901 = vmatpush.bf16.msra.mxu0 0
      %902 = vmatpush.bf16.msra.mxu0 0
      %903 = vmatpush.bf16.msra.mxu0 %v868
      %904 = vmatmul.bf16.gmra.mxu0 %v859
      %v905 = vpop.f32.mrf.mxu0
      %v906 = vadd.f32 0.0, %v905
      %v907 = vpop.f32.mrf.mxu0
      %908 = vdwg.mxu0
      %v909 = vadd.f32 %v841, %v880
      %v910 = vadd.f32 %v842, %v893
      %v911 = vadd.f32 %v843, %v906
      %s912 = scalar_lea.vmem %s2, 28
      %v913 = vld [vmem:[%s912] sm:$0x7]
      %914 = vrot.lane.b32.xlu0 %v449, 91
      %v915 = vpop.permute.xlu0 %914
      %916 = vrot.lane.b32.xlu0 %v451, 91
      %v917 = vpop.permute.xlu0 %916
      %918 = vrot.lane.b32.xlu0 %v453, 91
      %v919 = vpop.permute.xlu0 %918
      %920 = vrot.lane.b32.xlu0 %v446, 91
      %v921 = vpop.permute.xlu0 %920
      %vm922 = vcmask 744448
      %v923 = vsel %vm922, %v915, %v917
      %v924 = vsel %vm922, %v917, %v919
      %v925 = vsel %vm922, %v919, %v921
      %v927 = vsel %vm471, %v913, 0
      %v930 = vsel %vm475, %v923, 0
      %v933 = vsel %vm475, %v924, 0
      %v936 = vsel %vm475, %v925, 0
      %938 = vmatpush.bf16.msra.mxu0 0
      %939 = vmatpush.bf16.msra.mxu0 0
      %940 = vmatpush.bf16.msra.mxu0 0
      %941 = vmatpush.bf16.msra.mxu0 0
      %942 = vmatpush.bf16.msra.mxu0 0
      %943 = vmatpush.bf16.msra.mxu0 0
      %944 = vmatpush.bf16.msra.mxu0 0
      %945 = vmatpush.bf16.msra.mxu0 %v930
      %946 = vmatmul.bf16.gmra.mxu0 %v927
      %v947 = vpop.f32.mrf.mxu0
      %v948 = vadd.f32 0.0, %v947
      %v949 = vpop.f32.mrf.mxu0
      %950 = vdwg.mxu0
      %951 = vmatpush.bf16.msra.mxu0 0
      %952 = vmatpush.bf16.msra.mxu0 0
      %953 = vmatpush.bf16.msra.mxu0 0
      %954 = vmatpush.bf16.msra.mxu0 0
      %955 = vmatpush.bf16.msra.mxu0 0
      %956 = vmatpush.bf16.msra.mxu0 0
      %957 = vmatpush.bf16.msra.mxu0 0
      %958 = vmatpush.bf16.msra.mxu0 %v933
      %959 = vmatmul.bf16.gmra.mxu0 %v927
      %v960 = vpop.f32.mrf.mxu0
      %v961 = vadd.f32 0.0, %v960
      %v962 = vpop.f32.mrf.mxu0
      %963 = vdwg.mxu0
      %964 = vmatpush.bf16.msra.mxu0 0
      %965 = vmatpush.bf16.msra.mxu0 0
      %966 = vmatpush.bf16.msra.mxu0 0
      %967 = vmatpush.bf16.msra.mxu0 0
      %968 = vmatpush.bf16.msra.mxu0 0
      %969 = vmatpush.bf16.msra.mxu0 0
      %970 = vmatpush.bf16.msra.mxu0 0
      %971 = vmatpush.bf16.msra.mxu0 %v936
      %972 = vmatmul.bf16.gmra.mxu0 %v927
      %v973 = vpop.f32.mrf.mxu0
      %v974 = vadd.f32 0.0, %v973
      %v975 = vpop.f32.mrf.mxu0
      %976 = vdwg.mxu0
      %v977 = vadd.f32 %v909, %v948
      %v978 = vadd.f32 %v910, %v961
      %v979 = vadd.f32 %v911, %v974
      %s980 = scalar_lea.vmem %s2, 32
      %v981 = vld [vmem:[%s980] sm:$0x7]
      %982 = vrot.lane.b32.xlu0 %v449, 90
      %v983 = vpop.permute.xlu0 %982
      %984 = vrot.lane.b32.xlu0 %v451, 90
      %v985 = vpop.permute.xlu0 %984
      %986 = vrot.lane.b32.xlu0 %v453, 90
      %v987 = vpop.permute.xlu0 %986
      %988 = vrot.lane.b32.xlu0 %v446, 90
      %v989 = vpop.permute.xlu0 %988
      %vm990 = vcmask 736256
      %v991 = vsel %vm990, %v983, %v985
      %v992 = vsel %vm990, %v985, %v987
      %v993 = vsel %vm990, %v987, %v989
      %v995 = vsel %vm471, %v981, 0
      %v998 = vsel %vm475, %v991, 0
      %v1001 = vsel %vm475, %v992, 0
      %v1004 = vsel %vm475, %v993, 0
      %1006 = vmatpush.bf16.msra.mxu0 0
      %1007 = vmatpush.bf16.msra.mxu0 0
      %1008 = vmatpush.bf16.msra.mxu0 0
      %1009 = vmatpush.bf16.msra.mxu0 0
      %1010 = vmatpush.bf16.msra.mxu0 0
      %1011 = vmatpush.bf16.msra.mxu0 0
      %1012 = vmatpush.bf16.msra.mxu0 0
      %1013 = vmatpush.bf16.msra.mxu0 %v998
      %1014 = vmatmul.bf16.gmra.mxu0 %v995
      %v1015 = vpop.f32.mrf.mxu0
      %v1016 = vadd.f32 0.0, %v1015
      %v1017 = vpop.f32.mrf.mxu0
      %1018 = vdwg.mxu0
      %1019 = vmatpush.bf16.msra.mxu0 0
      %1020 = vmatpush.bf16.msra.mxu0 0
      %1021 = vmatpush.bf16.msra.mxu0 0
      %1022 = vmatpush.bf16.msra.mxu0 0
      %1023 = vmatpush.bf16.msra.mxu0 0
      %1024 = vmatpush.bf16.msra.mxu0 0
      %1025 = vmatpush.bf16.msra.mxu0 0
      %1026 = vmatpush.bf16.msra.mxu0 %v1001
      %1027 = vmatmul.bf16.gmra.mxu0 %v995
      %v1028 = vpop.f32.mrf.mxu0
      %v1029 = vadd.f32 0.0, %v1028
      %v1030 = vpop.f32.mrf.mxu0
      %1031 = vdwg.mxu0
      %1032 = vmatpush.bf16.msra.mxu0 0
      %1033 = vmatpush.bf16.msra.mxu0 0
      %1034 = vmatpush.bf16.msra.mxu0 0
      %1035 = vmatpush.bf16.msra.mxu0 0
      %1036 = vmatpush.bf16.msra.mxu0 0
      %1037 = vmatpush.bf16.msra.mxu0 0
      %1038 = vmatpush.bf16.msra.mxu0 0
      %1039 = vmatpush.bf16.msra.mxu0 %v1004
      %1040 = vmatmul.bf16.gmra.mxu0 %v995
      %v1041 = vpop.f32.mrf.mxu0
      %v1042 = vadd.f32 0.0, %v1041
      %v1043 = vpop.f32.mrf.mxu0
      %1044 = vdwg.mxu0
      %v1045 = vadd.f32 %v977, %v1016
      %v1046 = vadd.f32 %v978, %v1029
      %v1047 = vadd.f32 %v979, %v1042
      %v1048 = vld [vmem:[%s5] sm:$0x7]
      %v1049 = vld [vmem:[%s422] sm:$0x3f]
      %1051 = vst [vmem:[#allocation1] ss:$4 sm:$0xff] %v1049
      %v1052 = vld.sshfl [vmem:[#allocation1] sm:$0xff pattern:$0x73625140]
      %v1053 = vld.sshfl [vmem:[#allocation1 + $0x8] sm:$0xff pattern:$0x73625140]
      %v1054 = vld.sshfl [vmem:[#allocation1 + $0x10] sm:$0xff pattern:$0x73625140]
      %vm1055 = vcmask 23552
      %v1057 = vsel %vm1055, %v1048, 0
      %vm1059 = vcmask 1041408
      %v1060 = vsel %vm475, 4294967295, 65535
      %v1061 = vsel %vm1059, %v1060, 0
      %v1062 = vand.u32 %v1052, %v1061
      %v1064 = vand.u32 %v1053, %v1061
      %v1066 = vand.u32 %v1054, %v1061
      %1068 = vmatpush.bf16.msra.mxu0 0
      %1069 = vmatpush.bf16.msra.mxu0 0
      %1070 = vmatpush.bf16.msra.mxu0 0
      %1071 = vmatpush.bf16.msra.mxu0 0
      %1072 = vmatpush.bf16.msra.mxu0 0
      %1073 = vmatpush.bf16.msra.mxu0 0
      %1074 = vmatpush.bf16.msra.mxu0 0
      %1075 = vmatpush.bf16.msra.mxu0 %v1062
      %1076 = vmatmul.bf16.gmra.mxu0 %v1057
      %v1077 = vpop.f32.mrf.mxu0
      %v1078 = vadd.f32 0.0, %v1077
      %v1079 = vpop.f32.mrf.mxu0
      %1080 = vdwg.mxu0
      %1081 = vmatpush.bf16.msra.mxu0 0
      %1082 = vmatpush.bf16.msra.mxu0 0
      %1083 = vmatpush.bf16.msra.mxu0 0
      %1084 = vmatpush.bf16.msra.mxu0 0
      %1085 = vmatpush.bf16.msra.mxu0 0
      %1086 = vmatpush.bf16.msra.mxu0 0
      %1087 = vmatpush.bf16.msra.mxu0 0
      %1088 = vmatpush.bf16.msra.mxu0 %v1064
      %1089 = vmatmul.bf16.gmra.mxu0 %v1057
      %v1090 = vpop.f32.mrf.mxu0
      %v1091 = vadd.f32 0.0, %v1090
      %v1092 = vpop.f32.mrf.mxu0
      %1093 = vdwg.mxu0
      %1094 = vmatpush.bf16.msra.mxu0 0
      %1095 = vmatpush.bf16.msra.mxu0 0
      %1096 = vmatpush.bf16.msra.mxu0 0
      %1097 = vmatpush.bf16.msra.mxu0 0
      %1098 = vmatpush.bf16.msra.mxu0 0
      %1099 = vmatpush.bf16.msra.mxu0 0
      %1100 = vmatpush.bf16.msra.mxu0 0
      %1101 = vmatpush.bf16.msra.mxu0 %v1066
      %1102 = vmatmul.bf16.gmra.mxu0 %v1057
      %v1103 = vpop.f32.mrf.mxu0
      %v1104 = vadd.f32 0.0, %v1103
      %v1105 = vpop.f32.mrf.mxu0
      %1106 = vdwg.mxu0
      %v1107 = vadd.f32 %v1045, %v1078
      %v1108 = vadd.f32 %v1046, %v1091
      %v1109 = vadd.f32 %v1047, %v1104
      %v1110 = vld [vmem:[%s3] sm:$0x3f]
      %1112 = vset.pattern.permute.xlu0 0
      %1113 = vperm.xlu0 %1112, %v1110
      %v1114 = vpop.permute.xlu0 %1113
      %v1116 = vadd.f32 %v1107, %v1114
      %v1117 = vadd.f32 %v1108, %v1114
      %v1118 = vadd.f32 %v1109, %v1114
      %v1119 = vmax.f32 %v1116, 0.0
      %v1120 = vmax.f32 %v1117, 0.0
      %v1121 = vmax.f32 %v1118, 0.0
      %v1122 = vld [vmem:[%s432] sm:$0x77]
      %v1123 = vld [vmem:[%s432 + $0x8] sm:$0x7]
      %v1124 = vunpack.c.l.bf16 %v1122
      %v1125 = vunpack.c.h.bf16 %v1122
      %v1126 = vunpack.c.l.bf16 %v1123
      %v1127 = vadd.f32 %v1119, %v1124
      %v1128 = vadd.f32 %v1120, %v1125
      %v1129 = vadd.f32 %v1121, %v1126
      %1130 = vst [vmem:[%s442] sm:$0x3f] %v1127
      %1131 = vst [vmem:[%s442 + $0x8] sm:$0x3f] %v1128
      %1132 = vst [vmem:[%s442 + $0x10] sm:$0x3f] %v1129
      %s1133 = smul.u32 3, %s23
      %p1134 = scmp.lt.s32.totalorder %s22, 1
      %s1135 = scalar_select %p1134, %s22, 1
      %p1136 = scmp.lt.s32.totalorder %s1133, 2
      %s1137 = scalar_select %p1136, %s1133, 2
      %s1138 = smul.addr %s1135, 3
      %s1139 = sadd.s32 %s1137, %s1138
      %s1140 = smul.addr %s1139, 8
      %s1141 = scalar_lea.vmem %s7, %s1140
      // Predicated region
      $region49: #{att_ffc_forward.11} parent=47 // pred_check
        %p1142 = pneg %p229
      $region50: #{att_ffc_forward.11} parent=47 // pred_check_branch
        %1144 = sbr.rel (%p1142) target = $region52
      $region51: #{att_ffc_forward.11} parent=47 // pred_region
        %s1145 = smul.u32 3, %s23
      $region52: #{att_ffc_forward.11} parent=47 // pred_fallthru
        _
    $region48: #{att_ffc_forward.11} parent=5 // pred_fallthru
      _
    %p1146 = scmp.le.s32.totalorder 2, %s13
    // Predicated region
    $region53: #{att_ffc_forward.11} parent=5 // pred_check
      %p1147 = pneg %p1146
    $region54: #{att_ffc_forward.11} parent=5 // pred_check_branch
      %1149 = sbr.rel (%p1147) target = $region56
    $region55: #{att_ffc_forward.11} parent=5 // pred_region
      %s1150 = ssub.s32 %s13, 2
      // Predicated region
      $region57: #{att_ffc_forward.11} parent=55 // pred_check
        %p1151 = pneg %p235
      $region58: #{att_ffc_forward.11} parent=55 // pred_check_branch
        %1153 = sbr.rel (%p1151) target = $region60
      $region59: #{att_ffc_forward.11} parent=55 // pred_region
        %s1154 = smul.u32 3, %s25
        %p1155 = scmp.lt.s32.totalorder %s24, 1
        %s1156 = scalar_select %p1155, %s24, 1
        %p1157 = scmp.lt.s32.totalorder %s1154, 2
        %s1158 = scalar_select %p1157, %s1154, 2
        %s1159 = smul.addr %s1156, 3
        %s1160 = sadd.s32 %s1158, %s1159
        %s1161 = smul.addr %s1160, 8
        %s1162 = scalar_lea.vmem %s7, %s1161
      $region60: #{att_ffc_forward.11} parent=55 // pred_fallthru
        _
    $region56: #{att_ffc_forward.11} parent=5 // pred_fallthru
      _
  $region6: #{att_ffc_forward.11} parent=0 // loop_footer
    %s17 = sadd.s32 1, %s13
  $region7: #{att_ffc_forward.11} parent=0 // loop_footer_branch
    %12 = sbr.rel target = $region3
  $region8: #{att_ffc_forward.11} parent=0 // loop_exit
    _

</llo_original>
